<compile_context>
chip_gen: v7x
topology: tpu7x:2x2x1
jax: 0.10.0
libtpu: 0.0.40
codegen_flags: <defaults>
</compile_context>

<pallas_src>
import functools

import jax
import jax.numpy as jnp
from jax import lax
from jax.experimental import pallas as pl
from jax.experimental.pallas import tpu as pltpu


def _round_up(v, m):
    return (v + m - 1) // m * m


# ---------------------------------------------------------------------------
# In-kernel building block: accumulate one operand stream's 3x3-conv taps.
# ---------------------------------------------------------------------------
def _accum_conv3x3_pair(acc, x, w9_ref, wp):
    """acc += 3x3 conv(x) in column-pair layout, one (dj, dy) matmul at a time.

    x      : (r, k) bf16 activation, r = H * (W//2) flattened pair rows.
    w9_ref : (9, k, n) bf16 weights, index = 3*(dj+1) + (dy+1), BN scale pre-folded.
    acc    : (r, n) f32 accumulator (returned updated).
    wp     : pair-space width W//2 (multiple of 8 keeps every slab slice aligned).

    Conv zero padding comes from (a) `hp` halo rows of zeros top/bottom (H edges)
    and (b) a wrapped-pair-column mask (W edges).  Only one (r + 2*wp, k) view is
    live per dj; its three dy slabs are aligned views, not copies.
    """
    r, k = x.shape
    hp = wp + 8                                         # halo rows (>= wp+1, 8-aligned)
    halo = jnp.zeros((hp, k), x.dtype)
    xpad = jnp.concatenate([halo, x, halo], axis=0)     # (r + 2*hp, k)

    rows = r + 2 * wp
    col = lax.broadcasted_iota(jnp.int32, (rows, 1), 0) % wp   # output pair-column
    zero = jnp.zeros((), x.dtype)                              # scalar, no (rows,k) buffer

    for dj_idx, dj in enumerate((-1, 0, 1)):
        # view row s of v corresponds to output row i = s - (dy+1)*wp for the dy slab
        v = xpad[8 + dj: 8 + dj + rows]                 # aligned view for dj == 0
        if dj == -1:                                    # left neighbour of column 0 wraps
            v = jnp.where(col == 0, zero, v)
        elif dj == 1:                                   # right neighbour of column wp-1 wraps
            v = jnp.where(col == wp - 1, zero, v)
        for dy_idx in range(3):                         # dy = dy_idx - 1
            s = dy_idx * wp                             # multiple of 8 -> aligned slab
            acc = acc + jnp.dot(v[s:s + r, :], w9_ref[3 * dj_idx + dy_idx],
                                preferred_element_type=jnp.float32)
    return acc


# ---------------------------------------------------------------------------
# Fused kernel: upsample + (implicit) concat + conv1/BN/ReLU + conv2/BN/ReLU.
# ---------------------------------------------------------------------------
def decoder_block_kernel(x_ref, skip_ref, w1x_ref, w1s_ref, b1_ref,
                         w2_ref, b2_ref, o_ref, *, wr):
    _, h0, wp, kx = x_ref.shape
    r = o_ref.shape[1]                                  # = 2 * h0 * wp pair-space rows

    # Nearest-neighbour 2x upsample of x, fused:
    #   rows   : duplicate each low-res row (broadcast + free reshape in VMEM),
    #   columns: implicit -- both column parities read the same low-res lanes via
    #            the pair-folded conv1 weights (w1x sums the two p_in taps).
    xl = x_ref[0]                                       # (h0, wp, kx)
    xh = jnp.broadcast_to(xl[:, None], (h0, 2, wp, kx)).reshape(r, kx)

    # conv1: the channel concat is never materialised -- x-stream and skip-stream
    # accumulate into the same f32 accumulator (split-K).
    n_mid = b1_ref.shape[-1]
    acc1 = jnp.zeros((r, n_mid), jnp.float32)
    acc1 = _accum_conv3x3_pair(acc1, xh, w1x_ref, wp)
    acc1 = _accum_conv3x3_pair(acc1, skip_ref[0], w1s_ref, wp)
    # BN scale folded into the weights -> epilogue is add-bias + ReLU, direct bf16.
    h1 = jnp.maximum(acc1 + b1_ref[...], 0.0).astype(jnp.bfloat16)

    if wr != wp:   # W was padded in the wrapper: zero padded columns so conv2's
        col = lax.broadcasted_iota(jnp.int32, (r, 1), 0) % wp   # seam stays a true zero pad
        h1 = jnp.where(col < wr, h1, jnp.zeros((), h1.dtype))

    n_out = o_ref.shape[-1]
    acc2 = jnp.zeros((r, n_out), jnp.float32)
    acc2 = _accum_conv3x3_pair(acc2, h1, w2_ref, wp)
    o_ref[0] = jnp.maximum(acc2 + b2_ref[...], 0.0).astype(o_ref.dtype)   # bf16 store


# ---------------------------------------------------------------------------
# Wrapper: NCHW interface, column-pair reshapes, single pallas_call.
# ---------------------------------------------------------------------------
def decoder_block_forward(x_nchw, skip_nchw, params):
    n, cx, h0, w0 = x_nchw.shape
    _, cs, hs, ws = skip_nchw.shape
    assert (hs, ws) == (2 * h0, 2 * w0), "skip must be 2x the spatial size of x"

    wp = _round_up(w0, 8)                     # pair-space width (sublane-aligned slabs)
    kx = params["w1x"].shape[1]               # padded x lanes
    ks = params["w1s"].shape[1]               # padded skip pair lanes
    r = 2 * h0 * wp

    # NCHW -> NHWC + bf16 cast + zero padding of W / channel lanes (fused by XLA).
    x = jnp.transpose(x_nchw, (0, 2, 3, 1)).astype(jnp.bfloat16)
    x = jnp.pad(x, ((0, 0), (0, 0), (0, wp - w0), (0, kx - cx)))
    skip = jnp.transpose(skip_nchw, (0, 2, 3, 1)).astype(jnp.bfloat16)
    skip = jnp.pad(skip, ((0, 0), (0, 0), (0, 2 * (wp - w0)), (0, 0)))
    skip_pair = skip.reshape(n, r, 2 * cs)    # contiguity-preserving pair reshape
    skip_pair = jnp.pad(skip_pair, ((0, 0), (0, 0), (0, ks - 2 * cs)))

    w1x, w1s, b1 = params["w1x"], params["w1s"], params["b1"]
    w2, b2 = params["w2"], params["b2"]
    n_mid, n_out = b1.shape[-1], b2.shape[-1]

    out_flat = pl.pallas_call(
        functools.partial(decoder_block_kernel, wr=w0),
        out_shape=jax.ShapeDtypeStruct((n, r, n_out), jnp.bfloat16),   # bf16 writeback
        grid=(n,),
        in_specs=[
            pl.BlockSpec((1, h0, wp, kx), lambda b: (b, 0, 0, 0)),
            pl.BlockSpec((1, r, ks), lambda b: (b, 0, 0)),
            # grid-invariant weights / biases: constant index maps -> fetched once.
            pl.BlockSpec((9, kx, n_mid), lambda b: (0, 0, 0)),
            pl.BlockSpec((9, ks, n_mid), lambda b: (0, 0, 0)),
            pl.BlockSpec((1, n_mid), lambda b: (0, 0)),
            pl.BlockSpec((9, n_mid, n_out), lambda b: (0, 0, 0)),
            pl.BlockSpec((1, n_out), lambda b: (0, 0)),
        ],
        out_specs=pl.BlockSpec((1, r, n_out), lambda b: (b, 0, 0)),
        compiler_params=pltpu.CompilerParams(
            dimension_semantics=("parallel",),       # megacore / multi-TC over batch
            vmem_limit_bytes=48 * 1024 * 1024,
        ),
    )(x, skip_pair, w1x, w1s, b1, w2, b2)

    cout = params["out_channels"]
    out = out_flat[..., :2 * cout].reshape(n, 2 * h0, 2 * wp, cout)[:, :, :2 * w0, :]
    return jnp.transpose(out, (0, 3, 1, 2))           # NCHW, bf16


# ---------------------------------------------------------------------------
# Parameter preparation (one-time, wrapper side).
# ---------------------------------------------------------------------------
def make_conv_bn_params(key, cin, cout, eps=1e-5):
    """Deterministic Conv2d(no bias) + BatchNorm2d params, BN folded (eval mode)."""
    w = jax.random.normal(key, (cout, cin, 3, 3), jnp.float32) * 0.1   # PyTorch OIHW
    gamma = 1.0 + 0.01 * jnp.arange(cout, dtype=jnp.float32)
    beta = 0.01 * jnp.arange(cout, dtype=jnp.float32)
    running_mean = 0.001 * jnp.arange(cout, dtype=jnp.float32)
    running_var = 1.0 + 0.05 * jnp.arange(cout, dtype=jnp.float32)
    scale = gamma / jnp.sqrt(running_var + eps)
    bias = beta - running_mean * scale
    return w, scale, bias


def _pair_conv_weights(w_oihw, bn_scale, *, shared_in, k_pad, n_pad):
    """Fold a 3x3 conv (OIHW) + BN scale into 9 pair-lane matrices.

    shared_in=True : input is the 2x nearest-upsampled x; both column parities read
                     the same lanes, so the two p_in taps are summed (K = cin).
    shared_in=False: full-resolution input, K lanes = [p_in=0: cin][p_in=1: cin].
    Output lanes   : [p_out=0: cout][p_out=1: cout], zero padded to n_pad.
    Returns (9, k_pad, n_pad) bf16 with index = 3*(dj+1) + (dy+1).
    """
    cout, cin = w_oihw.shape[0], w_oihw.shape[1]
    w = w_oihw.astype(jnp.float32) * bn_scale[:, None, None, None]   # fold BN scale (f32)
    taps = jnp.transpose(w, (2, 3, 1, 0))                            # (kh, kw, cin, cout)
    mats = []
    for dj in (-1, 0, 1):
        for dy in (-1, 0, 1):
            blk = jnp.zeros((k_pad, n_pad), jnp.float32)
            for p_out in range(2):
                cols = slice(p_out * cout, (p_out + 1) * cout)
                for p_in in range(2):
                    dx = 2 * dj + p_in - p_out
                    if not -1 <= dx <= 1:
                        continue
                    t = taps[dy + 1, dx + 1]                         # (cin, cout)
                    if shared_in:
                        blk = blk.at[:cin, cols].add(t)
                    else:
                        blk = blk.at[p_in * cin:(p_in + 1) * cin, cols].add(t)
            mats.append(blk)
    return jnp.stack(mats, axis=0).astype(jnp.bfloat16)


def _pair_bias(bias, n_pad):
    b = jnp.concatenate([bias, bias])            # same per-channel BN bias for both parities
    return jnp.pad(b, (0, n_pad - b.shape[0])).astype(jnp.float32)[None, :]   # (1, n_pad)


def build_decoder_block_params(conv1, conv2, in_channels, skip_channels):
    w1, s1, b1 = conv1
    w2, s2, b2 = conv2
    cmid, cout = w1.shape[0], w2.shape[0]
    kx = _round_up(in_channels, 8)
    ks = _round_up(2 * skip_channels, 8)
    n_mid = _round_up(2 * cmid, 128)             # lane-dense intermediate (128 granule)
    n_out = _round_up(2 * cout, 128)             # lane-dense output stores
    return {
        "w1x": _pair_conv_weights(w1[:, :in_channels], s1, shared_in=True,
                                  k_pad=kx, n_pad=n_mid),
        "w1s": _pair_conv_weights(w1[:, in_channels:], s1, shared_in=False,
                                  k_pad=ks, n_pad=n_mid),
        "b1": _pair_bias(b1, n_mid),
        "w2": _pair_conv_weights(w2, s2, shared_in=False, k_pad=n_mid, n_pad=n_out),
        "b2": _pair_bias(b2, n_out),
        "out_channels": cout,
    }


# ---------------------------------------------------------------------------
# Pure-JAX reference (for correctness check).
# ---------------------------------------------------------------------------
def reference_decoder_block(x_nchw, skip_nchw, convs):
    h = jnp.repeat(jnp.repeat(x_nchw, 2, axis=2), 2, axis=3)
    h = jnp.concatenate([h, skip_nchw], axis=1)
    for w, scale, bias in convs:
        h = lax.conv_general_dilated(h, w, window_strides=(1, 1),
                                     padding=((1, 1), (1, 1)),
                                     dimension_numbers=("NCHW", "OIHW", "NCHW"))
        h = jnp.maximum(h * scale[None, :, None, None] + bias[None, :, None, None], 0.0)
    return h


if __name__ == "__main__":
    key = jax.random.PRNGKey(0)
    k_x, k_skip, k_w1, k_w2 = jax.random.split(key, 4)

    batch, in_channels, skip_channels, out_channels = 2, 4, 6, 8
    h0 = w0 = 8                      # low-res input; skip / output are 16x16

    x = jax.random.normal(k_x, (batch, in_channels, h0, w0), jnp.float32)
    skip = jax.random.normal(k_skip, (batch, skip_channels, 2 * h0, 2 * w0), jnp.float32)

    conv1 = make_conv_bn_params(k_w1, in_channels + skip_channels, out_channels)
    conv2 = make_conv_bn_params(k_w2, out_channels, out_channels)
    params = build_decoder_block_params(conv1, conv2, in_channels, skip_channels)

    out = jax.block_until_ready(decoder_block_forward(x, skip, params))
    assert out.shape == (batch, out_channels, 2 * h0, 2 * w0), out.shape

    ref = jax.block_until_ready(reference_decoder_block(x, skip, [conv1, conv2]))
    err = jnp.abs(out.astype(jnp.float32) - ref)
    max_err = float(jnp.max(err))
    mean_err = float(jnp.mean(err))
    assert max_err < 0.15 and mean_err < 0.03, (max_err, mean_err)
    print("KERNEL_OK")
</pallas_src>

<mosaic_0001>
module attributes {stable_mosaic.version = 11 : i64} {
  func.func @decoder_block_kernel(%arg0: i32, %arg1: memref<1x8x8x8xbf16, #tpu.memory_space<vmem>>, %arg2: memref<1x128x16xbf16, #tpu.memory_space<vmem>>, %arg3: memref<9x8x128xbf16, #tpu.memory_space<vmem>>, %arg4: memref<9x16x128xbf16, #tpu.memory_space<vmem>>, %arg5: memref<1x128xf32, #tpu.memory_space<vmem>>, %arg6: memref<9x128x128xbf16, #tpu.memory_space<vmem>>, %arg7: memref<1x128xf32, #tpu.memory_space<vmem>>, %arg8: memref<1x128x128xbf16, #tpu.memory_space<vmem>>) attributes {dimension_semantics = [#tpu.dimension_semantics<parallel>], iteration_bounds = array<i64: 2>, scalar_prefetch = 0 : i64, scratch_operands = 0 : i64, tpu.core_type = #tpu.core_type<tc>, window_params = [{transform_indices = @transform_0, window_bounds = array<i64: 1, 8, 8, 8>}, {transform_indices = @transform_1, window_bounds = array<i64: 1, 128, 16>}, {pipeline_mode = #tpu.pipeline_mode<synchronous>, transform_indices = @transform_2, window_bounds = array<i64: 9, 8, 128>}, {pipeline_mode = #tpu.pipeline_mode<synchronous>, transform_indices = @transform_3, window_bounds = array<i64: 9, 16, 128>}, {pipeline_mode = #tpu.pipeline_mode<synchronous>, transform_indices = @transform_4, window_bounds = array<i64: 1, 128>}, {pipeline_mode = #tpu.pipeline_mode<synchronous>, transform_indices = @transform_5, window_bounds = array<i64: 9, 128, 128>}, {pipeline_mode = #tpu.pipeline_mode<synchronous>, transform_indices = @transform_6, window_bounds = array<i64: 1, 128>}, {transform_indices = @transform_7, window_bounds = array<i64: 1, 128, 128>}]} {
    %c0 = arith.constant 0 : index
    %c0_0 = arith.constant 0 : index
    %c0_1 = arith.constant 0 : index
    %c0_2 = arith.constant 0 : index
    %0 = vector.load %arg1[%c0, %c0_0, %c0_1, %c0_2] : memref<1x8x8x8xbf16, #tpu.memory_space<vmem>>, vector<1x8x8x8xbf16>
    %1 = vector.shape_cast %0 : vector<1x8x8x8xbf16> to vector<8x8x8xbf16>
    %2 = vector.shape_cast %1 : vector<8x8x8xbf16> to vector<8x1x8x8xbf16>
    %3 = vector.shape_cast %2 : vector<8x1x8x8xbf16> to vector<8x1x8x8xbf16>
    %4 = vector.broadcast %3 : vector<8x1x8x8xbf16> to vector<8x2x8x8xbf16>
    %5 = vector.shape_cast %4 : vector<8x2x8x8xbf16> to vector<128x8xbf16>
    %cst = arith.constant 0.000000e+00 : f32
    %6 = vector.broadcast %cst : f32 to vector<128x128xf32>
    %cst_3 = arith.constant 0.000000e+00 : bf16
    %7 = vector.broadcast %cst_3 : bf16 to vector<16x8xbf16>
    %8 = tpu.concatenate %7, %5, %7 in 0 : vector<16x8xbf16>, vector<128x8xbf16>, vector<16x8xbf16> -> vector<160x8xbf16>
    %9 = tpu.iota {dimensions = array<i32: 0>} : vector<144x1xi32>
    %c8_i32 = arith.constant 8 : i32
    %c0_i32 = arith.constant 0 : i32
    %10 = arith.cmpi eq, %c8_i32, %c0_i32 : i32
    %c1_i32 = arith.constant 1 : i32
    %11 = arith.select %10, %c1_i32, %c8_i32 : i32
    %12 = vector.broadcast %11 : i32 to vector<144x1xi32>
    %13 = arith.remsi %9, %12 : vector<144x1xi32>
    %c0_i32_4 = arith.constant 0 : i32
    %14 = vector.broadcast %c0_i32_4 : i32 to vector<144x1xi32>
    %15 = arith.cmpi ne, %13, %14 : vector<144x1xi32>
    %c0_i32_5 = arith.constant 0 : i32
    %16 = vector.broadcast %c0_i32_5 : i32 to vector<144x1xi32>
    %17 = arith.cmpi slt, %13, %16 : vector<144x1xi32>
    %c0_i32_6 = arith.constant 0 : i32
    %18 = arith.cmpi slt, %11, %c0_i32_6 : i32
    %19 = vector.broadcast %18 : i1 to vector<144x1xi1>
    %20 = vector.broadcast %19 : vector<144x1xi1> to vector<144x1xi1>
    %21 = arith.xori %17, %20 : vector<144x1xi1>
    %22 = arith.andi %21, %15 : vector<144x1xi1>
    %23 = vector.broadcast %11 : i32 to vector<144x1xi32>
    %24 = arith.addi %13, %23 : vector<144x1xi32>
    %25 = arith.select %22, %24, %13 : vector<144x1xi1>, vector<144x1xi32>
    %26 = vector.extract_strided_slice %8 {offsets = [7, 0], sizes = [144, 8], strides = [1, 1]} : vector<160x8xbf16> to vector<144x8xbf16>
    %c0_i32_7 = arith.constant 0 : i32
    %27 = vector.broadcast %c0_i32_7 : i32 to vector<144x1xi32>
    %28 = arith.cmpi eq, %25, %27 : vector<144x1xi32>
    %cst_8 = arith.constant 0.000000e+00 : bf16
    %29 = vector.shape_cast %28 : vector<144x1xi1> to vector<144x1xi1>
    %30 = vector.broadcast %29 : vector<144x1xi1> to vector<144x8xi1>
    %31 = vector.broadcast %cst_8 : bf16 to vector<144x8xbf16>
    %32 = arith.select %30, %31, %26 : vector<144x8xi1>, vector<144x8xbf16>
    %33 = vector.extract_strided_slice %32 {offsets = [0, 0], sizes = [128, 8], strides = [1, 1]} : vector<144x8xbf16> to vector<128x8xbf16>
    %c0_9 = arith.constant 0 : index
    %c0_10 = arith.constant 0 : index
    %c0_11 = arith.constant 0 : index
    %34 = vector.load %arg3[%c0_9, %c0_10, %c0_11] : memref<9x8x128xbf16, #tpu.memory_space<vmem>>, vector<1x8x128xbf16>
    %35 = vector.shape_cast %34 : vector<1x8x128xbf16> to vector<8x128xbf16>
    %cst_12 = arith.constant dense<0.000000e+00> : vector<128x128xf32>
    %36 = tpu.matmul %33, %35, %cst_12 {dimension_numbers = #tpu.dot_dimension_numbers<[1], [0], [0], [1], [0, 0, 1, 1], [], []>} : vector<128x8xbf16>, vector<8x128xbf16>, vector<128x128xf32> -> vector<128x128xf32>
    %37 = arith.addf %6, %36 : vector<128x128xf32>
    %38 = vector.extract_strided_slice %32 {offsets = [8, 0], sizes = [128, 8], strides = [1, 1]} : vector<144x8xbf16> to vector<128x8xbf16>
    %c1 = arith.constant 1 : index
    %c0_13 = arith.constant 0 : index
    %c0_14 = arith.constant 0 : index
    %39 = vector.load %arg3[%c1, %c0_13, %c0_14] : memref<9x8x128xbf16, #tpu.memory_space<vmem>>, vector<1x8x128xbf16>
    %40 = vector.shape_cast %39 : vector<1x8x128xbf16> to vector<8x128xbf16>
    %cst_15 = arith.constant dense<0.000000e+00> : vector<128x128xf32>
    %41 = tpu.matmul %38, %40, %cst_15 {dimension_numbers = #tpu.dot_dimension_numbers<[1], [0], [0], [1], [0, 0, 1, 1], [], []>} : vector<128x8xbf16>, vector<8x128xbf16>, vector<128x128xf32> -> vector<128x128xf32>
    %42 = arith.addf %37, %41 : vector<128x128xf32>
    %43 = vector.extract_strided_slice %32 {offsets = [16, 0], sizes = [128, 8], strides = [1, 1]} : vector<144x8xbf16> to vector<128x8xbf16>
    %c2 = arith.constant 2 : index
    %c0_16 = arith.constant 0 : index
    %c0_17 = arith.constant 0 : index
    %44 = vector.load %arg3[%c2, %c0_16, %c0_17] : memref<9x8x128xbf16, #tpu.memory_space<vmem>>, vector<1x8x128xbf16>
    %45 = vector.shape_cast %44 : vector<1x8x128xbf16> to vector<8x128xbf16>
    %cst_18 = arith.constant dense<0.000000e+00> : vector<128x128xf32>
    %46 = tpu.matmul %43, %45, %cst_18 {dimension_numbers = #tpu.dot_dimension_numbers<[1], [0], [0], [1], [0, 0, 1, 1], [], []>} : vector<128x8xbf16>, vector<8x128xbf16>, vector<128x128xf32> -> vector<128x128xf32>
    %47 = arith.addf %42, %46 : vector<128x128xf32>
    %48 = vector.extract_strided_slice %8 {offsets = [8, 0], sizes = [144, 8], strides = [1, 1]} : vector<160x8xbf16> to vector<144x8xbf16>
    %49 = vector.extract_strided_slice %48 {offsets = [0, 0], sizes = [128, 8], strides = [1, 1]} : vector<144x8xbf16> to vector<128x8xbf16>
    %c3 = arith.constant 3 : index
    %c0_19 = arith.constant 0 : index
    %c0_20 = arith.constant 0 : index
    %50 = vector.load %arg3[%c3, %c0_19, %c0_20] : memref<9x8x128xbf16, #tpu.memory_space<vmem>>, vector<1x8x128xbf16>
    %51 = vector.shape_cast %50 : vector<1x8x128xbf16> to vector<8x128xbf16>
    %cst_21 = arith.constant dense<0.000000e+00> : vector<128x128xf32>
    %52 = tpu.matmul %49, %51, %cst_21 {dimension_numbers = #tpu.dot_dimension_numbers<[1], [0], [0], [1], [0, 0, 1, 1], [], []>} : vector<128x8xbf16>, vector<8x128xbf16>, vector<128x128xf32> -> vector<128x128xf32>
    %53 = arith.addf %47, %52 : vector<128x128xf32>
    %54 = vector.extract_strided_slice %48 {offsets = [8, 0], sizes = [128, 8], strides = [1, 1]} : vector<144x8xbf16> to vector<128x8xbf16>
    %c4 = arith.constant 4 : index
    %c0_22 = arith.constant 0 : index
    %c0_23 = arith.constant 0 : index
    %55 = vector.load %arg3[%c4, %c0_22, %c0_23] : memref<9x8x128xbf16, #tpu.memory_space<vmem>>, vector<1x8x128xbf16>
    %56 = vector.shape_cast %55 : vector<1x8x128xbf16> to vector<8x128xbf16>
    %cst_24 = arith.constant dense<0.000000e+00> : vector<128x128xf32>
    %57 = tpu.matmul %54, %56, %cst_24 {dimension_numbers = #tpu.dot_dimension_numbers<[1], [0], [0], [1], [0, 0, 1, 1], [], []>} : vector<128x8xbf16>, vector<8x128xbf16>, vector<128x128xf32> -> vector<128x128xf32>
    %58 = arith.addf %53, %57 : vector<128x128xf32>
    %59 = vector.extract_strided_slice %48 {offsets = [16, 0], sizes = [128, 8], strides = [1, 1]} : vector<144x8xbf16> to vector<128x8xbf16>
    %c5 = arith.constant 5 : index
    %c0_25 = arith.constant 0 : index
    %c0_26 = arith.constant 0 : index
    %60 = vector.load %arg3[%c5, %c0_25, %c0_26] : memref<9x8x128xbf16, #tpu.memory_space<vmem>>, vector<1x8x128xbf16>
    %61 = vector.shape_cast %60 : vector<1x8x128xbf16> to vector<8x128xbf16>
    %cst_27 = arith.constant dense<0.000000e+00> : vector<128x128xf32>
    %62 = tpu.matmul %59, %61, %cst_27 {dimension_numbers = #tpu.dot_dimension_numbers<[1], [0], [0], [1], [0, 0, 1, 1], [], []>} : vector<128x8xbf16>, vector<8x128xbf16>, vector<128x128xf32> -> vector<128x128xf32>
    %63 = arith.addf %58, %62 : vector<128x128xf32>
    %64 = vector.extract_strided_slice %8 {offsets = [9, 0], sizes = [144, 8], strides = [1, 1]} : vector<160x8xbf16> to vector<144x8xbf16>
    %c7_i32 = arith.constant 7 : i32
    %65 = vector.broadcast %c7_i32 : i32 to vector<144x1xi32>
    %66 = arith.cmpi eq, %25, %65 : vector<144x1xi32>
    %cst_28 = arith.constant 0.000000e+00 : bf16
    %67 = vector.shape_cast %66 : vector<144x1xi1> to vector<144x1xi1>
    %68 = vector.broadcast %67 : vector<144x1xi1> to vector<144x8xi1>
    %69 = vector.broadcast %cst_28 : bf16 to vector<144x8xbf16>
    %70 = arith.select %68, %69, %64 : vector<144x8xi1>, vector<144x8xbf16>
    %71 = vector.extract_strided_slice %70 {offsets = [0, 0], sizes = [128, 8], strides = [1, 1]} : vector<144x8xbf16> to vector<128x8xbf16>
    %c6 = arith.constant 6 : index
    %c0_29 = arith.constant 0 : index
    %c0_30 = arith.constant 0 : index
    %72 = vector.load %arg3[%c6, %c0_29, %c0_30] : memref<9x8x128xbf16, #tpu.memory_space<vmem>>, vector<1x8x128xbf16>
    %73 = vector.shape_cast %72 : vector<1x8x128xbf16> to vector<8x128xbf16>
    %cst_31 = arith.constant dense<0.000000e+00> : vector<128x128xf32>
    %74 = tpu.matmul %71, %73, %cst_31 {dimension_numbers = #tpu.dot_dimension_numbers<[1], [0], [0], [1], [0, 0, 1, 1], [], []>} : vector<128x8xbf16>, vector<8x128xbf16>, vector<128x128xf32> -> vector<128x128xf32>
    %75 = arith.addf %63, %74 : vector<128x128xf32>
    %76 = vector.extract_strided_slice %70 {offsets = [8, 0], sizes = [128, 8], strides = [1, 1]} : vector<144x8xbf16> to vector<128x8xbf16>
    %c7 = arith.constant 7 : index
    %c0_32 = arith.constant 0 : index
    %c0_33 = arith.constant 0 : index
    %77 = vector.load %arg3[%c7, %c0_32, %c0_33] : memref<9x8x128xbf16, #tpu.memory_space<vmem>>, vector<1x8x128xbf16>
    %78 = vector.shape_cast %77 : vector<1x8x128xbf16> to vector<8x128xbf16>
    %cst_34 = arith.constant dense<0.000000e+00> : vector<128x128xf32>
    %79 = tpu.matmul %76, %78, %cst_34 {dimension_numbers = #tpu.dot_dimension_numbers<[1], [0], [0], [1], [0, 0, 1, 1], [], []>} : vector<128x8xbf16>, vector<8x128xbf16>, vector<128x128xf32> -> vector<128x128xf32>
    %80 = arith.addf %75, %79 : vector<128x128xf32>
    %81 = vector.extract_strided_slice %70 {offsets = [16, 0], sizes = [128, 8], strides = [1, 1]} : vector<144x8xbf16> to vector<128x8xbf16>
    %c8 = arith.constant 8 : index
    %c0_35 = arith.constant 0 : index
    %c0_36 = arith.constant 0 : index
    %82 = vector.load %arg3[%c8, %c0_35, %c0_36] : memref<9x8x128xbf16, #tpu.memory_space<vmem>>, vector<1x8x128xbf16>
    %83 = vector.shape_cast %82 : vector<1x8x128xbf16> to vector<8x128xbf16>
    %cst_37 = arith.constant dense<0.000000e+00> : vector<128x128xf32>
    %84 = tpu.matmul %81, %83, %cst_37 {dimension_numbers = #tpu.dot_dimension_numbers<[1], [0], [0], [1], [0, 0, 1, 1], [], []>} : vector<128x8xbf16>, vector<8x128xbf16>, vector<128x128xf32> -> vector<128x128xf32>
    %85 = arith.addf %80, %84 : vector<128x128xf32>
    %c0_38 = arith.constant 0 : index
    %c0_39 = arith.constant 0 : index
    %c0_40 = arith.constant 0 : index
    %86 = vector.load %arg2[%c0_38, %c0_39, %c0_40] : memref<1x128x16xbf16, #tpu.memory_space<vmem>>, vector<1x128x16xbf16>
    %87 = vector.shape_cast %86 : vector<1x128x16xbf16> to vector<128x16xbf16>
    %cst_41 = arith.constant 0.000000e+00 : bf16
    %88 = vector.broadcast %cst_41 : bf16 to vector<16x16xbf16>
    %89 = tpu.concatenate %88, %87, %88 in 0 : vector<16x16xbf16>, vector<128x16xbf16>, vector<16x16xbf16> -> vector<160x16xbf16>
    %90 = tpu.iota {dimensions = array<i32: 0>} : vector<144x1xi32>
    %c8_i32_42 = arith.constant 8 : i32
    %c0_i32_43 = arith.constant 0 : i32
    %91 = arith.cmpi eq, %c8_i32_42, %c0_i32_43 : i32
    %c1_i32_44 = arith.constant 1 : i32
    %92 = arith.select %91, %c1_i32_44, %c8_i32_42 : i32
    %93 = vector.broadcast %92 : i32 to vector<144x1xi32>
    %94 = arith.remsi %90, %93 : vector<144x1xi32>
    %c0_i32_45 = arith.constant 0 : i32
    %95 = vector.broadcast %c0_i32_45 : i32 to vector<144x1xi32>
    %96 = arith.cmpi ne, %94, %95 : vector<144x1xi32>
    %c0_i32_46 = arith.constant 0 : i32
    %97 = vector.broadcast %c0_i32_46 : i32 to vector<144x1xi32>
    %98 = arith.cmpi slt, %94, %97 : vector<144x1xi32>
    %c0_i32_47 = arith.constant 0 : i32
    %99 = arith.cmpi slt, %92, %c0_i32_47 : i32
    %100 = vector.broadcast %99 : i1 to vector<144x1xi1>
    %101 = vector.broadcast %100 : vector<144x1xi1> to vector<144x1xi1>
    %102 = arith.xori %98, %101 : vector<144x1xi1>
    %103 = arith.andi %102, %96 : vector<144x1xi1>
    %104 = vector.broadcast %92 : i32 to vector<144x1xi32>
    %105 = arith.addi %94, %104 : vector<144x1xi32>
    %106 = arith.select %103, %105, %94 : vector<144x1xi1>, vector<144x1xi32>
    %107 = vector.extract_strided_slice %89 {offsets = [7, 0], sizes = [144, 16], strides = [1, 1]} : vector<160x16xbf16> to vector<144x16xbf16>
    %c0_i32_48 = arith.constant 0 : i32
    %108 = vector.broadcast %c0_i32_48 : i32 to vector<144x1xi32>
    %109 = arith.cmpi eq, %106, %108 : vector<144x1xi32>
    %cst_49 = arith.constant 0.000000e+00 : bf16
    %110 = vector.shape_cast %109 : vector<144x1xi1> to vector<144x1xi1>
    %111 = vector.broadcast %110 : vector<144x1xi1> to vector<144x16xi1>
    %112 = vector.broadcast %cst_49 : bf16 to vector<144x16xbf16>
    %113 = arith.select %111, %112, %107 : vector<144x16xi1>, vector<144x16xbf16>
    %114 = vector.extract_strided_slice %113 {offsets = [0, 0], sizes = [128, 16], strides = [1, 1]} : vector<144x16xbf16> to vector<128x16xbf16>
    %c0_50 = arith.constant 0 : index
    %c0_51 = arith.constant 0 : index
    %c0_52 = arith.constant 0 : index
    %115 = vector.load %arg4[%c0_50, %c0_51, %c0_52] : memref<9x16x128xbf16, #tpu.memory_space<vmem>>, vector<1x16x128xbf16>
    %116 = vector.shape_cast %115 : vector<1x16x128xbf16> to vector<16x128xbf16>
    %cst_53 = arith.constant dense<0.000000e+00> : vector<128x128xf32>
    %117 = tpu.matmul %114, %116, %cst_53 {dimension_numbers = #tpu.dot_dimension_numbers<[1], [0], [0], [1], [0, 0, 1, 1], [], []>} : vector<128x16xbf16>, vector<16x128xbf16>, vector<128x128xf32> -> vector<128x128xf32>
    %118 = arith.addf %85, %117 : vector<128x128xf32>
    %119 = vector.extract_strided_slice %113 {offsets = [8, 0], sizes = [128, 16], strides = [1, 1]} : vector<144x16xbf16> to vector<128x16xbf16>
    %c1_54 = arith.constant 1 : index
    %c0_55 = arith.constant 0 : index
    %c0_56 = arith.constant 0 : index
    %120 = vector.load %arg4[%c1_54, %c0_55, %c0_56] : memref<9x16x128xbf16, #tpu.memory_space<vmem>>, vector<1x16x128xbf16>
    %121 = vector.shape_cast %120 : vector<1x16x128xbf16> to vector<16x128xbf16>
    %cst_57 = arith.constant dense<0.000000e+00> : vector<128x128xf32>
    %122 = tpu.matmul %119, %121, %cst_57 {dimension_numbers = #tpu.dot_dimension_numbers<[1], [0], [0], [1], [0, 0, 1, 1], [], []>} : vector<128x16xbf16>, vector<16x128xbf16>, vector<128x128xf32> -> vector<128x128xf32>
    %123 = arith.addf %118, %122 : vector<128x128xf32>
    %124 = vector.extract_strided_slice %113 {offsets = [16, 0], sizes = [128, 16], strides = [1, 1]} : vector<144x16xbf16> to vector<128x16xbf16>
    %c2_58 = arith.constant 2 : index
    %c0_59 = arith.constant 0 : index
    %c0_60 = arith.constant 0 : index
    %125 = vector.load %arg4[%c2_58, %c0_59, %c0_60] : memref<9x16x128xbf16, #tpu.memory_space<vmem>>, vector<1x16x128xbf16>
    %126 = vector.shape_cast %125 : vector<1x16x128xbf16> to vector<16x128xbf16>
    %cst_61 = arith.constant dense<0.000000e+00> : vector<128x128xf32>
    %127 = tpu.matmul %124, %126, %cst_61 {dimension_numbers = #tpu.dot_dimension_numbers<[1], [0], [0], [1], [0, 0, 1, 1], [], []>} : vector<128x16xbf16>, vector<16x128xbf16>, vector<128x128xf32> -> vector<128x128xf32>
    %128 = arith.addf %123, %127 : vector<128x128xf32>
    %129 = vector.extract_strided_slice %89 {offsets = [8, 0], sizes = [144, 16], strides = [1, 1]} : vector<160x16xbf16> to vector<144x16xbf16>
    %130 = vector.extract_strided_slice %129 {offsets = [0, 0], sizes = [128, 16], strides = [1, 1]} : vector<144x16xbf16> to vector<128x16xbf16>
    %c3_62 = arith.constant 3 : index
    %c0_63 = arith.constant 0 : index
    %c0_64 = arith.constant 0 : index
    %131 = vector.load %arg4[%c3_62, %c0_63, %c0_64] : memref<9x16x128xbf16, #tpu.memory_space<vmem>>, vector<1x16x128xbf16>
    %132 = vector.shape_cast %131 : vector<1x16x128xbf16> to vector<16x128xbf16>
    %cst_65 = arith.constant dense<0.000000e+00> : vector<128x128xf32>
    %133 = tpu.matmul %130, %132, %cst_65 {dimension_numbers = #tpu.dot_dimension_numbers<[1], [0], [0], [1], [0, 0, 1, 1], [], []>} : vector<128x16xbf16>, vector<16x128xbf16>, vector<128x128xf32> -> vector<128x128xf32>
    %134 = arith.addf %128, %133 : vector<128x128xf32>
    %135 = vector.extract_strided_slice %129 {offsets = [8, 0], sizes = [128, 16], strides = [1, 1]} : vector<144x16xbf16> to vector<128x16xbf16>
    %c4_66 = arith.constant 4 : index
    %c0_67 = arith.constant 0 : index
    %c0_68 = arith.constant 0 : index
    %136 = vector.load %arg4[%c4_66, %c0_67, %c0_68] : memref<9x16x128xbf16, #tpu.memory_space<vmem>>, vector<1x16x128xbf16>
    %137 = vector.shape_cast %136 : vector<1x16x128xbf16> to vector<16x128xbf16>
    %cst_69 = arith.constant dense<0.000000e+00> : vector<128x128xf32>
    %138 = tpu.matmul %135, %137, %cst_69 {dimension_numbers = #tpu.dot_dimension_numbers<[1], [0], [0], [1], [0, 0, 1, 1], [], []>} : vector<128x16xbf16>, vector<16x128xbf16>, vector<128x128xf32> -> vector<128x128xf32>
    %139 = arith.addf %134, %138 : vector<128x128xf32>
    %140 = vector.extract_strided_slice %129 {offsets = [16, 0], sizes = [128, 16], strides = [1, 1]} : vector<144x16xbf16> to vector<128x16xbf16>
    %c5_70 = arith.constant 5 : index
    %c0_71 = arith.constant 0 : index
    %c0_72 = arith.constant 0 : index
    %141 = vector.load %arg4[%c5_70, %c0_71, %c0_72] : memref<9x16x128xbf16, #tpu.memory_space<vmem>>, vector<1x16x128xbf16>
    %142 = vector.shape_cast %141 : vector<1x16x128xbf16> to vector<16x128xbf16>
    %cst_73 = arith.constant dense<0.000000e+00> : vector<128x128xf32>
    %143 = tpu.matmul %140, %142, %cst_73 {dimension_numbers = #tpu.dot_dimension_numbers<[1], [0], [0], [1], [0, 0, 1, 1], [], []>} : vector<128x16xbf16>, vector<16x128xbf16>, vector<128x128xf32> -> vector<128x128xf32>
    %144 = arith.addf %139, %143 : vector<128x128xf32>
    %145 = vector.extract_strided_slice %89 {offsets = [9, 0], sizes = [144, 16], strides = [1, 1]} : vector<160x16xbf16> to vector<144x16xbf16>
    %c7_i32_74 = arith.constant 7 : i32
    %146 = vector.broadcast %c7_i32_74 : i32 to vector<144x1xi32>
    %147 = arith.cmpi eq, %106, %146 : vector<144x1xi32>
    %cst_75 = arith.constant 0.000000e+00 : bf16
    %148 = vector.shape_cast %147 : vector<144x1xi1> to vector<144x1xi1>
    %149 = vector.broadcast %148 : vector<144x1xi1> to vector<144x16xi1>
    %150 = vector.broadcast %cst_75 : bf16 to vector<144x16xbf16>
    %151 = arith.select %149, %150, %145 : vector<144x16xi1>, vector<144x16xbf16>
    %152 = vector.extract_strided_slice %151 {offsets = [0, 0], sizes = [128, 16], strides = [1, 1]} : vector<144x16xbf16> to vector<128x16xbf16>
    %c6_76 = arith.constant 6 : index
    %c0_77 = arith.constant 0 : index
    %c0_78 = arith.constant 0 : index
    %153 = vector.load %arg4[%c6_76, %c0_77, %c0_78] : memref<9x16x128xbf16, #tpu.memory_space<vmem>>, vector<1x16x128xbf16>
    %154 = vector.shape_cast %153 : vector<1x16x128xbf16> to vector<16x128xbf16>
    %cst_79 = arith.constant dense<0.000000e+00> : vector<128x128xf32>
    %155 = tpu.matmul %152, %154, %cst_79 {dimension_numbers = #tpu.dot_dimension_numbers<[1], [0], [0], [1], [0, 0, 1, 1], [], []>} : vector<128x16xbf16>, vector<16x128xbf16>, vector<128x128xf32> -> vector<128x128xf32>
    %156 = arith.addf %144, %155 : vector<128x128xf32>
    %157 = vector.extract_strided_slice %151 {offsets = [8, 0], sizes = [128, 16], strides = [1, 1]} : vector<144x16xbf16> to vector<128x16xbf16>
    %c7_80 = arith.constant 7 : index
    %c0_81 = arith.constant 0 : index
    %c0_82 = arith.constant 0 : index
    %158 = vector.load %arg4[%c7_80, %c0_81, %c0_82] : memref<9x16x128xbf16, #tpu.memory_space<vmem>>, vector<1x16x128xbf16>
    %159 = vector.shape_cast %158 : vector<1x16x128xbf16> to vector<16x128xbf16>
    %cst_83 = arith.constant dense<0.000000e+00> : vector<128x128xf32>
    %160 = tpu.matmul %157, %159, %cst_83 {dimension_numbers = #tpu.dot_dimension_numbers<[1], [0], [0], [1], [0, 0, 1, 1], [], []>} : vector<128x16xbf16>, vector<16x128xbf16>, vector<128x128xf32> -> vector<128x128xf32>
    %161 = arith.addf %156, %160 : vector<128x128xf32>
    %162 = vector.extract_strided_slice %151 {offsets = [16, 0], sizes = [128, 16], strides = [1, 1]} : vector<144x16xbf16> to vector<128x16xbf16>
    %c8_84 = arith.constant 8 : index
    %c0_85 = arith.constant 0 : index
    %c0_86 = arith.constant 0 : index
    %163 = vector.load %arg4[%c8_84, %c0_85, %c0_86] : memref<9x16x128xbf16, #tpu.memory_space<vmem>>, vector<1x16x128xbf16>
    %164 = vector.shape_cast %163 : vector<1x16x128xbf16> to vector<16x128xbf16>
    %cst_87 = arith.constant dense<0.000000e+00> : vector<128x128xf32>
    %165 = tpu.matmul %162, %164, %cst_87 {dimension_numbers = #tpu.dot_dimension_numbers<[1], [0], [0], [1], [0, 0, 1, 1], [], []>} : vector<128x16xbf16>, vector<16x128xbf16>, vector<128x128xf32> -> vector<128x128xf32>
    %166 = arith.addf %161, %165 : vector<128x128xf32>
    %c0_88 = arith.constant 0 : index
    %c0_89 = arith.constant 0 : index
    %167 = vector.load %arg5[%c0_88, %c0_89] : memref<1x128xf32, #tpu.memory_space<vmem>>, vector<1x128xf32>
    %168 = vector.broadcast %167 : vector<1x128xf32> to vector<128x128xf32>
    %169 = arith.addf %166, %168 : vector<128x128xf32>
    %cst_90 = arith.constant 0.000000e+00 : f32
    %170 = vector.broadcast %cst_90 : f32 to vector<128x128xf32>
    %171 = arith.maximumf %169, %170 : vector<128x128xf32>
    %172 = arith.truncf %171 : vector<128x128xf32> to vector<128x128xbf16>
    %cst_91 = arith.constant 0.000000e+00 : f32
    %173 = vector.broadcast %cst_91 : f32 to vector<128x128xf32>
    %cst_92 = arith.constant 0.000000e+00 : bf16
    %174 = vector.broadcast %cst_92 : bf16 to vector<16x128xbf16>
    %175 = tpu.concatenate %174, %172, %174 in 0 : vector<16x128xbf16>, vector<128x128xbf16>, vector<16x128xbf16> -> vector<160x128xbf16>
    %176 = tpu.iota {dimensions = array<i32: 0>} : vector<144x1xi32>
    %c8_i32_93 = arith.constant 8 : i32
    %c0_i32_94 = arith.constant 0 : i32
    %177 = arith.cmpi eq, %c8_i32_93, %c0_i32_94 : i32
    %c1_i32_95 = arith.constant 1 : i32
    %178 = arith.select %177, %c1_i32_95, %c8_i32_93 : i32
    %179 = vector.broadcast %178 : i32 to vector<144x1xi32>
    %180 = arith.remsi %176, %179 : vector<144x1xi32>
    %c0_i32_96 = arith.constant 0 : i32
    %181 = vector.broadcast %c0_i32_96 : i32 to vector<144x1xi32>
    %182 = arith.cmpi ne, %180, %181 : vector<144x1xi32>
    %c0_i32_97 = arith.constant 0 : i32
    %183 = vector.broadcast %c0_i32_97 : i32 to vector<144x1xi32>
    %184 = arith.cmpi slt, %180, %183 : vector<144x1xi32>
    %c0_i32_98 = arith.constant 0 : i32
    %185 = arith.cmpi slt, %178, %c0_i32_98 : i32
    %186 = vector.broadcast %185 : i1 to vector<144x1xi1>
    %187 = vector.broadcast %186 : vector<144x1xi1> to vector<144x1xi1>
    %188 = arith.xori %184, %187 : vector<144x1xi1>
    %189 = arith.andi %188, %182 : vector<144x1xi1>
    %190 = vector.broadcast %178 : i32 to vector<144x1xi32>
    %191 = arith.addi %180, %190 : vector<144x1xi32>
    %192 = arith.select %189, %191, %180 : vector<144x1xi1>, vector<144x1xi32>
    %193 = vector.extract_strided_slice %175 {offsets = [7, 0], sizes = [144, 128], strides = [1, 1]} : vector<160x128xbf16> to vector<144x128xbf16>
    %c0_i32_99 = arith.constant 0 : i32
    %194 = vector.broadcast %c0_i32_99 : i32 to vector<144x1xi32>
    %195 = arith.cmpi eq, %192, %194 : vector<144x1xi32>
    %cst_100 = arith.constant 0.000000e+00 : bf16
    %196 = vector.shape_cast %195 : vector<144x1xi1> to vector<144x1xi1>
    %197 = vector.broadcast %196 : vector<144x1xi1> to vector<144x128xi1>
    %198 = vector.broadcast %cst_100 : bf16 to vector<144x128xbf16>
    %199 = arith.select %197, %198, %193 : vector<144x128xi1>, vector<144x128xbf16>
    %200 = vector.extract_strided_slice %199 {offsets = [0, 0], sizes = [128, 128], strides = [1, 1]} : vector<144x128xbf16> to vector<128x128xbf16>
    %c0_101 = arith.constant 0 : index
    %c0_102 = arith.constant 0 : index
    %c0_103 = arith.constant 0 : index
    %201 = vector.load %arg6[%c0_101, %c0_102, %c0_103] : memref<9x128x128xbf16, #tpu.memory_space<vmem>>, vector<1x128x128xbf16>
    %202 = vector.shape_cast %201 : vector<1x128x128xbf16> to vector<128x128xbf16>
    %cst_104 = arith.constant dense<0.000000e+00> : vector<128x128xf32>
    %203 = tpu.matmul %200, %202, %cst_104 {dimension_numbers = #tpu.dot_dimension_numbers<[1], [0], [0], [1], [0, 0, 1, 1], [], []>} : vector<128x128xbf16>, vector<128x128xbf16>, vector<128x128xf32> -> vector<128x128xf32>
    %204 = arith.addf %173, %203 : vector<128x128xf32>
    %205 = vector.extract_strided_slice %199 {offsets = [8, 0], sizes = [128, 128], strides = [1, 1]} : vector<144x128xbf16> to vector<128x128xbf16>
    %c1_105 = arith.constant 1 : index
    %c0_106 = arith.constant 0 : index
    %c0_107 = arith.constant 0 : index
    %206 = vector.load %arg6[%c1_105, %c0_106, %c0_107] : memref<9x128x128xbf16, #tpu.memory_space<vmem>>, vector<1x128x128xbf16>
    %207 = vector.shape_cast %206 : vector<1x128x128xbf16> to vector<128x128xbf16>
    %cst_108 = arith.constant dense<0.000000e+00> : vector<128x128xf32>
    %208 = tpu.matmul %205, %207, %cst_108 {dimension_numbers = #tpu.dot_dimension_numbers<[1], [0], [0], [1], [0, 0, 1, 1], [], []>} : vector<128x128xbf16>, vector<128x128xbf16>, vector<128x128xf32> -> vector<128x128xf32>
    %209 = arith.addf %204, %208 : vector<128x128xf32>
    %210 = vector.extract_strided_slice %199 {offsets = [16, 0], sizes = [128, 128], strides = [1, 1]} : vector<144x128xbf16> to vector<128x128xbf16>
    %c2_109 = arith.constant 2 : index
    %c0_110 = arith.constant 0 : index
    %c0_111 = arith.constant 0 : index
    %211 = vector.load %arg6[%c2_109, %c0_110, %c0_111] : memref<9x128x128xbf16, #tpu.memory_space<vmem>>, vector<1x128x128xbf16>
    %212 = vector.shape_cast %211 : vector<1x128x128xbf16> to vector<128x128xbf16>
    %cst_112 = arith.constant dense<0.000000e+00> : vector<128x128xf32>
    %213 = tpu.matmul %210, %212, %cst_112 {dimension_numbers = #tpu.dot_dimension_numbers<[1], [0], [0], [1], [0, 0, 1, 1], [], []>} : vector<128x128xbf16>, vector<128x128xbf16>, vector<128x128xf32> -> vector<128x128xf32>
    %214 = arith.addf %209, %213 : vector<128x128xf32>
    %215 = vector.extract_strided_slice %175 {offsets = [8, 0], sizes = [144, 128], strides = [1, 1]} : vector<160x128xbf16> to vector<144x128xbf16>
    %216 = vector.extract_strided_slice %215 {offsets = [0, 0], sizes = [128, 128], strides = [1, 1]} : vector<144x128xbf16> to vector<128x128xbf16>
    %c3_113 = arith.constant 3 : index
    %c0_114 = arith.constant 0 : index
    %c0_115 = arith.constant 0 : index
    %217 = vector.load %arg6[%c3_113, %c0_114, %c0_115] : memref<9x128x128xbf16, #tpu.memory_space<vmem>>, vector<1x128x128xbf16>
    %218 = vector.shape_cast %217 : vector<1x128x128xbf16> to vector<128x128xbf16>
    %cst_116 = arith.constant dense<0.000000e+00> : vector<128x128xf32>
    %219 = tpu.matmul %216, %218, %cst_116 {dimension_numbers = #tpu.dot_dimension_numbers<[1], [0], [0], [1], [0, 0, 1, 1], [], []>} : vector<128x128xbf16>, vector<128x128xbf16>, vector<128x128xf32> -> vector<128x128xf32>
    %220 = arith.addf %214, %219 : vector<128x128xf32>
    %221 = vector.extract_strided_slice %215 {offsets = [8, 0], sizes = [128, 128], strides = [1, 1]} : vector<144x128xbf16> to vector<128x128xbf16>
    %c4_117 = arith.constant 4 : index
    %c0_118 = arith.constant 0 : index
    %c0_119 = arith.constant 0 : index
    %222 = vector.load %arg6[%c4_117, %c0_118, %c0_119] : memref<9x128x128xbf16, #tpu.memory_space<vmem>>, vector<1x128x128xbf16>
    %223 = vector.shape_cast %222 : vector<1x128x128xbf16> to vector<128x128xbf16>
    %cst_120 = arith.constant dense<0.000000e+00> : vector<128x128xf32>
    %224 = tpu.matmul %221, %223, %cst_120 {dimension_numbers = #tpu.dot_dimension_numbers<[1], [0], [0], [1], [0, 0, 1, 1], [], []>} : vector<128x128xbf16>, vector<128x128xbf16>, vector<128x128xf32> -> vector<128x128xf32>
    %225 = arith.addf %220, %224 : vector<128x128xf32>
    %226 = vector.extract_strided_slice %215 {offsets = [16, 0], sizes = [128, 128], strides = [1, 1]} : vector<144x128xbf16> to vector<128x128xbf16>
    %c5_121 = arith.constant 5 : index
    %c0_122 = arith.constant 0 : index
    %c0_123 = arith.constant 0 : index
    %227 = vector.load %arg6[%c5_121, %c0_122, %c0_123] : memref<9x128x128xbf16, #tpu.memory_space<vmem>>, vector<1x128x128xbf16>
    %228 = vector.shape_cast %227 : vector<1x128x128xbf16> to vector<128x128xbf16>
    %cst_124 = arith.constant dense<0.000000e+00> : vector<128x128xf32>
    %229 = tpu.matmul %226, %228, %cst_124 {dimension_numbers = #tpu.dot_dimension_numbers<[1], [0], [0], [1], [0, 0, 1, 1], [], []>} : vector<128x128xbf16>, vector<128x128xbf16>, vector<128x128xf32> -> vector<128x128xf32>
    %230 = arith.addf %225, %229 : vector<128x128xf32>
    %231 = vector.extract_strided_slice %175 {offsets = [9, 0], sizes = [144, 128], strides = [1, 1]} : vector<160x128xbf16> to vector<144x128xbf16>
    %c7_i32_125 = arith.constant 7 : i32
    %232 = vector.broadcast %c7_i32_125 : i32 to vector<144x1xi32>
    %233 = arith.cmpi eq, %192, %232 : vector<144x1xi32>
    %cst_126 = arith.constant 0.000000e+00 : bf16
    %234 = vector.shape_cast %233 : vector<144x1xi1> to vector<144x1xi1>
    %235 = vector.broadcast %234 : vector<144x1xi1> to vector<144x128xi1>
    %236 = vector.broadcast %cst_126 : bf16 to vector<144x128xbf16>
    %237 = arith.select %235, %236, %231 : vector<144x128xi1>, vector<144x128xbf16>
    %238 = vector.extract_strided_slice %237 {offsets = [0, 0], sizes = [128, 128], strides = [1, 1]} : vector<144x128xbf16> to vector<128x128xbf16>
    %c6_127 = arith.constant 6 : index
    %c0_128 = arith.constant 0 : index
    %c0_129 = arith.constant 0 : index
    %239 = vector.load %arg6[%c6_127, %c0_128, %c0_129] : memref<9x128x128xbf16, #tpu.memory_space<vmem>>, vector<1x128x128xbf16>
    %240 = vector.shape_cast %239 : vector<1x128x128xbf16> to vector<128x128xbf16>
    %cst_130 = arith.constant dense<0.000000e+00> : vector<128x128xf32>
    %241 = tpu.matmul %238, %240, %cst_130 {dimension_numbers = #tpu.dot_dimension_numbers<[1], [0], [0], [1], [0, 0, 1, 1], [], []>} : vector<128x128xbf16>, vector<128x128xbf16>, vector<128x128xf32> -> vector<128x128xf32>
    %242 = arith.addf %230, %241 : vector<128x128xf32>
    %243 = vector.extract_strided_slice %237 {offsets = [8, 0], sizes = [128, 128], strides = [1, 1]} : vector<144x128xbf16> to vector<128x128xbf16>
    %c7_131 = arith.constant 7 : index
    %c0_132 = arith.constant 0 : index
    %c0_133 = arith.constant 0 : index
    %244 = vector.load %arg6[%c7_131, %c0_132, %c0_133] : memref<9x128x128xbf16, #tpu.memory_space<vmem>>, vector<1x128x128xbf16>
    %245 = vector.shape_cast %244 : vector<1x128x128xbf16> to vector<128x128xbf16>
    %cst_134 = arith.constant dense<0.000000e+00> : vector<128x128xf32>
    %246 = tpu.matmul %243, %245, %cst_134 {dimension_numbers = #tpu.dot_dimension_numbers<[1], [0], [0], [1], [0, 0, 1, 1], [], []>} : vector<128x128xbf16>, vector<128x128xbf16>, vector<128x128xf32> -> vector<128x128xf32>
    %247 = arith.addf %242, %246 : vector<128x128xf32>
    %248 = vector.extract_strided_slice %237 {offsets = [16, 0], sizes = [128, 128], strides = [1, 1]} : vector<144x128xbf16> to vector<128x128xbf16>
    %c8_135 = arith.constant 8 : index
    %c0_136 = arith.constant 0 : index
    %c0_137 = arith.constant 0 : index
    %249 = vector.load %arg6[%c8_135, %c0_136, %c0_137] : memref<9x128x128xbf16, #tpu.memory_space<vmem>>, vector<1x128x128xbf16>
    %250 = vector.shape_cast %249 : vector<1x128x128xbf16> to vector<128x128xbf16>
    %cst_138 = arith.constant dense<0.000000e+00> : vector<128x128xf32>
    %251 = tpu.matmul %248, %250, %cst_138 {dimension_numbers = #tpu.dot_dimension_numbers<[1], [0], [0], [1], [0, 0, 1, 1], [], []>} : vector<128x128xbf16>, vector<128x128xbf16>, vector<128x128xf32> -> vector<128x128xf32>
    %252 = arith.addf %247, %251 : vector<128x128xf32>
    %c0_139 = arith.constant 0 : index
    %c0_140 = arith.constant 0 : index
    %253 = vector.load %arg7[%c0_139, %c0_140] : memref<1x128xf32, #tpu.memory_space<vmem>>, vector<1x128xf32>
    %254 = vector.broadcast %253 : vector<1x128xf32> to vector<128x128xf32>
    %255 = arith.addf %252, %254 : vector<128x128xf32>
    %cst_141 = arith.constant 0.000000e+00 : f32
    %256 = vector.broadcast %cst_141 : f32 to vector<128x128xf32>
    %257 = arith.maximumf %255, %256 : vector<128x128xf32>
    %258 = arith.truncf %257 : vector<128x128xf32> to vector<128x128xbf16>
    %c0_142 = arith.constant 0 : index
    %c0_143 = arith.constant 0 : index
    %c0_144 = arith.constant 0 : index
    %259 = vector.load %arg8[%c0_142, %c0_143, %c0_144] : memref<1x128x128xbf16, #tpu.memory_space<vmem>>, vector<1x128x128xbf16>
    %260 = vector.shape_cast %259 : vector<1x128x128xbf16> to vector<128x128xbf16>
    %261 = vector.shape_cast %258 : vector<128x128xbf16> to vector<1x128x128xbf16>
    tpu.vector_store %arg8[%c0_142, %c0_143, %c0_144], %261 {strides = array<i32>} : memref<1x128x128xbf16, #tpu.memory_space<vmem>>, vector<1x128x128xbf16>,
    return
  }
  func.func @transform_0(%arg0: i32) -> (i32, i32, i32, i32) {
    %c0_i32 = arith.constant 0 : i32
    %c0_i32_0 = arith.constant 0 : i32
    %c0_i32_1 = arith.constant 0 : i32
    %c0_i32_2 = arith.constant 0 : i32
    return %arg0, %c0_i32, %c0_i32_0, %c0_i32_1 : i32, i32, i32, i32
  }
  func.func @transform_1(%arg0: i32) -> (i32, i32, i32) {
    %c0_i32 = arith.constant 0 : i32
    %c0_i32_0 = arith.constant 0 : i32
    %c0_i32_1 = arith.constant 0 : i32
    return %arg0, %c0_i32, %c0_i32_0 : i32, i32, i32
  }
  func.func @transform_2(%arg0: i32) -> (i32, i32, i32) {
    %c0_i32 = arith.constant 0 : i32
    %c0_i32_0 = arith.constant 0 : i32
    %c0_i32_1 = arith.constant 0 : i32
    %c0_i32_2 = arith.constant 0 : i32
    return %c0_i32, %c0_i32_0, %c0_i32_1 : i32, i32, i32
  }
  func.func @transform_3(%arg0: i32) -> (i32, i32, i32) {
    %c0_i32 = arith.constant 0 : i32
    %c0_i32_0 = arith.constant 0 : i32
    %c0_i32_1 = arith.constant 0 : i32
    %c0_i32_2 = arith.constant 0 : i32
    return %c0_i32, %c0_i32_0, %c0_i32_1 : i32, i32, i32
  }
  func.func @transform_4(%arg0: i32) -> (i32, i32) {
    %c0_i32 = arith.constant 0 : i32
    %c0_i32_0 = arith.constant 0 : i32
    %c0_i32_1 = arith.constant 0 : i32
    return %c0_i32, %c0_i32_0 : i32, i32
  }
  func.func @transform_5(%arg0: i32) -> (i32, i32, i32) {
    %c0_i32 = arith.constant 0 : i32
    %c0_i32_0 = arith.constant 0 : i32
    %c0_i32_1 = arith.constant 0 : i32
    %c0_i32_2 = arith.constant 0 : i32
    return %c0_i32, %c0_i32_0, %c0_i32_1 : i32, i32, i32
  }
  func.func @transform_6(%arg0: i32) -> (i32, i32) {
    %c0_i32 = arith.constant 0 : i32
    %c0_i32_0 = arith.constant 0 : i32
    %c0_i32_1 = arith.constant 0 : i32
    return %c0_i32, %c0_i32_0 : i32, i32
  }
  func.func @transform_7(%arg0: i32) -> (i32, i32, i32) {
    %c0_i32 = arith.constant 0 : i32
    %c0_i32_0 = arith.constant 0 : i32
    %c0_i32_1 = arith.constant 0 : i32
    return %arg0, %c0_i32, %c0_i32_0 : i32, i32, i32
  }
}

</mosaic_0001>

<llo_original>
// kernel: tpu_custom_call.1
$region0: #{tpu_custom_call.1}
  #allocation0 [shape = 'u32[]', space=smem, size = 0x4, offset = 0x4, fixed_abs, tag = 'smem constant byte address 0x4 - core index']
  #allocation1 [shape = 'u32[144,128]{1,0:T(1,128)}', space=vmem, size = 0x12000, scoped, tag = 'internal scratch']
  %s0 = inlined_call_operand.vmem [shape: bf16[2,8,8,8], index: 0, kind: input, shape index: {}]
  %s1 = inlined_call_operand.vmem [shape: bf16[2,128,16], index: 1, kind: input, shape index: {}]
  %s2 = inlined_call_operand.hbm [shape: bf16[9,8,128], index: 2, kind: input, shape index: {}]
  %s3 = inlined_call_operand.vmem [shape: bf16[9,16,128], index: 3, kind: input, shape index: {}]
  %s4 = inlined_call_operand.vmem [shape: f32[1,128], index: 4, kind: input, shape index: {}]
  %s5 = inlined_call_operand.hbm [shape: bf16[9,128,128], index: 5, kind: input, shape index: {}]
  %s6 = inlined_call_operand.vmem [shape: f32[1,128], index: 6, kind: input, shape index: {}]
  %s7 = inlined_call_operand.hbm [shape: bf16[2,128,128], index: 7, kind: output, shape index: {}]
  %s8 = sld [smem:[#allocation0]]
  $region69: #{tpu_custom_call.1} parent=0
    _
  %s10 = ssub.s32 1, %s8
  %s11 = scalar_select 0, %s10, %s8
  $region1: #{tpu_custom_call.1} parent=0
    #allocation2 [shape = 'u8[18432]{0}', space=vmem, size = 0x4800, scoped, tag = 'input window, operand 2, single buffered']
    #allocation3 [shape = 's32[2]{0}', space=sflag, size = 0x8, scoped, tag = 'scoped memory for tpu_custom_call.1']
    #allocation4 [shape = 's32[2]{0}', space=sflag, size = 0x8, scoped, tag = 'scoped memory for tpu_custom_call.1']
    #allocation5 [shape = 'u8[294912]{0}', space=vmem, size = 0x48000, scoped, tag = 'input window, operand 5, single buffered']
    #allocation6 [shape = 's32[1]{0}', space=sflag, size = 0x4, scoped, tag = 'scoped memory for tpu_custom_call.1']
    #allocation7 [shape = 'u8[65536]{0}', space=vmem, size = 0x10000, scoped, tag = 'output window, operand 0']
    %12 = vsyncpa [#allocation3], 0
    %13 = vsyncpa [#allocation6], 0
    %14 = vsyncpa [#allocation4], 0
    %s15 = scalar_lea.sflag [#allocation4], 1
    %16 = vsyncpa %s15, 0
    loop: start=0, step=1, limit=4
    $region2: #{tpu_custom_call.1} parent=1 // loop_pre_header
      _
    $region3: #{tpu_custom_call.1} parent=1 // loop_header
      %s18 = sphi 0, %s22
      %p19 = scmp.ge.s32.totalorder %s18, 4
      %s28 = sphi 0, %s30
      %s31 = sphi 0, %s28
      %s32 = sphi 0, %s31
      %s48 = sphi 0, %s32
      %s54 = sphi 0, %s56
      %s57 = sphi 0, %s54
      %s58 = sphi 0, %s57
      %s74 = sphi 0, %s58
      %s78 = sphi 0, %s78
      %s80 = sphi 0, %s78
      %s81 = sphi 0, %s80
      %s95 = sphi 0, %s81
      %s99 = sphi 0, %s99
      %s101 = sphi 0, %s99
      %s102 = sphi 0, %s101
      %s116 = sphi 0, %s102
      %s120 = sphi 0, %s120
      %s122 = sphi 0, %s120
      %s123 = sphi 0, %s122
      %s137 = sphi 0, %s123
      %s141 = sphi 0, %s141
      %s143 = sphi 0, %s141
      %s144 = sphi 0, %s143
      %s158 = sphi 0, %s144
      %s162 = sphi 0, %s162
      %s164 = sphi 0, %s162
      %s165 = sphi 0, %s164
      %s179 = sphi 0, %s165
      %s185 = sphi 0, %s187
      %s188 = sphi 0, %s185
      %s189 = sphi 0, %s188
      %s205 = sphi 0, %s189
    $region4: #{tpu_custom_call.1} parent=1 // loop_header_branch
      %21 = sbr.rel (%p19) target = $region8
    $region5: #{tpu_custom_call.1} parent=1 // loop_body
      %s23 = ssub.s32 %s18, 1
      %s24 = ssub.s32 %s18, 2
      %s25 = sadd.s32 %s18, 1
      %s26 = ssub.s32 %s18, %s25
      %p27 = scmp.eq.s32.totalorder %s26, 0
      %s29 = sadd.s32 %s28, 1
      %s30 = scalar_select %p27, %s28, %s29
      %p33 = pneg %p27
      %p34 = scmp.eq.s32.totalorder %s18, 1
      %p35 = por %p33, %p34
      %p36 = scmp.ne.s32.totalorder %s28, %s31
      %p37 = scmp.eq.s32.totalorder %s18, 0
      %p38 = por %p36, %p37
      %p39 = scmp.ne.s32.totalorder %s28, %s31
      %p40 = scmp.eq.s32.totalorder %s23, 1
      %p41 = por %p39, %p40
      %p42 = scmp.ne.s32.totalorder %s31, %s32
      %p43 = scmp.eq.s32.totalorder %s23, 0
      %p44 = por %p42, %p43
      %p45 = scmp.ne.s32.totalorder %s31, %s32
      %p46 = scmp.eq.s32.totalorder %s24, 1
      %p47 = por %p45, %p46
      %p49 = scmp.ne.s32.totalorder %s32, %s48
      %p50 = scmp.eq.s32.totalorder %s24, 0
      %p51 = por %p49, %p50
      %s52 = ssub.s32 %s18, %s25
      %p53 = scmp.eq.s32.totalorder %s52, 0
      %s55 = sadd.s32 %s54, 1
      %s56 = scalar_select %p53, %s54, %s55
      %p59 = pneg %p53
      %p60 = scmp.eq.s32.totalorder %s18, 1
      %p61 = por %p59, %p60
      %p62 = scmp.ne.s32.totalorder %s54, %s57
      %p63 = scmp.eq.s32.totalorder %s18, 0
      %p64 = por %p62, %p63
      %p65 = scmp.ne.s32.totalorder %s54, %s57
      %p66 = scmp.eq.s32.totalorder %s23, 1
      %p67 = por %p65, %p66
      %p68 = scmp.ne.s32.totalorder %s57, %s58
      %p69 = scmp.eq.s32.totalorder %s23, 0
      %p70 = por %p68, %p69
      %p71 = scmp.ne.s32.totalorder %s57, %s58
      %p72 = scmp.eq.s32.totalorder %s24, 1
      %p73 = por %p71, %p72
      %p75 = scmp.ne.s32.totalorder %s58, %s74
      %p76 = scmp.eq.s32.totalorder %s24, 0
      %p77 = por %p75, %p76
      %s79 = sadd.s32 %s78, 1
      %p82 = scmp.eq.s32.totalorder %s18, 1
      %p83 = scmp.ne.s32.totalorder %s78, %s80
      %p84 = scmp.eq.s32.totalorder %s18, 0
      %p85 = por %p83, %p84
      %p86 = scmp.ne.s32.totalorder %s78, %s80
      %p87 = scmp.eq.s32.totalorder %s23, 1
      %p88 = por %p86, %p87
      %p89 = scmp.ne.s32.totalorder %s80, %s81
      %p90 = scmp.eq.s32.totalorder %s23, 0
      %p91 = por %p89, %p90
      %p92 = scmp.ne.s32.totalorder %s80, %s81
      %p93 = scmp.eq.s32.totalorder %s24, 1
      %p94 = por %p92, %p93
      %p96 = scmp.ne.s32.totalorder %s81, %s95
      %p97 = scmp.eq.s32.totalorder %s24, 0
      %p98 = por %p96, %p97
      %s100 = sadd.s32 %s99, 1
      %p103 = scmp.eq.s32.totalorder %s18, 1
      %p104 = scmp.ne.s32.totalorder %s99, %s101
      %p105 = scmp.eq.s32.totalorder %s18, 0
      %p106 = por %p104, %p105
      %p107 = scmp.ne.s32.totalorder %s99, %s101
      %p108 = scmp.eq.s32.totalorder %s23, 1
      %p109 = por %p107, %p108
      %p110 = scmp.ne.s32.totalorder %s101, %s102
      %p111 = scmp.eq.s32.totalorder %s23, 0
      %p112 = por %p110, %p111
      %p113 = scmp.ne.s32.totalorder %s101, %s102
      %p114 = scmp.eq.s32.totalorder %s24, 1
      %p115 = por %p113, %p114
      %p117 = scmp.ne.s32.totalorder %s102, %s116
      %p118 = scmp.eq.s32.totalorder %s24, 0
      %p119 = por %p117, %p118
      %s121 = sadd.s32 %s120, 1
      %p124 = scmp.eq.s32.totalorder %s18, 1
      %p125 = scmp.ne.s32.totalorder %s120, %s122
      %p126 = scmp.eq.s32.totalorder %s18, 0
      %p127 = por %p125, %p126
      %p128 = scmp.ne.s32.totalorder %s120, %s122
      %p129 = scmp.eq.s32.totalorder %s23, 1
      %p130 = por %p128, %p129
      %p131 = scmp.ne.s32.totalorder %s122, %s123
      %p132 = scmp.eq.s32.totalorder %s23, 0
      %p133 = por %p131, %p132
      %p134 = scmp.ne.s32.totalorder %s122, %s123
      %p135 = scmp.eq.s32.totalorder %s24, 1
      %p136 = por %p134, %p135
      %p138 = scmp.ne.s32.totalorder %s123, %s137
      %p139 = scmp.eq.s32.totalorder %s24, 0
      %p140 = por %p138, %p139
      %s142 = sadd.s32 %s141, 1
      %p145 = scmp.eq.s32.totalorder %s18, 1
      %p146 = scmp.ne.s32.totalorder %s141, %s143
      %p147 = scmp.eq.s32.totalorder %s18, 0
      %p148 = por %p146, %p147
      %p149 = scmp.ne.s32.totalorder %s141, %s143
      %p150 = scmp.eq.s32.totalorder %s23, 1
      %p151 = por %p149, %p150
      %p152 = scmp.ne.s32.totalorder %s143, %s144
      %p153 = scmp.eq.s32.totalorder %s23, 0
      %p154 = por %p152, %p153
      %p155 = scmp.ne.s32.totalorder %s143, %s144
      %p156 = scmp.eq.s32.totalorder %s24, 1
      %p157 = por %p155, %p156
      %p159 = scmp.ne.s32.totalorder %s144, %s158
      %p160 = scmp.eq.s32.totalorder %s24, 0
      %p161 = por %p159, %p160
      %s163 = sadd.s32 %s162, 1
      %p166 = scmp.eq.s32.totalorder %s18, 1
      %p167 = scmp.ne.s32.totalorder %s162, %s164
      %p168 = scmp.eq.s32.totalorder %s18, 0
      %p169 = por %p167, %p168
      %p170 = scmp.ne.s32.totalorder %s162, %s164
      %p171 = scmp.eq.s32.totalorder %s23, 1
      %p172 = por %p170, %p171
      %p173 = scmp.ne.s32.totalorder %s164, %s165
      %p174 = scmp.eq.s32.totalorder %s23, 0
      %p175 = por %p173, %p174
      %p176 = scmp.ne.s32.totalorder %s164, %s165
      %p177 = scmp.eq.s32.totalorder %s24, 1
      %p178 = por %p176, %p177
      %p180 = scmp.ne.s32.totalorder %s165, %s179
      %p181 = scmp.eq.s32.totalorder %s24, 0
      %p182 = por %p180, %p181
      %s183 = ssub.s32 %s18, %s25
      %p184 = scmp.eq.s32.totalorder %s183, 0
      %s186 = sadd.s32 %s185, 1
      %s187 = scalar_select %p184, %s185, %s186
      %p190 = pneg %p184
      %p191 = scmp.eq.s32.totalorder %s18, 1
      %p192 = por %p190, %p191
      %p193 = scmp.ne.s32.totalorder %s185, %s188
      %p194 = scmp.eq.s32.totalorder %s18, 0
      %p195 = por %p193, %p194
      %p196 = scmp.ne.s32.totalorder %s185, %s188
      %p197 = scmp.eq.s32.totalorder %s23, 1
      %p198 = por %p196, %p197
      %p199 = scmp.ne.s32.totalorder %s188, %s189
      %p200 = scmp.eq.s32.totalorder %s23, 0
      %p201 = por %p199, %p200
      %p202 = scmp.ne.s32.totalorder %s188, %s189
      %p203 = scmp.eq.s32.totalorder %s24, 1
      %p204 = por %p202, %p203
      %p206 = scmp.ne.s32.totalorder %s189, %s205
      %p207 = scmp.eq.s32.totalorder %s24, 0
      %p208 = por %p206, %p207
      %p209 = scmp.le.s32.totalorder 1, %s18
      %p210 = scmp.lt.s32.totalorder %s18, 3
      %p211 = pnand %p209, %p210
      %p212 = pneg %p211
      // Predicated region
      $region9: #{tpu_custom_call.1} parent=5 // pred_check
        _
      $region10: #{tpu_custom_call.1} parent=5 // pred_check_branch
        %214 = sbr.rel (%p211) target = $region12
      $region11: #{tpu_custom_call.1} parent=5 // pred_region
        %s215 = ssub.s32 %s18, 1
        // Predicated region
        $region13: #{tpu_custom_call.1} parent=11 // pred_check
          %p216 = pneg %p91
        $region14: #{tpu_custom_call.1} parent=11 // pred_check_branch
          %218 = sbr.rel (%p216) target = $region16
        $region15: #{tpu_custom_call.1} parent=11 // pred_region
          %s220 = ssub.s32 576, 576
          %221 = vsyncadd [#allocation3], %s220
          %s222 = sshll.u32 [#allocation2], 4
          %s223 = int_to_ptr.vmem [resolvable:$true] %s222
          %228 = dma.hbm_to_vmem [thread:$0]  %s2, 576, %s223, [#allocation3], 64, 64, 4
        $region16: #{tpu_custom_call.1} parent=11 // pred_fallthru
          _
        // Predicated region
        $region17: #{tpu_custom_call.1} parent=11 // pred_check
          %p229 = pneg %p112
        $region18: #{tpu_custom_call.1} parent=11 // pred_check_branch
          %231 = sbr.rel (%p229) target = $region20
        $region19: #{tpu_custom_call.1} parent=11 // pred_region
          _
        $region20: #{tpu_custom_call.1} parent=11 // pred_fallthru
          _
        // Predicated region
        $region21: #{tpu_custom_call.1} parent=11 // pred_check
          %p232 = pneg %p133
        $region22: #{tpu_custom_call.1} parent=11 // pred_check_branch
          %234 = sbr.rel (%p232) target = $region24
        $region23: #{tpu_custom_call.1} parent=11 // pred_region
          _
        $region24: #{tpu_custom_call.1} parent=11 // pred_fallthru
          _
        // Predicated region
        $region25: #{tpu_custom_call.1} parent=11 // pred_check
          %p235 = pneg %p154
        $region26: #{tpu_custom_call.1} parent=11 // pred_check_branch
          %237 = sbr.rel (%p235) target = $region28
        $region27: #{tpu_custom_call.1} parent=11 // pred_region
          %s239 = ssub.s32 9216, 9216
          %240 = vsyncadd [#allocation6], %s239
          %s241 = sshll.u32 [#allocation5], 4
          %s242 = int_to_ptr.vmem [resolvable:$true] %s241
          %247 = dma.hbm_to_vmem [thread:$0]  %s5, 9216, %s242, [#allocation6], 64, 64, 4
        $region28: #{tpu_custom_call.1} parent=11 // pred_fallthru
          _
        // Predicated region
        $region29: #{tpu_custom_call.1} parent=11 // pred_check
          %p248 = pneg %p175
        $region30: #{tpu_custom_call.1} parent=11 // pred_check_branch
          %250 = sbr.rel (%p248) target = $region32
        $region31: #{tpu_custom_call.1} parent=11 // pred_region
          _
        $region32: #{tpu_custom_call.1} parent=11 // pred_fallthru
          _
      $region12: #{tpu_custom_call.1} parent=5 // pred_fallthru
        _
      %p251 = scmp.lt.s32.totalorder %s18, 2
      // Predicated region
      $region33: #{tpu_custom_call.1} parent=5 // pred_check
        %p252 = pneg %p251
      $region34: #{tpu_custom_call.1} parent=5 // pred_check_branch
        %254 = sbr.rel (%p252) target = $region36
      $region35: #{tpu_custom_call.1} parent=5 // pred_region
        // Predicated region
        $region37: #{tpu_custom_call.1} parent=35 // pred_check
          %p255 = pneg %p38
        $region38: #{tpu_custom_call.1} parent=35 // pred_check_branch
          %257 = sbr.rel (%p255) target = $region40
        $region39: #{tpu_custom_call.1} parent=35 // pred_region
          %p258 = scmp.lt.s32.totalorder %s18, 1
          %s259 = scalar_select %p258, %s18, 1
          %s260 = smul.addr %s259, 8
          %s261 = smul.addr %s260, 4
          %s262 = scalar_lea.vmem %s0, %s261
        $region40: #{tpu_custom_call.1} parent=35 // pred_fallthru
          _
        // Predicated region
        $region41: #{tpu_custom_call.1} parent=35 // pred_check
          %p263 = pneg %p64
        $region42: #{tpu_custom_call.1} parent=35 // pred_check_branch
          %265 = sbr.rel (%p263) target = $region44
        $region43: #{tpu_custom_call.1} parent=35 // pred_region
          %p266 = scmp.lt.s32.totalorder %s18, 1
          %s267 = scalar_select %p266, %s18, 1
          %s268 = smul.addr %s267, 16
          %s269 = smul.addr %s268, 4
          %s270 = scalar_lea.vmem %s1, %s269
        $region44: #{tpu_custom_call.1} parent=35 // pred_fallthru
          _
      $region36: #{tpu_custom_call.1} parent=5 // pred_fallthru
        _
      %p271 = scmp.le.s32.totalorder 1, %s18
      %p272 = scmp.lt.s32.totalorder %s18, 3
      %p273 = pnand %p271, %p272
      %p274 = pneg %p273
      // Predicated region
      $region45: #{tpu_custom_call.1} parent=5 // pred_check
        _
      $region46: #{tpu_custom_call.1} parent=5 // pred_check_branch
        %276 = sbr.rel (%p273) target = $region48
      $region47: #{tpu_custom_call.1} parent=5 // pred_region
        %s277 = ssub.s32 %s18, 1
        // Predicated region
        $region49: #{tpu_custom_call.1} parent=47 // pred_check
          %p278 = pneg %p91
        $region50: #{tpu_custom_call.1} parent=47 // pred_check_branch
          %280 = sbr.rel (%p278) target = $region52
        $region51: #{tpu_custom_call.1} parent=47 // pred_region
          %281 = dma.done [#allocation3], 576
        $region52: #{tpu_custom_call.1} parent=47 // pred_fallthru
          _
        // Predicated region
        $region53: #{tpu_custom_call.1} parent=47 // pred_check
          %p282 = pneg %p154
        $region54: #{tpu_custom_call.1} parent=47 // pred_check_branch
          %284 = sbr.rel (%p282) target = $region56
        $region55: #{tpu_custom_call.1} parent=47 // pred_region
          %285 = dma.done [#allocation6], 9216
        $region56: #{tpu_custom_call.1} parent=47 // pred_fallthru
          _
        %p286 = scmp.lt.s32.totalorder %s23, 1
        %s287 = scalar_select %p286, %s23, 1
        %s288 = smul.addr %s287, 8
        %s289 = smul.addr %s288, 4
        %s290 = scalar_lea.vmem %s0, %s289
        %p291 = pneg %p44
        %p292 = pneg %p41
        %p293 = scmp.lt.s32.totalorder %s23, 1
        %s294 = scalar_select %p293, %s23, 1
        %s295 = smul.addr %s294, 16
        %s296 = smul.addr %s295, 4
        %s297 = scalar_lea.vmem %s1, %s296
        %p298 = pneg %p70
        %p299 = pneg %p67
        %p300 = pneg %p91
        %p301 = pneg %p88
        %p302 = pneg %p112
        %p303 = pneg %p109
        %p304 = pneg %p133
        %p305 = pneg %p130
        %p306 = pneg %p154
        %p307 = pneg %p151
        %p308 = pneg %p175
        %p309 = pneg %p172
        %p310 = pneg %p201
        %p311 = pneg %p198
        %s312 = sand.u32 %s188, 1
        %s313 = scalar_lea.sflag [#allocation4], %s312
        %s314 = sand.u32 %s188, 1
        %s315 = smul.addr %s314, 64
        %s316 = scalar_lea.vmem [#allocation7], %s315
        %p317 = scmp.lt.s32.totalorder %s23, 1
        %s318 = scalar_select %p317, %s23, 1
        %s319 = smul.addr %s318, 8
        %s320 = smul.addr %s319, 4
        %s321 = scalar_lea.vmem %s0, %s320
        %p322 = scmp.lt.s32.totalorder %s23, 1
        %s323 = scalar_select %p322, %s23, 1
        %s324 = smul.addr %s323, 16
        %s325 = smul.addr %s324, 4
        %s326 = scalar_lea.vmem %s1, %s325
        %v330 = vld [vmem:[%s321] sm:$0xf]
        %v331 = vld [vmem:[%s321 + $0x4] sm:$0xf]
        %v332 = vld [vmem:[%s321 + $0x8] sm:$0xf]
        %v333 = vld [vmem:[%s321 + $0xc] sm:$0xf]
        %v334 = vld [vmem:[%s321 + $0x10] sm:$0xf]
        %v335 = vld [vmem:[%s321 + $0x14] sm:$0xf]
        %v336 = vld [vmem:[%s321 + $0x18] sm:$0xf]
        %v337 = vld [vmem:[%s321 + $0x1c] sm:$0xf]
        %v346 = vunpack.c.l.b16 %v330
        %v347 = vunpack.c.l.b16 %v331
        %v348 = vunpack.c.l.b16 %v332
        %v349 = vunpack.c.l.b16 %v333
        %v350 = vunpack.c.l.b16 %v334
        %v351 = vunpack.c.l.b16 %v335
        %v352 = vunpack.c.l.b16 %v336
        %v353 = vunpack.c.l.b16 %v337
        %v354 = vpack.c.b16 %v346, %v346
        %v355 = vpack.c.b16 %v347, %v347
        %v356 = vpack.c.b16 %v348, %v348
        %v357 = vpack.c.b16 %v349, %v349
        %v358 = vpack.c.b16 %v350, %v350
        %v359 = vpack.c.b16 %v351, %v351
        %v360 = vpack.c.b16 %v352, %v352
        %v361 = vpack.c.b16 %v353, %v353
        %v370 = vlaneseq
        %v371 = vshrl.u32 %v370, 7
        %v372 = vadd.s32 %v371, 8
        %v373 = vadd.s32 %v371, 16
        %v374 = vadd.s32 %v371, 24
        %v375 = vadd.s32 %v371, 32
        %v376 = vadd.s32 %v371, 40
        %v377 = vadd.s32 %v371, 48
        %v378 = vadd.s32 %v371, 56
        %v379 = vadd.s32 %v371, 64
        %v380 = vadd.s32 %v371, 72
        %v381 = vadd.s32 %v371, 80
        %v382 = vadd.s32 %v371, 88
        %v383 = vadd.s32 %v371, 96
        %v384 = vadd.s32 %v371, 104
        %v385 = vadd.s32 %v371, 112
        %v386 = vadd.s32 %v371, 120
        %v387 = vadd.s32 %v371, 128
        %v388 = vadd.s32 %v371, 136
        %vm389 = vcmp.lt.s32.totalorder %v371, 0
        %v390 = vsub.s32 0, %v371
        %v391 = vsel %vm389, %v390, %v371
        %v392 = vshrl.u32 %v391, 3
        %v393 = vand.u32 %v391, 7
        %v394 = vsub.s32 0, %v393
        %v395 = vsel %vm389, %v394, %v393
        %vm396 = vcmp.lt.s32.totalorder %v372, 0
        %v397 = vsub.s32 0, %v372
        %v398 = vsel %vm396, %v397, %v372
        %v399 = vshrl.u32 %v398, 3
        %v400 = vand.u32 %v398, 7
        %v401 = vsub.s32 0, %v400
        %v402 = vsel %vm396, %v401, %v400
        %vm403 = vcmp.lt.s32.totalorder %v373, 0
        %v404 = vsub.s32 0, %v373
        %v405 = vsel %vm403, %v404, %v373
        %v406 = vshrl.u32 %v405, 3
        %v407 = vand.u32 %v405, 7
        %v408 = vsub.s32 0, %v407
        %v409 = vsel %vm403, %v408, %v407
        %vm410 = vcmp.lt.s32.totalorder %v374, 0
        %v411 = vsub.s32 0, %v374
        %v412 = vsel %vm410, %v411, %v374
        %v413 = vshrl.u32 %v412, 3
        %v414 = vand.u32 %v412, 7
        %v415 = vsub.s32 0, %v414
        %v416 = vsel %vm410, %v415, %v414
        %vm417 = vcmp.lt.s32.totalorder %v375, 0
        %v418 = vsub.s32 0, %v375
        %v419 = vsel %vm417, %v418, %v375
        %v420 = vshrl.u32 %v419, 3
        %v421 = vand.u32 %v419, 7
        %v422 = vsub.s32 0, %v421
        %v423 = vsel %vm417, %v422, %v421
        %vm424 = vcmp.lt.s32.totalorder %v376, 0
        %v425 = vsub.s32 0, %v376
        %v426 = vsel %vm424, %v425, %v376
        %v427 = vshrl.u32 %v426, 3
        %v428 = vand.u32 %v426, 7
        %v429 = vsub.s32 0, %v428
        %v430 = vsel %vm424, %v429, %v428
        %vm431 = vcmp.lt.s32.totalorder %v377, 0
        %v432 = vsub.s32 0, %v377
        %v433 = vsel %vm431, %v432, %v377
        %v434 = vshrl.u32 %v433, 3
        %v435 = vand.u32 %v433, 7
        %v436 = vsub.s32 0, %v435
        %v437 = vsel %vm431, %v436, %v435
        %vm438 = vcmp.lt.s32.totalorder %v378, 0
        %v439 = vsub.s32 0, %v378
        %v440 = vsel %vm438, %v439, %v378
        %v441 = vshrl.u32 %v440, 3
        %v442 = vand.u32 %v440, 7
        %v443 = vsub.s32 0, %v442
        %v444 = vsel %vm438, %v443, %v442
        %vm445 = vcmp.lt.s32.totalorder %v379, 0
        %v446 = vsub.s32 0, %v379
        %v447 = vsel %vm445, %v446, %v379
        %v448 = vshrl.u32 %v447, 3
        %v449 = vand.u32 %v447, 7
        %v450 = vsub.s32 0, %v449
        %v451 = vsel %vm445, %v450, %v449
        %vm452 = vcmp.lt.s32.totalorder %v380, 0
        %v453 = vsub.s32 0, %v380
        %v454 = vsel %vm452, %v453, %v380
        %v455 = vshrl.u32 %v454, 3
        %v456 = vand.u32 %v454, 7
        %v457 = vsub.s32 0, %v456
        %v458 = vsel %vm452, %v457, %v456
        %vm459 = vcmp.lt.s32.totalorder %v381, 0
        %v460 = vsub.s32 0, %v381
        %v461 = vsel %vm459, %v460, %v381
        %v462 = vshrl.u32 %v461, 3
        %v463 = vand.u32 %v461, 7
        %v464 = vsub.s32 0, %v463
        %v465 = vsel %vm459, %v464, %v463
        %vm466 = vcmp.lt.s32.totalorder %v382, 0
        %v467 = vsub.s32 0, %v382
        %v468 = vsel %vm466, %v467, %v382
        %v469 = vshrl.u32 %v468, 3
        %v470 = vand.u32 %v468, 7
        %v471 = vsub.s32 0, %v470
        %v472 = vsel %vm466, %v471, %v470
        %vm473 = vcmp.lt.s32.totalorder %v383, 0
        %v474 = vsub.s32 0, %v383
        %v475 = vsel %vm473, %v474, %v383
        %v476 = vshrl.u32 %v475, 3
        %v477 = vand.u32 %v475, 7
        %v478 = vsub.s32 0, %v477
        %v479 = vsel %vm473, %v478, %v477
        %vm480 = vcmp.lt.s32.totalorder %v384, 0
        %v481 = vsub.s32 0, %v384
        %v482 = vsel %vm480, %v481, %v384
        %v483 = vshrl.u32 %v482, 3
        %v484 = vand.u32 %v482, 7
        %v485 = vsub.s32 0, %v484
        %v486 = vsel %vm480, %v485, %v484
        %vm487 = vcmp.lt.s32.totalorder %v385, 0
        %v488 = vsub.s32 0, %v385
        %v489 = vsel %vm487, %v488, %v385
        %v490 = vshrl.u32 %v489, 3
        %v491 = vand.u32 %v489, 7
        %v492 = vsub.s32 0, %v491
        %v493 = vsel %vm487, %v492, %v491
        %vm494 = vcmp.lt.s32.totalorder %v386, 0
        %v495 = vsub.s32 0, %v386
        %v496 = vsel %vm494, %v495, %v386
        %v497 = vshrl.u32 %v496, 3
        %v498 = vand.u32 %v496, 7
        %v499 = vsub.s32 0, %v498
        %v500 = vsel %vm494, %v499, %v498
        %vm501 = vcmp.lt.s32.totalorder %v387, 0
        %v502 = vsub.s32 0, %v387
        %v503 = vsel %vm501, %v502, %v387
        %v504 = vshrl.u32 %v503, 3
        %v505 = vand.u32 %v503, 7
        %v506 = vsub.s32 0, %v505
        %v507 = vsel %vm501, %v506, %v505
        %vm508 = vcmp.lt.s32.totalorder %v388, 0
        %v509 = vsub.s32 0, %v388
        %v510 = vsel %vm508, %v509, %v388
        %v511 = vshrl.u32 %v510, 3
        %v512 = vand.u32 %v510, 7
        %v513 = vsub.s32 0, %v512
        %v514 = vsel %vm508, %v513, %v512
        %vm515 = vcmp.ne.s32.totalorder %v395, 0
        %vm516 = vcmp.ne.s32.totalorder %v402, 0
        %vm517 = vcmp.ne.s32.totalorder %v409, 0
        %vm518 = vcmp.ne.s32.totalorder %v416, 0
        %vm519 = vcmp.ne.s32.totalorder %v423, 0
        %vm520 = vcmp.ne.s32.totalorder %v430, 0
        %vm521 = vcmp.ne.s32.totalorder %v437, 0
        %vm522 = vcmp.ne.s32.totalorder %v444, 0
        %vm523 = vcmp.ne.s32.totalorder %v451, 0
        %vm524 = vcmp.ne.s32.totalorder %v458, 0
        %vm525 = vcmp.ne.s32.totalorder %v465, 0
        %vm526 = vcmp.ne.s32.totalorder %v472, 0
        %vm527 = vcmp.ne.s32.totalorder %v479, 0
        %vm528 = vcmp.ne.s32.totalorder %v486, 0
        %vm529 = vcmp.ne.s32.totalorder %v493, 0
        %vm530 = vcmp.ne.s32.totalorder %v500, 0
        %vm531 = vcmp.ne.s32.totalorder %v507, 0
        %vm532 = vcmp.ne.s32.totalorder %v514, 0
        %vm533 = vcmp.lt.s32.totalorder %v395, 0
        %vm534 = vcmp.lt.s32.totalorder %v402, 0
        %vm535 = vcmp.lt.s32.totalorder %v409, 0
        %vm536 = vcmp.lt.s32.totalorder %v416, 0
        %vm537 = vcmp.lt.s32.totalorder %v423, 0
        %vm538 = vcmp.lt.s32.totalorder %v430, 0
        %vm539 = vcmp.lt.s32.totalorder %v437, 0
        %vm540 = vcmp.lt.s32.totalorder %v444, 0
        %vm541 = vcmp.lt.s32.totalorder %v451, 0
        %vm542 = vcmp.lt.s32.totalorder %v458, 0
        %vm543 = vcmp.lt.s32.totalorder %v465, 0
        %vm544 = vcmp.lt.s32.totalorder %v472, 0
        %vm545 = vcmp.lt.s32.totalorder %v479, 0
        %vm546 = vcmp.lt.s32.totalorder %v486, 0
        %vm547 = vcmp.lt.s32.totalorder %v493, 0
        %vm548 = vcmp.lt.s32.totalorder %v500, 0
        %vm549 = vcmp.lt.s32.totalorder %v507, 0
        %vm550 = vcmp.lt.s32.totalorder %v514, 0
        %vm551 = vmand %vm533, %vm515
        %vm552 = vmand %vm534, %vm516
        %vm553 = vmand %vm535, %vm517
        %vm554 = vmand %vm536, %vm518
        %vm555 = vmand %vm537, %vm519
        %vm556 = vmand %vm538, %vm520
        %vm557 = vmand %vm539, %vm521
        %vm558 = vmand %vm540, %vm522
        %vm559 = vmand %vm541, %vm523
        %vm560 = vmand %vm542, %vm524
        %vm561 = vmand %vm543, %vm525
        %vm562 = vmand %vm544, %vm526
        %vm563 = vmand %vm545, %vm527
        %vm564 = vmand %vm546, %vm528
        %vm565 = vmand %vm547, %vm529
        %vm566 = vmand %vm548, %vm530
        %vm567 = vmand %vm549, %vm531
        %vm568 = vmand %vm550, %vm532
        %v569 = vadd.s32 %v395, 8
        %v570 = vadd.s32 %v402, 8
        %v571 = vadd.s32 %v409, 8
        %v572 = vadd.s32 %v416, 8
        %v573 = vadd.s32 %v423, 8
        %v574 = vadd.s32 %v430, 8
        %v575 = vadd.s32 %v437, 8
        %v576 = vadd.s32 %v444, 8
        %v577 = vadd.s32 %v451, 8
        %v578 = vadd.s32 %v458, 8
        %v579 = vadd.s32 %v465, 8
        %v580 = vadd.s32 %v472, 8
        %v581 = vadd.s32 %v479, 8
        %v582 = vadd.s32 %v486, 8
        %v583 = vadd.s32 %v493, 8
        %v584 = vadd.s32 %v500, 8
        %v585 = vadd.s32 %v507, 8
        %v586 = vadd.s32 %v514, 8
        %v587 = vsel %vm551, %v569, %v395
        %v588 = vsel %vm552, %v570, %v402
        %v589 = vsel %vm553, %v571, %v409
        %v590 = vsel %vm554, %v572, %v416
        %v591 = vsel %vm555, %v573, %v423
        %v592 = vsel %vm556, %v574, %v430
        %v593 = vsel %vm557, %v575, %v437
        %v594 = vsel %vm558, %v576, %v444
        %v595 = vsel %vm559, %v577, %v451
        %v596 = vsel %vm560, %v578, %v458
        %v597 = vsel %vm561, %v579, %v465
        %v598 = vsel %vm562, %v580, %v472
        %v599 = vsel %vm563, %v581, %v479
        %v600 = vsel %vm564, %v582, %v486
        %v601 = vsel %vm565, %v583, %v493
        %v602 = vsel %vm566, %v584, %v500
        %v603 = vsel %vm567, %v585, %v507
        %v604 = vsel %vm568, %v586, %v514
        %vm605 = vcmp.eq.s32.totalorder %v587, 0
        %vm606 = vcmp.eq.s32.totalorder %v588, 0
        %vm607 = vcmp.eq.s32.totalorder %v589, 0
        %vm608 = vcmp.eq.s32.totalorder %v590, 0
        %vm609 = vcmp.eq.s32.totalorder %v591, 0
        %vm610 = vcmp.eq.s32.totalorder %v592, 0
        %vm611 = vcmp.eq.s32.totalorder %v593, 0
        %vm612 = vcmp.eq.s32.totalorder %v594, 0
        %vm613 = vcmp.eq.s32.totalorder %v595, 0
        %vm614 = vcmp.eq.s32.totalorder %v596, 0
        %vm615 = vcmp.eq.s32.totalorder %v597, 0
        %vm616 = vcmp.eq.s32.totalorder %v598, 0
        %vm617 = vcmp.eq.s32.totalorder %v599, 0
        %vm618 = vcmp.eq.s32.totalorder %v600, 0
        %vm619 = vcmp.eq.s32.totalorder %v601, 0
        %vm620 = vcmp.eq.s32.totalorder %v602, 0
        %vm621 = vcmp.eq.s32.totalorder %v603, 0
        %vm622 = vcmp.eq.s32.totalorder %v604, 0
        %v623 = vsel %vm605, 1, 0
        %v624 = vsel %vm606, 1, 0
        %v625 = vsel %vm607, 1, 0
        %v626 = vsel %vm608, 1, 0
        %v627 = vsel %vm609, 1, 0
        %v628 = vsel %vm610, 1, 0
        %v629 = vsel %vm611, 1, 0
        %v630 = vsel %vm612, 1, 0
        %v631 = vsel %vm613, 1, 0
        %v632 = vsel %vm614, 1, 0
        %v633 = vsel %vm615, 1, 0
        %v634 = vsel %vm616, 1, 0
        %v635 = vsel %vm617, 1, 0
        %v636 = vsel %vm618, 1, 0
        %v637 = vsel %vm619, 1, 0
        %v638 = vsel %vm620, 1, 0
        %v639 = vsel %vm621, 1, 0
        %v640 = vsel %vm622, 1, 0
        %vm641 = vcmp.eq.s32.totalorder %v623, 1
        %vm642 = vcmp.eq.s32.totalorder %v624, 1
        %vm643 = vcmp.eq.s32.totalorder %v625, 1
        %vm644 = vcmp.eq.s32.totalorder %v626, 1
        %vm645 = vcmp.eq.s32.totalorder %v627, 1
        %vm646 = vcmp.eq.s32.totalorder %v628, 1
        %vm647 = vcmp.eq.s32.totalorder %v629, 1
        %vm648 = vcmp.eq.s32.totalorder %v630, 1
        %vm649 = vcmp.eq.s32.totalorder %v631, 1
        %vm650 = vcmp.eq.s32.totalorder %v632, 1
        %vm651 = vcmp.eq.s32.totalorder %v633, 1
        %vm652 = vcmp.eq.s32.totalorder %v634, 1
        %vm653 = vcmp.eq.s32.totalorder %v635, 1
        %vm654 = vcmp.eq.s32.totalorder %v636, 1
        %vm655 = vcmp.eq.s32.totalorder %v637, 1
        %vm656 = vcmp.eq.s32.totalorder %v638, 1
        %vm657 = vcmp.eq.s32.totalorder %v639, 1
        %vm658 = vcmp.eq.s32.totalorder %v640, 1
        %vm659 = vmpackc.low %vm641, %vm641
        %vm660 = vmpackc.low %vm642, %vm642
        %vm661 = vmpackc.low %vm643, %vm643
        %vm662 = vmpackc.low %vm644, %vm644
        %vm663 = vmpackc.low %vm645, %vm645
        %vm664 = vmpackc.low %vm646, %vm646
        %vm665 = vmpackc.low %vm647, %vm647
        %vm666 = vmpackc.low %vm648, %vm648
        %vm667 = vmpackc.low %vm649, %vm649
        %vm668 = vmpackc.low %vm650, %vm650
        %vm669 = vmpackc.low %vm651, %vm651
        %vm670 = vmpackc.low %vm652, %vm652
        %vm671 = vmpackc.low %vm653, %vm653
        %vm672 = vmpackc.low %vm654, %vm654
        %vm673 = vmpackc.low %vm655, %vm655
        %vm674 = vmpackc.low %vm656, %vm656
        %vm675 = vmpackc.low %vm657, %vm657
        %vm676 = vmpackc.low %vm658, %vm658
        %v677 = vsel %vm659, 65537, 0
        %v678 = vsel %vm660, 65537, 0
        %v679 = vsel %vm661, 65537, 0
        %v680 = vsel %vm662, 65537, 0
        %v681 = vsel %vm663, 65537, 0
        %v682 = vsel %vm664, 65537, 0
        %v683 = vsel %vm665, 65537, 0
        %v684 = vsel %vm666, 65537, 0
        %v685 = vsel %vm667, 65537, 0
        %v686 = vsel %vm668, 65537, 0
        %v687 = vsel %vm669, 65537, 0
        %v688 = vsel %vm670, 65537, 0
        %v689 = vsel %vm671, 65537, 0
        %v690 = vsel %vm672, 65537, 0
        %v691 = vsel %vm673, 65537, 0
        %v692 = vsel %vm674, 65537, 0
        %v693 = vsel %vm675, 65537, 0
        %v694 = vsel %vm676, 65537, 0
        %v695 = vunpack.c.l.b16 %v677
        %v696 = vunpack.c.l.b16 %v678
        %v697 = vunpack.c.l.b16 %v679
        %v698 = vunpack.c.l.b16 %v680
        %v699 = vunpack.c.l.b16 %v681
        %v700 = vunpack.c.l.b16 %v682
        %v701 = vunpack.c.l.b16 %v683
        %v702 = vunpack.c.l.b16 %v684
        %v703 = vunpack.c.l.b16 %v685
        %v704 = vunpack.c.l.b16 %v686
        %v705 = vunpack.c.l.b16 %v687
        %v706 = vunpack.c.l.b16 %v688
        %v707 = vunpack.c.l.b16 %v689
        %v708 = vunpack.c.l.b16 %v690
        %v709 = vunpack.c.l.b16 %v691
        %v710 = vunpack.c.l.b16 %v692
        %v711 = vunpack.c.l.b16 %v693
        %v712 = vunpack.c.l.b16 %v694
        %v713 = vpack.c.b16 %v696, %v695
        %v714 = vpack.c.b16 %v698, %v697
        %v715 = vpack.c.b16 %v700, %v699
        %v716 = vpack.c.b16 %v702, %v701
        %v717 = vpack.c.b16 %v704, %v703
        %v718 = vpack.c.b16 %v706, %v705
        %v719 = vpack.c.b16 %v708, %v707
        %v720 = vpack.c.b16 %v710, %v709
        %v721 = vpack.c.b16 %v712, %v711
        %vm722 = vsmask.f32 3328
        %v724 = vshrl.u32 %v713, 16
        %v726 = vrot.slane %v724, 4
        %v727 = vshll.u32 %v713, 16
        %v729 = vrot.slane %v727, 5
        %v730 = vor.u32 %v726, %v729
        %v732 = vshrl.u32 %v714, 16
        %v734 = vrot.slane %v732, 4
        %v735 = vshll.u32 %v714, 16
        %v737 = vrot.slane %v735, 5
        %v738 = vor.u32 %v734, %v737
        %v739 = vsel %vm722, %v730, %v738
        %v741 = vshrl.u32 %v715, 16
        %v743 = vrot.slane %v741, 4
        %v744 = vshll.u32 %v715, 16
        %v746 = vrot.slane %v744, 5
        %v747 = vor.u32 %v743, %v746
        %v748 = vsel %vm722, %v738, %v747
        %v750 = vshrl.u32 %v716, 16
        %v752 = vrot.slane %v750, 4
        %v753 = vshll.u32 %v716, 16
        %v755 = vrot.slane %v753, 5
        %v756 = vor.u32 %v752, %v755
        %v757 = vsel %vm722, %v747, %v756
        %v759 = vshrl.u32 %v717, 16
        %v761 = vrot.slane %v759, 4
        %v762 = vshll.u32 %v717, 16
        %v764 = vrot.slane %v762, 5
        %v765 = vor.u32 %v761, %v764
        %v766 = vsel %vm722, %v756, %v765
        %v768 = vshrl.u32 %v718, 16
        %v770 = vrot.slane %v768, 4
        %v771 = vshll.u32 %v718, 16
        %v773 = vrot.slane %v771, 5
        %v774 = vor.u32 %v770, %v773
        %v775 = vsel %vm722, %v765, %v774
        %v777 = vshrl.u32 %v719, 16
        %v779 = vrot.slane %v777, 4
        %v780 = vshll.u32 %v719, 16
        %v782 = vrot.slane %v780, 5
        %v783 = vor.u32 %v779, %v782
        %v784 = vsel %vm722, %v774, %v783
        %v786 = vshrl.u32 %v720, 16
        %v788 = vrot.slane %v786, 4
        %v789 = vshll.u32 %v720, 16
        %v791 = vrot.slane %v789, 5
        %v792 = vor.u32 %v788, %v791
        %v793 = vsel %vm722, %v783, %v792
        %v795 = vshrl.u32 %v721, 16
        %v797 = vrot.slane %v795, 4
        %v798 = vshll.u32 %v721, 16
        %v800 = vrot.slane %v798, 5
        %v801 = vor.u32 %v797, %v800
        %v802 = vsel %vm722, %v792, %v801
        %vm803 = vcmp.ne.s16.totalorder %v739, 0
        %vm804 = vcmp.ne.s16.totalorder %v748, 0
        %vm805 = vcmp.ne.s16.totalorder %v757, 0
        %vm806 = vcmp.ne.s16.totalorder %v766, 0
        %vm807 = vcmp.ne.s16.totalorder %v775, 0
        %vm808 = vcmp.ne.s16.totalorder %v784, 0
        %vm809 = vcmp.ne.s16.totalorder %v793, 0
        %vm810 = vcmp.ne.s16.totalorder %v802, 0
        %v811 = vsel %vm803, 0, %v354
        %v812 = vsel %vm804, 0, %v355
        %v813 = vsel %vm805, 0, %v356
        %v814 = vsel %vm806, 0, %v357
        %v815 = vsel %vm807, 0, %v358
        %v816 = vsel %vm808, 0, %v359
        %v817 = vsel %vm809, 0, %v360
        %v818 = vsel %vm810, 0, %v361
        %v819 = vld [vmem:[#allocation2] sm:$0xf]
        %s820 = scalar_lea.vmem [#allocation2], 4
        %v821 = vld [vmem:[%s820] sm:$0xf]
        %vm822 = vsmask.f32 256
        %v824 = vshrl.u32 0, 16
        %v826 = vrot.slane %v824, 7
        %v828 = vshrl.u32 %v811, 16
        %v830 = vrot.slane %v828, 7
        %v831 = vshll.u32 %v811, 16
        %v833 = vor.u32 %v830, %v831
        %v834 = vsel %vm822, %v826, %v833
        %v836 = vshrl.u32 %v812, 16
        %v838 = vrot.slane %v836, 7
        %v839 = vshll.u32 %v812, 16
        %v841 = vor.u32 %v838, %v839
        %v842 = vsel %vm822, %v830, %v841
        %v844 = vshrl.u32 %v813, 16
        %v846 = vrot.slane %v844, 7
        %v847 = vshll.u32 %v813, 16
        %v849 = vor.u32 %v846, %v847
        %v850 = vsel %vm822, %v838, %v849
        %v852 = vshrl.u32 %v814, 16
        %v854 = vrot.slane %v852, 7
        %v855 = vshll.u32 %v814, 16
        %v857 = vor.u32 %v854, %v855
        %v858 = vsel %vm822, %v846, %v857
        %v860 = vshrl.u32 %v815, 16
        %v862 = vrot.slane %v860, 7
        %v863 = vshll.u32 %v815, 16
        %v865 = vor.u32 %v862, %v863
        %v866 = vsel %vm822, %v854, %v865
        %v868 = vshrl.u32 %v816, 16
        %v870 = vrot.slane %v868, 7
        %v871 = vshll.u32 %v816, 16
        %v873 = vor.u32 %v870, %v871
        %v874 = vsel %vm822, %v862, %v873
        %v876 = vshrl.u32 %v817, 16
        %v878 = vrot.slane %v876, 7
        %v879 = vshll.u32 %v817, 16
        %v881 = vor.u32 %v878, %v879
        %v882 = vsel %vm822, %v870, %v881
        %v884 = vshrl.u32 %v818, 16
        %v886 = vrot.slane %v884, 7
        %v887 = vshll.u32 %v818, 16
        %v889 = vor.u32 %v886, %v887
        %v890 = vsel %vm822, %v878, %v889
        %vm891 = vcmask 64512
        %v893 = vsel %vm891, %v834, 0
        %v896 = vsel %vm891, %v842, 0
        %v899 = vsel %vm891, %v850, 0
        %v902 = vsel %vm891, %v858, 0
        %v905 = vsel %vm891, %v866, 0
        %v908 = vsel %vm891, %v874, 0
        %v911 = vsel %vm891, %v882, 0
        %v914 = vsel %vm891, %v890, 0
        %vm916 = vcmask 1043456
        %v918 = vsel %vm916, %v821, 0
        %920 = vmatprep.subr.bf16.mxu0 0
        %921 = vmatpush1.bf16.msra.mxu0 %v918
        %922 = vmatprep.subr.bf16.mxu0 0
        %923 = vmatpush1.bf16.msra.mxu0 0
        %924 = vmatprep.subr.bf16.mxu0 0
        %925 = vmatpush1.bf16.msra.mxu0 0
        %926 = vmatprep.subr.bf16.mxu0 0
        %927 = vmatpush1.bf16.msra.mxu0 0
        %928 = vmatprep.subr.bf16.mxu0 0
        %929 = vmatpush1.bf16.msra.mxu0 0
        %930 = vmatprep.subr.bf16.mxu0 0
        %931 = vmatpush1.bf16.msra.mxu0 0
        %932 = vmatprep.subr.bf16.mxu0 0
        %933 = vmatpush1.bf16.msra.mxu0 0
        %934 = vmatprep.subr.bf16.mxu0 0
        %935 = vmatpush1.bf16.msra.mxu0 0
        %936 = vmatprep.subr.bf16.mxu0 0
        %937 = vmatpush1.bf16.msra.mxu0 0
        %938 = vmatprep.subr.bf16.mxu0 0
        %939 = vmatpush1.bf16.msra.mxu0 0
        %940 = vmatprep.subr.bf16.mxu0 0
        %941 = vmatpush1.bf16.msra.mxu0 0
        %942 = vmatprep.subr.bf16.mxu0 0
        %943 = vmatpush1.bf16.msra.mxu0 0
        %944 = vmatprep.subr.bf16.mxu0 0
        %945 = vmatpush1.bf16.msra.mxu0 0
        %946 = vmatprep.subr.bf16.mxu0 0
        %947 = vmatpush1.bf16.msra.mxu0 0
        %948 = vmatprep.subr.bf16.mxu0 0
        %949 = vmatpush1.bf16.msra.mxu0 0
        %950 = vmatprep.subr.bf16.mxu0 0
        %951 = vmatpush1.bf16.msra.mxu0 0
        %952 = vmatprep.mubr.bf16.mxu0 0
        %953 = vmatmul.mubr.bf16.gmra.mrb[0].mxu0 %v893
        %v954 = vpop.f32.mrb[0].mxu0
        %v955 = vadd.f32 0.0, %v954
        %v956 = vpop.f32.mrb[0].mxu0
        %v957 = vpop.f32.mrb[0].mxu0
        %v958 = vadd.f32 0.0, %v957
        %v959 = vpop.f32.mrb[0].mxu0
        %960 = vmatprep.mubr.bf16.mxu0 0
        %961 = vmatmul.mubr.bf16.gmra.mrb[0].mxu0 %v896
        %v962 = vpop.f32.mrb[0].mxu0
        %v963 = vadd.f32 0.0, %v962
        %v964 = vpop.f32.mrb[0].mxu0
        %v965 = vpop.f32.mrb[0].mxu0
        %v966 = vadd.f32 0.0, %v965
        %v967 = vpop.f32.mrb[0].mxu0
        %968 = vmatprep.mubr.bf16.mxu0 0
        %969 = vmatmul.mubr.bf16.gmra.mrb[0].mxu0 %v899
        %v970 = vpop.f32.mrb[0].mxu0
        %v971 = vadd.f32 0.0, %v970
        %v972 = vpop.f32.mrb[0].mxu0
        %v973 = vpop.f32.mrb[0].mxu0
        %v974 = vadd.f32 0.0, %v973
        %v975 = vpop.f32.mrb[0].mxu0
        %976 = vmatprep.mubr.bf16.mxu0 0
        %977 = vmatmul.mubr.bf16.gmra.mrb[0].mxu0 %v902
        %v978 = vpop.f32.mrb[0].mxu0
        %v979 = vadd.f32 0.0, %v978
        %v980 = vpop.f32.mrb[0].mxu0
        %v981 = vpop.f32.mrb[0].mxu0
        %v982 = vadd.f32 0.0, %v981
        %v983 = vpop.f32.mrb[0].mxu0
        %984 = vmatprep.mubr.bf16.mxu0 0
        %985 = vmatmul.mubr.bf16.gmra.mrb[0].mxu0 %v905
        %v986 = vpop.f32.mrb[0].mxu0
        %v987 = vadd.f32 0.0, %v986
        %v988 = vpop.f32.mrb[0].mxu0
        %v989 = vpop.f32.mrb[0].mxu0
        %v990 = vadd.f32 0.0, %v989
        %v991 = vpop.f32.mrb[0].mxu0
        %992 = vmatprep.mubr.bf16.mxu0 0
        %993 = vmatmul.mubr.bf16.gmra.mrb[0].mxu0 %v908
        %v994 = vpop.f32.mrb[0].mxu0
        %v995 = vadd.f32 0.0, %v994
        %v996 = vpop.f32.mrb[0].mxu0
        %v997 = vpop.f32.mrb[0].mxu0
        %v998 = vadd.f32 0.0, %v997
        %v999 = vpop.f32.mrb[0].mxu0
        %1000 = vmatprep.mubr.bf16.mxu0 0
        %1001 = vmatmul.mubr.bf16.gmra.mrb[0].mxu0 %v911
        %v1002 = vpop.f32.mrb[0].mxu0
        %v1003 = vadd.f32 0.0, %v1002
        %v1004 = vpop.f32.mrb[0].mxu0
        %v1005 = vpop.f32.mrb[0].mxu0
        %v1006 = vadd.f32 0.0, %v1005
        %v1007 = vpop.f32.mrb[0].mxu0
        %1008 = vmatprep.mubr.bf16.mxu0 0
        %1009 = vmatmul.mubr.bf16.gmra.mrb[0].mxu0 %v914
        %v1010 = vpop.f32.mrb[0].mxu0
        %v1011 = vadd.f32 0.0, %v1010
        %v1012 = vpop.f32.mrb[0].mxu0
        %v1013 = vpop.f32.mrb[0].mxu0
        %v1014 = vadd.f32 0.0, %v1013
        %v1015 = vpop.f32.mrb[0].mxu0
        %1016 = vdwg.mxu0
        %vm1017 = vsmask.f32 4352
        %v1018 = vrot.slane %v824, 3
        %v1019 = vshll.u32 0, 16
        %v1021 = vrot.slane %v1019, 4
        %v1022 = vor.u32 %v1018, %v1021
        %v1023 = vrot.slane %v828, 3
        %v1024 = vrot.slane %v831, 4
        %v1025 = vor.u32 %v1023, %v1024
        %v1026 = vsel %vm1017, %v1022, %v1025
        %v1027 = vrot.slane %v836, 3
        %v1028 = vrot.slane %v839, 4
        %v1029 = vor.u32 %v1027, %v1028
        %v1030 = vsel %vm1017, %v1025, %v1029
        %v1031 = vrot.slane %v844, 3
        %v1032 = vrot.slane %v847, 4
        %v1033 = vor.u32 %v1031, %v1032
        %v1034 = vsel %vm1017, %v1029, %v1033
        %v1035 = vrot.slane %v852, 3
        %v1036 = vrot.slane %v855, 4
        %v1037 = vor.u32 %v1035, %v1036
        %v1038 = vsel %vm1017, %v1033, %v1037
        %v1039 = vrot.slane %v860, 3
        %v1040 = vrot.slane %v863, 4
        %v1041 = vor.u32 %v1039, %v1040
        %v1042 = vsel %vm1017, %v1037, %v1041
        %v1043 = vrot.slane %v868, 3
        %v1044 = vrot.slane %v871, 4
        %v1045 = vor.u32 %v1043, %v1044
        %v1046 = vsel %vm1017, %v1041, %v1045
        %v1047 = vrot.slane %v876, 3
        %v1048 = vrot.slane %v879, 4
        %v1049 = vor.u32 %v1047, %v1048
        %v1050 = vsel %vm1017, %v1045, %v1049
        %v1051 = vrot.slane %v884, 3
        %v1052 = vrot.slane %v887, 4
        %v1053 = vor.u32 %v1051, %v1052
        %v1054 = vsel %vm1017, %v1049, %v1053
        %v1056 = vsel %vm891, %v1026, 0
        %v1059 = vsel %vm891, %v1030, 0
        %v1062 = vsel %vm891, %v1034, 0
        %v1065 = vsel %vm891, %v1038, 0
        %v1068 = vsel %vm891, %v1042, 0
        %v1071 = vsel %vm891, %v1046, 0
        %v1074 = vsel %vm891, %v1050, 0
        %v1077 = vsel %vm891, %v1054, 0
        %v1080 = vsel %vm916, %v819, 0
        %1082 = vmatprep.subr.bf16.mxu0 0
        %1083 = vmatpush1.bf16.msra.mxu0 %v1080
        %1084 = vmatprep.subr.bf16.mxu0 0
        %1085 = vmatpush1.bf16.msra.mxu0 0
        %1086 = vmatprep.subr.bf16.mxu0 0
        %1087 = vmatpush1.bf16.msra.mxu0 0
        %1088 = vmatprep.subr.bf16.mxu0 0
        %1089 = vmatpush1.bf16.msra.mxu0 0
        %1090 = vmatprep.subr.bf16.mxu0 0
        %1091 = vmatpush1.bf16.msra.mxu0 0
        %1092 = vmatprep.subr.bf16.mxu0 0
        %1093 = vmatpush1.bf16.msra.mxu0 0
        %1094 = vmatprep.subr.bf16.mxu0 0
        %1095 = vmatpush1.bf16.msra.mxu0 0
        %1096 = vmatprep.subr.bf16.mxu0 0
        %1097 = vmatpush1.bf16.msra.mxu0 0
        %1098 = vmatprep.subr.bf16.mxu0 0
        %1099 = vmatpush1.bf16.msra.mxu0 0
        %1100 = vmatprep.subr.bf16.mxu0 0
        %1101 = vmatpush1.bf16.msra.mxu0 0
        %1102 = vmatprep.subr.bf16.mxu0 0
        %1103 = vmatpush1.bf16.msra.mxu0 0
        %1104 = vmatprep.subr.bf16.mxu0 0
        %1105 = vmatpush1.bf16.msra.mxu0 0
        %1106 = vmatprep.subr.bf16.mxu0 0
        %1107 = vmatpush1.bf16.msra.mxu0 0
        %1108 = vmatprep.subr.bf16.mxu0 0
        %1109 = vmatpush1.bf16.msra.mxu0 0
        %1110 = vmatprep.subr.bf16.mxu0 0
        %1111 = vmatpush1.bf16.msra.mxu0 0
        %1112 = vmatprep.subr.bf16.mxu0 0
        %1113 = vmatpush1.bf16.msra.mxu0 0
        %1114 = vmatprep.mubr.bf16.mxu0 0
        %1115 = vmatmul.mubr.bf16.gmra.mrb[0].mxu0 %v1056
        %v1116 = vpop.f32.mrb[0].mxu0
        %v1117 = vadd.f32 %v955, %v1116
        %v1118 = vpop.f32.mrb[0].mxu0
        %v1119 = vpop.f32.mrb[0].mxu0
        %v1120 = vadd.f32 %v958, %v1119
        %v1121 = vpop.f32.mrb[0].mxu0
        %1122 = vmatprep.mubr.bf16.mxu0 0
        %1123 = vmatmul.mubr.bf16.gmra.mrb[0].mxu0 %v1059
        %v1124 = vpop.f32.mrb[0].mxu0
        %v1125 = vadd.f32 %v963, %v1124
        %v1126 = vpop.f32.mrb[0].mxu0
        %v1127 = vpop.f32.mrb[0].mxu0
        %v1128 = vadd.f32 %v966, %v1127
        %v1129 = vpop.f32.mrb[0].mxu0
        %1130 = vmatprep.mubr.bf16.mxu0 0
        %1131 = vmatmul.mubr.bf16.gmra.mrb[0].mxu0 %v1062
        %v1132 = vpop.f32.mrb[0].mxu0
        %v1133 = vadd.f32 %v971, %v1132
        %v1134 = vpop.f32.mrb[0].mxu0
        %v1135 = vpop.f32.mrb[0].mxu0
        %v1136 = vadd.f32 %v974, %v1135
        %v1137 = vpop.f32.mrb[0].mxu0
        %1138 = vmatprep.mubr.bf16.mxu0 0
        %1139 = vmatmul.mubr.bf16.gmra.mrb[0].mxu0 %v1065
        %v1140 = vpop.f32.mrb[0].mxu0
        %v1141 = vadd.f32 %v979, %v1140
        %v1142 = vpop.f32.mrb[0].mxu0
        %v1143 = vpop.f32.mrb[0].mxu0
        %v1144 = vadd.f32 %v982, %v1143
        %v1145 = vpop.f32.mrb[0].mxu0
        %1146 = vmatprep.mubr.bf16.mxu0 0
        %1147 = vmatmul.mubr.bf16.gmra.mrb[0].mxu0 %v1068
        %v1148 = vpop.f32.mrb[0].mxu0
        %v1149 = vadd.f32 %v987, %v1148
        %v1150 = vpop.f32.mrb[0].mxu0
        %v1151 = vpop.f32.mrb[0].mxu0
        %v1152 = vadd.f32 %v990, %v1151
        %v1153 = vpop.f32.mrb[0].mxu0
        %1154 = vmatprep.mubr.bf16.mxu0 0
        %1155 = vmatmul.mubr.bf16.gmra.mrb[0].mxu0 %v1071
        %v1156 = vpop.f32.mrb[0].mxu0
        %v1157 = vadd.f32 %v995, %v1156
        %v1158 = vpop.f32.mrb[0].mxu0
        %v1159 = vpop.f32.mrb[0].mxu0
        %v1160 = vadd.f32 %v998, %v1159
        %v1161 = vpop.f32.mrb[0].mxu0
        %1162 = vmatprep.mubr.bf16.mxu0 0
        %1163 = vmatmul.mubr.bf16.gmra.mrb[0].mxu0 %v1074
        %v1164 = vpop.f32.mrb[0].mxu0
        %v1165 = vadd.f32 %v1003, %v1164
        %v1166 = vpop.f32.mrb[0].mxu0
        %v1167 = vpop.f32.mrb[0].mxu0
        %v1168 = vadd.f32 %v1006, %v1167
        %v1169 = vpop.f32.mrb[0].mxu0
        %1170 = vmatprep.mubr.bf16.mxu0 0
        %1171 = vmatmul.mubr.bf16.gmra.mrb[0].mxu0 %v1077
        %v1172 = vpop.f32.mrb[0].mxu0
        %v1173 = vadd.f32 %v1011, %v1172
        %v1174 = vpop.f32.mrb[0].mxu0
        %v1175 = vpop.f32.mrb[0].mxu0
        %v1176 = vadd.f32 %v1014, %v1175
        %v1177 = vpop.f32.mrb[0].mxu0
        %1178 = vdwg.mxu0
        %s1179 = scalar_lea.vmem [#allocation2], 8
        %v1180 = vld [vmem:[%s1179] sm:$0xf]
        %v1181 = vsel %vm1017, %v1053, %v1022
        %v1183 = vsel %vm891, %v1181, 0
        %v1186 = vsel %vm916, %v1180, 0
        %1188 = vmatprep.subr.bf16.mxu0 0
        %1189 = vmatpush1.bf16.msra.mxu0 %v1186
        %1190 = vmatprep.subr.bf16.mxu0 0
        %1191 = vmatpush1.bf16.msra.mxu0 0
        %1192 = vmatprep.subr.bf16.mxu0 0
        %1193 = vmatpush1.bf16.msra.mxu0 0
        %1194 = vmatprep.subr.bf16.mxu0 0
        %1195 = vmatpush1.bf16.msra.mxu0 0
        %1196 = vmatprep.subr.bf16.mxu0 0
        %1197 = vmatpush1.bf16.msra.mxu0 0
        %1198 = vmatprep.subr.bf16.mxu0 0
        %1199 = vmatpush1.bf16.msra.mxu0 0
        %1200 = vmatprep.subr.bf16.mxu0 0
        %1201 = vmatpush1.bf16.msra.mxu0 0
        %1202 = vmatprep.subr.bf16.mxu0 0
        %1203 = vmatpush1.bf16.msra.mxu0 0
        %1204 = vmatprep.subr.bf16.mxu0 0
        %1205 = vmatpush1.bf16.msra.mxu0 0
        %1206 = vmatprep.subr.bf16.mxu0 0
        %1207 = vmatpush1.bf16.msra.mxu0 0
        %1208 = vmatprep.subr.bf16.mxu0 0
        %1209 = vmatpush1.bf16.msra.mxu0 0
        %1210 = vmatprep.subr.bf16.mxu0 0
        %1211 = vmatpush1.bf16.msra.mxu0 0
        %1212 = vmatprep.subr.bf16.mxu0 0
        %1213 = vmatpush1.bf16.msra.mxu0 0
        %1214 = vmatprep.subr.bf16.mxu0 0
        %1215 = vmatpush1.bf16.msra.mxu0 0
        %1216 = vmatprep.subr.bf16.mxu0 0
        %1217 = vmatpush1.bf16.msra.mxu0 0
        %1218 = vmatprep.subr.bf16.mxu0 0
        %1219 = vmatpush1.bf16.msra.mxu0 0
        %1220 = vmatprep.mubr.bf16.mxu0 0
        %1221 = vmatmul.mubr.bf16.gmra.mrb[0].mxu0 %v1059
        %v1222 = vpop.f32.mrb[0].mxu0
        %v1223 = vadd.f32 0.0, %v1222
        %v1224 = vpop.f32.mrb[0].mxu0
        %v1225 = vpop.f32.mrb[0].mxu0
        %v1226 = vadd.f32 0.0, %v1225
        %v1227 = vpop.f32.mrb[0].mxu0
        %1228 = vmatprep.mubr.bf16.mxu0 0
        %1229 = vmatmul.mubr.bf16.gmra.mrb[0].mxu0 %v1062
        %v1230 = vpop.f32.mrb[0].mxu0
        %v1231 = vadd.f32 0.0, %v1230
        %v1232 = vpop.f32.mrb[0].mxu0
        %v1233 = vpop.f32.mrb[0].mxu0
        %v1234 = vadd.f32 0.0, %v1233
        %v1235 = vpop.f32.mrb[0].mxu0
        %1236 = vmatprep.mubr.bf16.mxu0 0
        %1237 = vmatmul.mubr.bf16.gmra.mrb[0].mxu0 %v1065
        %v1238 = vpop.f32.mrb[0].mxu0
        %v1239 = vadd.f32 0.0, %v1238
        %v1240 = vpop.f32.mrb[0].mxu0
        %v1241 = vpop.f32.mrb[0].mxu0
        %v1242 = vadd.f32 0.0, %v1241
        %v1243 = vpop.f32.mrb[0].mxu0
        %1244 = vmatprep.mubr.bf16.mxu0 0
        %1245 = vmatmul.mubr.bf16.gmra.mrb[0].mxu0 %v1068
        %v1246 = vpop.f32.mrb[0].mxu0
        %v1247 = vadd.f32 0.0, %v1246
        %v1248 = vpop.f32.mrb[0].mxu0
        %v1249 = vpop.f32.mrb[0].mxu0
        %v1250 = vadd.f32 0.0, %v1249
        %v1251 = vpop.f32.mrb[0].mxu0
        %1252 = vmatprep.mubr.bf16.mxu0 0
        %1253 = vmatmul.mubr.bf16.gmra.mrb[0].mxu0 %v1071
        %v1254 = vpop.f32.mrb[0].mxu0
        %v1255 = vadd.f32 0.0, %v1254
        %v1256 = vpop.f32.mrb[0].mxu0
        %v1257 = vpop.f32.mrb[0].mxu0
        %v1258 = vadd.f32 0.0, %v1257
        %v1259 = vpop.f32.mrb[0].mxu0
        %1260 = vmatprep.mubr.bf16.mxu0 0
        %1261 = vmatmul.mubr.bf16.gmra.mrb[0].mxu0 %v1074
        %v1262 = vpop.f32.mrb[0].mxu0
        %v1263 = vadd.f32 0.0, %v1262
        %v1264 = vpop.f32.mrb[0].mxu0
        %v1265 = vpop.f32.mrb[0].mxu0
        %v1266 = vadd.f32 0.0, %v1265
        %v1267 = vpop.f32.mrb[0].mxu0
        %1268 = vmatprep.mubr.bf16.mxu0 0
        %1269 = vmatmul.mubr.bf16.gmra.mrb[0].mxu0 %v1077
        %v1270 = vpop.f32.mrb[0].mxu0
        %v1271 = vadd.f32 0.0, %v1270
        %v1272 = vpop.f32.mrb[0].mxu0
        %v1273 = vpop.f32.mrb[0].mxu0
        %v1274 = vadd.f32 0.0, %v1273
        %v1275 = vpop.f32.mrb[0].mxu0
        %1276 = vmatprep.mubr.bf16.mxu0 0
        %1277 = vmatmul.mubr.bf16.gmra.mrb[0].mxu0 %v1183
        %v1278 = vpop.f32.mrb[0].mxu0
        %v1279 = vadd.f32 0.0, %v1278
        %v1280 = vpop.f32.mrb[0].mxu0
        %v1281 = vpop.f32.mrb[0].mxu0
        %v1282 = vadd.f32 0.0, %v1281
        %v1283 = vpop.f32.mrb[0].mxu0
        %1284 = vdwg.mxu0
        %v1285 = vadd.f32 %v1117, %v1223
        %v1286 = vadd.f32 %v1120, %v1226
        %v1287 = vadd.f32 %v1125, %v1231
        %v1288 = vadd.f32 %v1128, %v1234
        %v1289 = vadd.f32 %v1133, %v1239
        %v1290 = vadd.f32 %v1136, %v1242
        %v1291 = vadd.f32 %v1141, %v1247
        %v1292 = vadd.f32 %v1144, %v1250
        %v1293 = vadd.f32 %v1149, %v1255
        %v1294 = vadd.f32 %v1152, %v1258
        %v1295 = vadd.f32 %v1157, %v1263
        %v1296 = vadd.f32 %v1160, %v1266
        %v1297 = vadd.f32 %v1165, %v1271
        %v1298 = vadd.f32 %v1168, %v1274
        %v1299 = vadd.f32 %v1173, %v1279
        %v1300 = vadd.f32 %v1176, %v1282
        %s1301 = scalar_lea.vmem [#allocation2], 12
        %v1302 = vld [vmem:[%s1301] sm:$0xf]
        %vm1304 = vcmask 1043456
        %v1305 = vrot.slane 0, 4
        %v1306 = vrot.slane %v354, 4
        %v1307 = vsel %vm1304, %v1305, %v1306
        %v1308 = vrot.slane %v355, 4
        %v1309 = vsel %vm1304, %v1306, %v1308
        %v1310 = vrot.slane %v356, 4
        %v1311 = vsel %vm1304, %v1308, %v1310
        %v1312 = vrot.slane %v357, 4
        %v1313 = vsel %vm1304, %v1310, %v1312
        %v1314 = vrot.slane %v358, 4
        %v1315 = vsel %vm1304, %v1312, %v1314
        %v1316 = vrot.slane %v359, 4
        %v1317 = vsel %vm1304, %v1314, %v1316
        %v1318 = vrot.slane %v360, 4
        %v1319 = vsel %vm1304, %v1316, %v1318
        %v1320 = vrot.slane %v361, 4
        %v1321 = vsel %vm1304, %v1318, %v1320
        %v1323 = vsel %vm891, %v1307, 0
        %v1326 = vsel %vm891, %v1309, 0
        %v1329 = vsel %vm891, %v1311, 0
        %v1332 = vsel %vm891, %v1313, 0
        %v1335 = vsel %vm891, %v1315, 0
        %v1338 = vsel %vm891, %v1317, 0
        %v1341 = vsel %vm891, %v1319, 0
        %v1344 = vsel %vm891, %v1321, 0
        %v1347 = vsel %vm916, %v1302, 0
        %1349 = vmatprep.subr.bf16.mxu0 0
        %1350 = vmatpush1.bf16.msra.mxu0 %v1347
        %1351 = vmatprep.subr.bf16.mxu0 0
        %1352 = vmatpush1.bf16.msra.mxu0 0
        %1353 = vmatprep.subr.bf16.mxu0 0
        %1354 = vmatpush1.bf16.msra.mxu0 0
        %1355 = vmatprep.subr.bf16.mxu0 0
        %1356 = vmatpush1.bf16.msra.mxu0 0
        %1357 = vmatprep.subr.bf16.mxu0 0
        %1358 = vmatpush1.bf16.msra.mxu0 0
        %1359 = vmatprep.subr.bf16.mxu0 0
        %1360 = vmatpush1.bf16.msra.mxu0 0
        %1361 = vmatprep.subr.bf16.mxu0 0
        %1362 = vmatpush1.bf16.msra.mxu0 0
        %1363 = vmatprep.subr.bf16.mxu0 0
        %1364 = vmatpush1.bf16.msra.mxu0 0
        %1365 = vmatprep.subr.bf16.mxu0 0
        %1366 = vmatpush1.bf16.msra.mxu0 0
        %1367 = vmatprep.subr.bf16.mxu0 0
        %1368 = vmatpush1.bf16.msra.mxu0 0
        %1369 = vmatprep.subr.bf16.mxu0 0
        %1370 = vmatpush1.bf16.msra.mxu0 0
        %1371 = vmatprep.subr.bf16.mxu0 0
        %1372 = vmatpush1.bf16.msra.mxu0 0
        %1373 = vmatprep.subr.bf16.mxu0 0
        %1374 = vmatpush1.bf16.msra.mxu0 0
        %1375 = vmatprep.subr.bf16.mxu0 0
        %1376 = vmatpush1.bf16.msra.mxu0 0
        %1377 = vmatprep.subr.bf16.mxu0 0
        %1378 = vmatpush1.bf16.msra.mxu0 0
        %1379 = vmatprep.subr.bf16.mxu0 0
        %1380 = vmatpush1.bf16.msra.mxu0 0
        %1381 = vmatprep.mubr.bf16.mxu0 0
        %1382 = vmatmul.mubr.bf16.gmra.mrb[0].mxu0 %v1323
        %v1383 = vpop.f32.mrb[0].mxu0
        %v1384 = vadd.f32 0.0, %v1383
        %v1385 = vpop.f32.mrb[0].mxu0
        %v1386 = vpop.f32.mrb[0].mxu0
        %v1387 = vadd.f32 0.0, %v1386
        %v1388 = vpop.f32.mrb[0].mxu0
        %1389 = vmatprep.mubr.bf16.mxu0 0
        %1390 = vmatmul.mubr.bf16.gmra.mrb[0].mxu0 %v1326
        %v1391 = vpop.f32.mrb[0].mxu0
        %v1392 = vadd.f32 0.0, %v1391
        %v1393 = vpop.f32.mrb[0].mxu0
        %v1394 = vpop.f32.mrb[0].mxu0
        %v1395 = vadd.f32 0.0, %v1394
        %v1396 = vpop.f32.mrb[0].mxu0
        %1397 = vmatprep.mubr.bf16.mxu0 0
        %1398 = vmatmul.mubr.bf16.gmra.mrb[0].mxu0 %v1329
        %v1399 = vpop.f32.mrb[0].mxu0
        %v1400 = vadd.f32 0.0, %v1399
        %v1401 = vpop.f32.mrb[0].mxu0
        %v1402 = vpop.f32.mrb[0].mxu0
        %v1403 = vadd.f32 0.0, %v1402
        %v1404 = vpop.f32.mrb[0].mxu0
        %1405 = vmatprep.mubr.bf16.mxu0 0
        %1406 = vmatmul.mubr.bf16.gmra.mrb[0].mxu0 %v1332
        %v1407 = vpop.f32.mrb[0].mxu0
        %v1408 = vadd.f32 0.0, %v1407
        %v1409 = vpop.f32.mrb[0].mxu0
        %v1410 = vpop.f32.mrb[0].mxu0
        %v1411 = vadd.f32 0.0, %v1410
        %v1412 = vpop.f32.mrb[0].mxu0
        %1413 = vmatprep.mubr.bf16.mxu0 0
        %1414 = vmatmul.mubr.bf16.gmra.mrb[0].mxu0 %v1335
        %v1415 = vpop.f32.mrb[0].mxu0
        %v1416 = vadd.f32 0.0, %v1415
        %v1417 = vpop.f32.mrb[0].mxu0
        %v1418 = vpop.f32.mrb[0].mxu0
        %v1419 = vadd.f32 0.0, %v1418
        %v1420 = vpop.f32.mrb[0].mxu0
        %1421 = vmatprep.mubr.bf16.mxu0 0
        %1422 = vmatmul.mubr.bf16.gmra.mrb[0].mxu0 %v1338
        %v1423 = vpop.f32.mrb[0].mxu0
        %v1424 = vadd.f32 0.0, %v1423
        %v1425 = vpop.f32.mrb[0].mxu0
        %v1426 = vpop.f32.mrb[0].mxu0
        %v1427 = vadd.f32 0.0, %v1426
        %v1428 = vpop.f32.mrb[0].mxu0
        %1429 = vmatprep.mubr.bf16.mxu0 0
        %1430 = vmatmul.mubr.bf16.gmra.mrb[0].mxu0 %v1341
        %v1431 = vpop.f32.mrb[0].mxu0
        %v1432 = vadd.f32 0.0, %v1431
        %v1433 = vpop.f32.mrb[0].mxu0
        %v1434 = vpop.f32.mrb[0].mxu0
        %v1435 = vadd.f32 0.0, %v1434
        %v1436 = vpop.f32.mrb[0].mxu0
        %1437 = vmatprep.mubr.bf16.mxu0 0
        %1438 = vmatmul.mubr.bf16.gmra.mrb[0].mxu0 %v1344
        %v1439 = vpop.f32.mrb[0].mxu0
        %v1440 = vadd.f32 0.0, %v1439
        %v1441 = vpop.f32.mrb[0].mxu0
        %v1442 = vpop.f32.mrb[0].mxu0
        %v1443 = vadd.f32 0.0, %v1442
        %v1444 = vpop.f32.mrb[0].mxu0
        %1445 = vdwg.mxu0
        %v1446 = vadd.f32 %v1285, %v1384
        %v1447 = vadd.f32 %v1286, %v1387
        %v1448 = vadd.f32 %v1287, %v1392
        %v1449 = vadd.f32 %v1288, %v1395
        %v1450 = vadd.f32 %v1289, %v1400
        %v1451 = vadd.f32 %v1290, %v1403
        %v1452 = vadd.f32 %v1291, %v1408
        %v1453 = vadd.f32 %v1292, %v1411
        %v1454 = vadd.f32 %v1293, %v1416
        %v1455 = vadd.f32 %v1294, %v1419
        %v1456 = vadd.f32 %v1295, %v1424
        %v1457 = vadd.f32 %v1296, %v1427
        %v1458 = vadd.f32 %v1297, %v1432
        %v1459 = vadd.f32 %v1298, %v1435
        %v1460 = vadd.f32 %v1299, %v1440
        %v1461 = vadd.f32 %v1300, %v1443
        %s1462 = scalar_lea.vmem [#allocation2], 16
        %v1463 = vld [vmem:[%s1462] sm:$0xf]
        %v1465 = vsel %vm891, %v354, 0
        %v1468 = vsel %vm891, %v355, 0
        %v1471 = vsel %vm891, %v356, 0
        %v1474 = vsel %vm891, %v357, 0
        %v1477 = vsel %vm891, %v358, 0
        %v1480 = vsel %vm891, %v359, 0
        %v1483 = vsel %vm891, %v360, 0
        %v1486 = vsel %vm891, %v361, 0
        %v1489 = vsel %vm916, %v1463, 0
        %1491 = vmatprep.subr.bf16.mxu0 0
        %1492 = vmatpush1.bf16.msra.mxu0 %v1489
        %1493 = vmatprep.subr.bf16.mxu0 0
        %1494 = vmatpush1.bf16.msra.mxu0 0
        %1495 = vmatprep.subr.bf16.mxu0 0
        %1496 = vmatpush1.bf16.msra.mxu0 0
        %1497 = vmatprep.subr.bf16.mxu0 0
        %1498 = vmatpush1.bf16.msra.mxu0 0
        %1499 = vmatprep.subr.bf16.mxu0 0
        %1500 = vmatpush1.bf16.msra.mxu0 0
        %1501 = vmatprep.subr.bf16.mxu0 0
        %1502 = vmatpush1.bf16.msra.mxu0 0
        %1503 = vmatprep.subr.bf16.mxu0 0
        %1504 = vmatpush1.bf16.msra.mxu0 0
        %1505 = vmatprep.subr.bf16.mxu0 0
        %1506 = vmatpush1.bf16.msra.mxu0 0
        %1507 = vmatprep.subr.bf16.mxu0 0
        %1508 = vmatpush1.bf16.msra.mxu0 0
        %1509 = vmatprep.subr.bf16.mxu0 0
        %1510 = vmatpush1.bf16.msra.mxu0 0
        %1511 = vmatprep.subr.bf16.mxu0 0
        %1512 = vmatpush1.bf16.msra.mxu0 0
        %1513 = vmatprep.subr.bf16.mxu0 0
        %1514 = vmatpush1.bf16.msra.mxu0 0
        %1515 = vmatprep.subr.bf16.mxu0 0
        %1516 = vmatpush1.bf16.msra.mxu0 0
        %1517 = vmatprep.subr.bf16.mxu0 0
        %1518 = vmatpush1.bf16.msra.mxu0 0
        %1519 = vmatprep.subr.bf16.mxu0 0
        %1520 = vmatpush1.bf16.msra.mxu0 0
        %1521 = vmatprep.subr.bf16.mxu0 0
        %1522 = vmatpush1.bf16.msra.mxu0 0
        %1523 = vmatprep.mubr.bf16.mxu0 0
        %1524 = vmatmul.mubr.bf16.gmra.mrb[0].mxu0 %v1465
        %v1525 = vpop.f32.mrb[0].mxu0
        %v1526 = vadd.f32 0.0, %v1525
        %v1527 = vpop.f32.mrb[0].mxu0
        %v1528 = vpop.f32.mrb[0].mxu0
        %v1529 = vadd.f32 0.0, %v1528
        %v1530 = vpop.f32.mrb[0].mxu0
        %1531 = vmatprep.mubr.bf16.mxu0 0
        %1532 = vmatmul.mubr.bf16.gmra.mrb[0].mxu0 %v1468
        %v1533 = vpop.f32.mrb[0].mxu0
        %v1534 = vadd.f32 0.0, %v1533
        %v1535 = vpop.f32.mrb[0].mxu0
        %v1536 = vpop.f32.mrb[0].mxu0
        %v1537 = vadd.f32 0.0, %v1536
        %v1538 = vpop.f32.mrb[0].mxu0
        %1539 = vmatprep.mubr.bf16.mxu0 0
        %1540 = vmatmul.mubr.bf16.gmra.mrb[0].mxu0 %v1471
        %v1541 = vpop.f32.mrb[0].mxu0
        %v1542 = vadd.f32 0.0, %v1541
        %v1543 = vpop.f32.mrb[0].mxu0
        %v1544 = vpop.f32.mrb[0].mxu0
        %v1545 = vadd.f32 0.0, %v1544
        %v1546 = vpop.f32.mrb[0].mxu0
        %1547 = vmatprep.mubr.bf16.mxu0 0
        %1548 = vmatmul.mubr.bf16.gmra.mrb[0].mxu0 %v1474
        %v1549 = vpop.f32.mrb[0].mxu0
        %v1550 = vadd.f32 0.0, %v1549
        %v1551 = vpop.f32.mrb[0].mxu0
        %v1552 = vpop.f32.mrb[0].mxu0
        %v1553 = vadd.f32 0.0, %v1552
        %v1554 = vpop.f32.mrb[0].mxu0
        %1555 = vmatprep.mubr.bf16.mxu0 0
        %1556 = vmatmul.mubr.bf16.gmra.mrb[0].mxu0 %v1477
        %v1557 = vpop.f32.mrb[0].mxu0
        %v1558 = vadd.f32 0.0, %v1557
        %v1559 = vpop.f32.mrb[0].mxu0
        %v1560 = vpop.f32.mrb[0].mxu0
        %v1561 = vadd.f32 0.0, %v1560
        %v1562 = vpop.f32.mrb[0].mxu0
        %1563 = vmatprep.mubr.bf16.mxu0 0
        %1564 = vmatmul.mubr.bf16.gmra.mrb[0].mxu0 %v1480
        %v1565 = vpop.f32.mrb[0].mxu0
        %v1566 = vadd.f32 0.0, %v1565
        %v1567 = vpop.f32.mrb[0].mxu0
        %v1568 = vpop.f32.mrb[0].mxu0
        %v1569 = vadd.f32 0.0, %v1568
        %v1570 = vpop.f32.mrb[0].mxu0
        %1571 = vmatprep.mubr.bf16.mxu0 0
        %1572 = vmatmul.mubr.bf16.gmra.mrb[0].mxu0 %v1483
        %v1573 = vpop.f32.mrb[0].mxu0
        %v1574 = vadd.f32 0.0, %v1573
        %v1575 = vpop.f32.mrb[0].mxu0
        %v1576 = vpop.f32.mrb[0].mxu0
        %v1577 = vadd.f32 0.0, %v1576
        %v1578 = vpop.f32.mrb[0].mxu0
        %1579 = vmatprep.mubr.bf16.mxu0 0
        %1580 = vmatmul.mubr.bf16.gmra.mrb[0].mxu0 %v1486
        %v1581 = vpop.f32.mrb[0].mxu0
        %v1582 = vadd.f32 0.0, %v1581
        %v1583 = vpop.f32.mrb[0].mxu0
        %v1584 = vpop.f32.mrb[0].mxu0
        %v1585 = vadd.f32 0.0, %v1584
        %v1586 = vpop.f32.mrb[0].mxu0
        %1587 = vdwg.mxu0
        %v1588 = vadd.f32 %v1446, %v1526
        %v1589 = vadd.f32 %v1447, %v1529
        %v1590 = vadd.f32 %v1448, %v1534
        %v1591 = vadd.f32 %v1449, %v1537
        %v1592 = vadd.f32 %v1450, %v1542
        %v1593 = vadd.f32 %v1451, %v1545
        %v1594 = vadd.f32 %v1452, %v1550
        %v1595 = vadd.f32 %v1453, %v1553
        %v1596 = vadd.f32 %v1454, %v1558
        %v1597 = vadd.f32 %v1455, %v1561
        %v1598 = vadd.f32 %v1456, %v1566
        %v1599 = vadd.f32 %v1457, %v1569
        %v1600 = vadd.f32 %v1458, %v1574
        %v1601 = vadd.f32 %v1459, %v1577
        %v1602 = vadd.f32 %v1460, %v1582
        %v1603 = vadd.f32 %v1461, %v1585
        %s1604 = scalar_lea.vmem [#allocation2], 20
        %v1605 = vld [vmem:[%s1604] sm:$0xf]
        %v1606 = vsel %vm1304, %v1320, %v1305
        %v1608 = vsel %vm891, %v1606, 0
        %v1611 = vsel %vm916, %v1605, 0
        %1613 = vmatprep.subr.bf16.mxu0 0
        %1614 = vmatpush1.bf16.msra.mxu0 %v1611
        %1615 = vmatprep.subr.bf16.mxu0 0
        %1616 = vmatpush1.bf16.msra.mxu0 0
        %1617 = vmatprep.subr.bf16.mxu0 0
        %1618 = vmatpush1.bf16.msra.mxu0 0
        %1619 = vmatprep.subr.bf16.mxu0 0
        %1620 = vmatpush1.bf16.msra.mxu0 0
        %1621 = vmatprep.subr.bf16.mxu0 0
        %1622 = vmatpush1.bf16.msra.mxu0 0
        %1623 = vmatprep.subr.bf16.mxu0 0
        %1624 = vmatpush1.bf16.msra.mxu0 0
        %1625 = vmatprep.subr.bf16.mxu0 0
        %1626 = vmatpush1.bf16.msra.mxu0 0
        %1627 = vmatprep.subr.bf16.mxu0 0
        %1628 = vmatpush1.bf16.msra.mxu0 0
        %1629 = vmatprep.subr.bf16.mxu0 0
        %1630 = vmatpush1.bf16.msra.mxu0 0
        %1631 = vmatprep.subr.bf16.mxu0 0
        %1632 = vmatpush1.bf16.msra.mxu0 0
        %1633 = vmatprep.subr.bf16.mxu0 0
        %1634 = vmatpush1.bf16.msra.mxu0 0
        %1635 = vmatprep.subr.bf16.mxu0 0
        %1636 = vmatpush1.bf16.msra.mxu0 0
        %1637 = vmatprep.subr.bf16.mxu0 0
        %1638 = vmatpush1.bf16.msra.mxu0 0
        %1639 = vmatprep.subr.bf16.mxu0 0
        %1640 = vmatpush1.bf16.msra.mxu0 0
        %1641 = vmatprep.subr.bf16.mxu0 0
        %1642 = vmatpush1.bf16.msra.mxu0 0
        %1643 = vmatprep.subr.bf16.mxu0 0
        %1644 = vmatpush1.bf16.msra.mxu0 0
        %1645 = vmatprep.mubr.bf16.mxu0 0
        %1646 = vmatmul.mubr.bf16.gmra.mrb[0].mxu0 %v1326
        %v1647 = vpop.f32.mrb[0].mxu0
        %v1648 = vadd.f32 0.0, %v1647
        %v1649 = vpop.f32.mrb[0].mxu0
        %v1650 = vpop.f32.mrb[0].mxu0
        %v1651 = vadd.f32 0.0, %v1650
        %v1652 = vpop.f32.mrb[0].mxu0
        %1653 = vmatprep.mubr.bf16.mxu0 0
        %1654 = vmatmul.mubr.bf16.gmra.mrb[0].mxu0 %v1329
        %v1655 = vpop.f32.mrb[0].mxu0
        %v1656 = vadd.f32 0.0, %v1655
        %v1657 = vpop.f32.mrb[0].mxu0
        %v1658 = vpop.f32.mrb[0].mxu0
        %v1659 = vadd.f32 0.0, %v1658
        %v1660 = vpop.f32.mrb[0].mxu0
        %1661 = vmatprep.mubr.bf16.mxu0 0
        %1662 = vmatmul.mubr.bf16.gmra.mrb[0].mxu0 %v1332
        %v1663 = vpop.f32.mrb[0].mxu0
        %v1664 = vadd.f32 0.0, %v1663
        %v1665 = vpop.f32.mrb[0].mxu0
        %v1666 = vpop.f32.mrb[0].mxu0
        %v1667 = vadd.f32 0.0, %v1666
        %v1668 = vpop.f32.mrb[0].mxu0
        %1669 = vmatprep.mubr.bf16.mxu0 0
        %1670 = vmatmul.mubr.bf16.gmra.mrb[0].mxu0 %v1335
        %v1671 = vpop.f32.mrb[0].mxu0
        %v1672 = vadd.f32 0.0, %v1671
        %v1673 = vpop.f32.mrb[0].mxu0
        %v1674 = vpop.f32.mrb[0].mxu0
        %v1675 = vadd.f32 0.0, %v1674
        %v1676 = vpop.f32.mrb[0].mxu0
        %1677 = vmatprep.mubr.bf16.mxu0 0
        %1678 = vmatmul.mubr.bf16.gmra.mrb[0].mxu0 %v1338
        %v1679 = vpop.f32.mrb[0].mxu0
        %v1680 = vadd.f32 0.0, %v1679
        %v1681 = vpop.f32.mrb[0].mxu0
        %v1682 = vpop.f32.mrb[0].mxu0
        %v1683 = vadd.f32 0.0, %v1682
        %v1684 = vpop.f32.mrb[0].mxu0
        %1685 = vmatprep.mubr.bf16.mxu0 0
        %1686 = vmatmul.mubr.bf16.gmra.mrb[0].mxu0 %v1341
        %v1687 = vpop.f32.mrb[0].mxu0
        %v1688 = vadd.f32 0.0, %v1687
        %v1689 = vpop.f32.mrb[0].mxu0
        %v1690 = vpop.f32.mrb[0].mxu0
        %v1691 = vadd.f32 0.0, %v1690
        %v1692 = vpop.f32.mrb[0].mxu0
        %1693 = vmatprep.mubr.bf16.mxu0 0
        %1694 = vmatmul.mubr.bf16.gmra.mrb[0].mxu0 %v1344
        %v1695 = vpop.f32.mrb[0].mxu0
        %v1696 = vadd.f32 0.0, %v1695
        %v1697 = vpop.f32.mrb[0].mxu0
        %v1698 = vpop.f32.mrb[0].mxu0
        %v1699 = vadd.f32 0.0, %v1698
        %v1700 = vpop.f32.mrb[0].mxu0
        %1701 = vmatprep.mubr.bf16.mxu0 0
        %1702 = vmatmul.mubr.bf16.gmra.mrb[0].mxu0 %v1608
        %v1703 = vpop.f32.mrb[0].mxu0
        %v1704 = vadd.f32 0.0, %v1703
        %v1705 = vpop.f32.mrb[0].mxu0
        %v1706 = vpop.f32.mrb[0].mxu0
        %v1707 = vadd.f32 0.0, %v1706
        %v1708 = vpop.f32.mrb[0].mxu0
        %1709 = vdwg.mxu0
        %v1710 = vadd.f32 %v1588, %v1648
        %v1711 = vadd.f32 %v1589, %v1651
        %v1712 = vadd.f32 %v1590, %v1656
        %v1713 = vadd.f32 %v1591, %v1659
        %v1714 = vadd.f32 %v1592, %v1664
        %v1715 = vadd.f32 %v1593, %v1667
        %v1716 = vadd.f32 %v1594, %v1672
        %v1717 = vadd.f32 %v1595, %v1675
        %v1718 = vadd.f32 %v1596, %v1680
        %v1719 = vadd.f32 %v1597, %v1683
        %v1720 = vadd.f32 %v1598, %v1688
        %v1721 = vadd.f32 %v1599, %v1691
        %v1722 = vadd.f32 %v1600, %v1696
        %v1723 = vadd.f32 %v1601, %v1699
        %v1724 = vadd.f32 %v1602, %v1704
        %v1725 = vadd.f32 %v1603, %v1707
        %vm1726 = vcmp.eq.s32.totalorder %v587, 7
        %vm1727 = vcmp.eq.s32.totalorder %v588, 7
        %vm1728 = vcmp.eq.s32.totalorder %v589, 7
        %vm1729 = vcmp.eq.s32.totalorder %v590, 7
        %vm1730 = vcmp.eq.s32.totalorder %v591, 7
        %vm1731 = vcmp.eq.s32.totalorder %v592, 7
        %vm1732 = vcmp.eq.s32.totalorder %v593, 7
        %vm1733 = vcmp.eq.s32.totalorder %v594, 7
        %vm1734 = vcmp.eq.s32.totalorder %v595, 7
        %vm1735 = vcmp.eq.s32.totalorder %v596, 7
        %vm1736 = vcmp.eq.s32.totalorder %v597, 7
        %vm1737 = vcmp.eq.s32.totalorder %v598, 7
        %vm1738 = vcmp.eq.s32.totalorder %v599, 7
        %vm1739 = vcmp.eq.s32.totalorder %v600, 7
        %vm1740 = vcmp.eq.s32.totalorder %v601, 7
        %vm1741 = vcmp.eq.s32.totalorder %v602, 7
        %vm1742 = vcmp.eq.s32.totalorder %v603, 7
        %vm1743 = vcmp.eq.s32.totalorder %v604, 7
        %v1744 = vsel %vm1726, 1, 0
        %v1745 = vsel %vm1727, 1, 0
        %v1746 = vsel %vm1728, 1, 0
        %v1747 = vsel %vm1729, 1, 0
        %v1748 = vsel %vm1730, 1, 0
        %v1749 = vsel %vm1731, 1, 0
        %v1750 = vsel %vm1732, 1, 0
        %v1751 = vsel %vm1733, 1, 0
        %v1752 = vsel %vm1734, 1, 0
        %v1753 = vsel %vm1735, 1, 0
        %v1754 = vsel %vm1736, 1, 0
        %v1755 = vsel %vm1737, 1, 0
        %v1756 = vsel %vm1738, 1, 0
        %v1757 = vsel %vm1739, 1, 0
        %v1758 = vsel %vm1740, 1, 0
        %v1759 = vsel %vm1741, 1, 0
        %v1760 = vsel %vm1742, 1, 0
        %v1761 = vsel %vm1743, 1, 0
        %vm1762 = vcmp.eq.s32.totalorder %v1744, 1
        %vm1763 = vcmp.eq.s32.totalorder %v1745, 1
        %vm1764 = vcmp.eq.s32.totalorder %v1746, 1
        %vm1765 = vcmp.eq.s32.totalorder %v1747, 1
        %vm1766 = vcmp.eq.s32.totalorder %v1748, 1
        %vm1767 = vcmp.eq.s32.totalorder %v1749, 1
        %vm1768 = vcmp.eq.s32.totalorder %v1750, 1
        %vm1769 = vcmp.eq.s32.totalorder %v1751, 1
        %vm1770 = vcmp.eq.s32.totalorder %v1752, 1
        %vm1771 = vcmp.eq.s32.totalorder %v1753, 1
        %vm1772 = vcmp.eq.s32.totalorder %v1754, 1
        %vm1773 = vcmp.eq.s32.totalorder %v1755, 1
        %vm1774 = vcmp.eq.s32.totalorder %v1756, 1
        %vm1775 = vcmp.eq.s32.totalorder %v1757, 1
        %vm1776 = vcmp.eq.s32.totalorder %v1758, 1
        %vm1777 = vcmp.eq.s32.totalorder %v1759, 1
        %vm1778 = vcmp.eq.s32.totalorder %v1760, 1
        %vm1779 = vcmp.eq.s32.totalorder %v1761, 1
        %vm1780 = vmpackc.low %vm1762, %vm1762
        %vm1781 = vmpackc.low %vm1763, %vm1763
        %vm1782 = vmpackc.low %vm1764, %vm1764
        %vm1783 = vmpackc.low %vm1765, %vm1765
        %vm1784 = vmpackc.low %vm1766, %vm1766
        %vm1785 = vmpackc.low %vm1767, %vm1767
        %vm1786 = vmpackc.low %vm1768, %vm1768
        %vm1787 = vmpackc.low %vm1769, %vm1769
        %vm1788 = vmpackc.low %vm1770, %vm1770
        %vm1789 = vmpackc.low %vm1771, %vm1771
        %vm1790 = vmpackc.low %vm1772, %vm1772
        %vm1791 = vmpackc.low %vm1773, %vm1773
        %vm1792 = vmpackc.low %vm1774, %vm1774
        %vm1793 = vmpackc.low %vm1775, %vm1775
        %vm1794 = vmpackc.low %vm1776, %vm1776
        %vm1795 = vmpackc.low %vm1777, %vm1777
        %vm1796 = vmpackc.low %vm1778, %vm1778
        %vm1797 = vmpackc.low %vm1779, %vm1779
        %v1798 = vsel %vm1780, 65537, 0
        %v1799 = vsel %vm1781, 65537, 0
        %v1800 = vsel %vm1782, 65537, 0
        %v1801 = vsel %vm1783, 65537, 0
        %v1802 = vsel %vm1784, 65537, 0
        %v1803 = vsel %vm1785, 65537, 0
        %v1804 = vsel %vm1786, 65537, 0
        %v1805 = vsel %vm1787, 65537, 0
        %v1806 = vsel %vm1788, 65537, 0
        %v1807 = vsel %vm1789, 65537, 0
        %v1808 = vsel %vm1790, 65537, 0
        %v1809 = vsel %vm1791, 65537, 0
        %v1810 = vsel %vm1792, 65537, 0
        %v1811 = vsel %vm1793, 65537, 0
        %v1812 = vsel %vm1794, 65537, 0
        %v1813 = vsel %vm1795, 65537, 0
        %v1814 = vsel %vm1796, 65537, 0
        %v1815 = vsel %vm1797, 65537, 0
        %v1816 = vunpack.c.l.b16 %v1798
        %v1817 = vunpack.c.l.b16 %v1799
        %v1818 = vunpack.c.l.b16 %v1800
        %v1819 = vunpack.c.l.b16 %v1801
        %v1820 = vunpack.c.l.b16 %v1802
        %v1821 = vunpack.c.l.b16 %v1803
        %v1822 = vunpack.c.l.b16 %v1804
        %v1823 = vunpack.c.l.b16 %v1805
        %v1824 = vunpack.c.l.b16 %v1806
        %v1825 = vunpack.c.l.b16 %v1807
        %v1826 = vunpack.c.l.b16 %v1808
        %v1827 = vunpack.c.l.b16 %v1809
        %v1828 = vunpack.c.l.b16 %v1810
        %v1829 = vunpack.c.l.b16 %v1811
        %v1830 = vunpack.c.l.b16 %v1812
        %v1831 = vunpack.c.l.b16 %v1813
        %v1832 = vunpack.c.l.b16 %v1814
        %v1833 = vunpack.c.l.b16 %v1815
        %v1834 = vpack.c.b16 %v1817, %v1816
        %v1835 = vpack.c.b16 %v1819, %v1818
        %v1836 = vpack.c.b16 %v1821, %v1820
        %v1837 = vpack.c.b16 %v1823, %v1822
        %v1838 = vpack.c.b16 %v1825, %v1824
        %v1839 = vpack.c.b16 %v1827, %v1826
        %v1840 = vpack.c.b16 %v1829, %v1828
        %v1841 = vpack.c.b16 %v1831, %v1830
        %v1842 = vpack.c.b16 %v1833, %v1832
        %v1844 = vshrl.u32 %v1834, 16
        %v1846 = vrot.slane %v1844, 3
        %v1847 = vshll.u32 %v1834, 16
        %v1849 = vrot.slane %v1847, 4
        %v1850 = vor.u32 %v1846, %v1849
        %v1852 = vshrl.u32 %v1835, 16
        %v1854 = vrot.slane %v1852, 3
        %v1855 = vshll.u32 %v1835, 16
        %v1857 = vrot.slane %v1855, 4
        %v1858 = vor.u32 %v1854, %v1857
        %v1859 = vsel %vm1017, %v1850, %v1858
        %v1861 = vshrl.u32 %v1836, 16
        %v1863 = vrot.slane %v1861, 3
        %v1864 = vshll.u32 %v1836, 16
        %v1866 = vrot.slane %v1864, 4
        %v1867 = vor.u32 %v1863, %v1866
        %v1868 = vsel %vm1017, %v1858, %v1867
        %v1870 = vshrl.u32 %v1837, 16
        %v1872 = vrot.slane %v1870, 3
        %v1873 = vshll.u32 %v1837, 16
        %v1875 = vrot.slane %v1873, 4
        %v1876 = vor.u32 %v1872, %v1875
        %v1877 = vsel %vm1017, %v1867, %v1876
        %v1879 = vshrl.u32 %v1838, 16
        %v1881 = vrot.slane %v1879, 3
        %v1882 = vshll.u32 %v1838, 16
        %v1884 = vrot.slane %v1882, 4
        %v1885 = vor.u32 %v1881, %v1884
        %v1886 = vsel %vm1017, %v1876, %v1885
        %v1888 = vshrl.u32 %v1839, 16
        %v1890 = vrot.slane %v1888, 3
        %v1891 = vshll.u32 %v1839, 16
        %v1893 = vrot.slane %v1891, 4
        %v1894 = vor.u32 %v1890, %v1893
        %v1895 = vsel %vm1017, %v1885, %v1894
        %v1897 = vshrl.u32 %v1840, 16
        %v1899 = vrot.slane %v1897, 3
        %v1900 = vshll.u32 %v1840, 16
        %v1902 = vrot.slane %v1900, 4
        %v1903 = vor.u32 %v1899, %v1902
        %v1904 = vsel %vm1017, %v1894, %v1903
        %v1906 = vshrl.u32 %v1841, 16
        %v1908 = vrot.slane %v1906, 3
        %v1909 = vshll.u32 %v1841, 16
        %v1911 = vrot.slane %v1909, 4
        %v1912 = vor.u32 %v1908, %v1911
        %v1913 = vsel %vm1017, %v1903, %v1912
        %v1915 = vshrl.u32 %v1842, 16
        %v1917 = vrot.slane %v1915, 3
        %v1918 = vshll.u32 %v1842, 16
        %v1920 = vrot.slane %v1918, 4
        %v1921 = vor.u32 %v1917, %v1920
        %v1922 = vsel %vm1017, %v1912, %v1921
        %vm1923 = vcmp.ne.s16.totalorder %v1859, 0
        %vm1924 = vcmp.ne.s16.totalorder %v1868, 0
        %vm1925 = vcmp.ne.s16.totalorder %v1877, 0
        %vm1926 = vcmp.ne.s16.totalorder %v1886, 0
        %vm1927 = vcmp.ne.s16.totalorder %v1895, 0
        %vm1928 = vcmp.ne.s16.totalorder %v1904, 0
        %vm1929 = vcmp.ne.s16.totalorder %v1913, 0
        %vm1930 = vcmp.ne.s16.totalorder %v1922, 0
        %v1931 = vsel %vm1923, 0, %v354
        %v1932 = vsel %vm1924, 0, %v355
        %v1933 = vsel %vm1925, 0, %v356
        %v1934 = vsel %vm1926, 0, %v357
        %v1935 = vsel %vm1927, 0, %v358
        %v1936 = vsel %vm1928, 0, %v359
        %v1937 = vsel %vm1929, 0, %v360
        %v1938 = vsel %vm1930, 0, %v361
        %s1939 = scalar_lea.vmem [#allocation2], 24
        %v1940 = vld [vmem:[%s1939] sm:$0xf]
        %v1941 = vrot.slane %v824, 4
        %v1942 = vrot.slane %v1019, 5
        %v1943 = vor.u32 %v1941, %v1942
        %v1945 = vshrl.u32 %v1931, 16
        %v1947 = vrot.slane %v1945, 4
        %v1948 = vshll.u32 %v1931, 16
        %v1950 = vrot.slane %v1948, 5
        %v1951 = vor.u32 %v1947, %v1950
        %v1952 = vsel %vm722, %v1943, %v1951
        %v1954 = vshrl.u32 %v1932, 16
        %v1956 = vrot.slane %v1954, 4
        %v1957 = vshll.u32 %v1932, 16
        %v1959 = vrot.slane %v1957, 5
        %v1960 = vor.u32 %v1956, %v1959
        %v1961 = vsel %vm722, %v1951, %v1960
        %v1963 = vshrl.u32 %v1933, 16
        %v1965 = vrot.slane %v1963, 4
        %v1966 = vshll.u32 %v1933, 16
        %v1968 = vrot.slane %v1966, 5
        %v1969 = vor.u32 %v1965, %v1968
        %v1970 = vsel %vm722, %v1960, %v1969
        %v1972 = vshrl.u32 %v1934, 16
        %v1974 = vrot.slane %v1972, 4
        %v1975 = vshll.u32 %v1934, 16
        %v1977 = vrot.slane %v1975, 5
        %v1978 = vor.u32 %v1974, %v1977
        %v1979 = vsel %vm722, %v1969, %v1978
        %v1981 = vshrl.u32 %v1935, 16
        %v1983 = vrot.slane %v1981, 4
        %v1984 = vshll.u32 %v1935, 16
        %v1986 = vrot.slane %v1984, 5
        %v1987 = vor.u32 %v1983, %v1986
        %v1988 = vsel %vm722, %v1978, %v1987
        %v1990 = vshrl.u32 %v1936, 16
        %v1992 = vrot.slane %v1990, 4
        %v1993 = vshll.u32 %v1936, 16
        %v1995 = vrot.slane %v1993, 5
        %v1996 = vor.u32 %v1992, %v1995
        %v1997 = vsel %vm722, %v1987, %v1996
        %v1999 = vshrl.u32 %v1937, 16
        %v2001 = vrot.slane %v1999, 4
        %v2002 = vshll.u32 %v1937, 16
        %v2004 = vrot.slane %v2002, 5
        %v2005 = vor.u32 %v2001, %v2004
        %v2006 = vsel %vm722, %v1996, %v2005
        %v2008 = vshrl.u32 %v1938, 16
        %v2010 = vrot.slane %v2008, 4
        %v2011 = vshll.u32 %v1938, 16
        %v2013 = vrot.slane %v2011, 5
        %v2014 = vor.u32 %v2010, %v2013
        %v2015 = vsel %vm722, %v2005, %v2014
        %v2017 = vsel %vm891, %v1952, 0
        %v2020 = vsel %vm891, %v1961, 0
        %v2023 = vsel %vm891, %v1970, 0
        %v2026 = vsel %vm891, %v1979, 0
        %v2029 = vsel %vm891, %v1988, 0
        %v2032 = vsel %vm891, %v1997, 0
        %v2035 = vsel %vm891, %v2006, 0
        %v2038 = vsel %vm891, %v2015, 0
        %v2041 = vsel %vm916, %v1940, 0
        %2043 = vmatprep.subr.bf16.mxu0 0
        %2044 = vmatpush1.bf16.msra.mxu0 %v2041
        %2045 = vmatprep.subr.bf16.mxu0 0
        %2046 = vmatpush1.bf16.msra.mxu0 0
        %2047 = vmatprep.subr.bf16.mxu0 0
        %2048 = vmatpush1.bf16.msra.mxu0 0
        %2049 = vmatprep.subr.bf16.mxu0 0
        %2050 = vmatpush1.bf16.msra.mxu0 0
        %2051 = vmatprep.subr.bf16.mxu0 0
        %2052 = vmatpush1.bf16.msra.mxu0 0
        %2053 = vmatprep.subr.bf16.mxu0 0
        %2054 = vmatpush1.bf16.msra.mxu0 0
        %2055 = vmatprep.subr.bf16.mxu0 0
        %2056 = vmatpush1.bf16.msra.mxu0 0
        %2057 = vmatprep.subr.bf16.mxu0 0
        %2058 = vmatpush1.bf16.msra.mxu0 0
        %2059 = vmatprep.subr.bf16.mxu0 0
        %2060 = vmatpush1.bf16.msra.mxu0 0
        %2061 = vmatprep.subr.bf16.mxu0 0
        %2062 = vmatpush1.bf16.msra.mxu0 0
        %2063 = vmatprep.subr.bf16.mxu0 0
        %2064 = vmatpush1.bf16.msra.mxu0 0
        %2065 = vmatprep.subr.bf16.mxu0 0
        %2066 = vmatpush1.bf16.msra.mxu0 0
        %2067 = vmatprep.subr.bf16.mxu0 0
        %2068 = vmatpush1.bf16.msra.mxu0 0
        %2069 = vmatprep.subr.bf16.mxu0 0
        %2070 = vmatpush1.bf16.msra.mxu0 0
        %2071 = vmatprep.subr.bf16.mxu0 0
        %2072 = vmatpush1.bf16.msra.mxu0 0
        %2073 = vmatprep.subr.bf16.mxu0 0
        %2074 = vmatpush1.bf16.msra.mxu0 0
        %2075 = vmatprep.mubr.bf16.mxu0 0
        %2076 = vmatmul.mubr.bf16.gmra.mrb[0].mxu0 %v2017
        %v2077 = vpop.f32.mrb[0].mxu0
        %v2078 = vadd.f32 0.0, %v2077
        %v2079 = vpop.f32.mrb[0].mxu0
        %v2080 = vpop.f32.mrb[0].mxu0
        %v2081 = vadd.f32 0.0, %v2080
        %v2082 = vpop.f32.mrb[0].mxu0
        %2083 = vmatprep.mubr.bf16.mxu0 0
        %2084 = vmatmul.mubr.bf16.gmra.mrb[0].mxu0 %v2020
        %v2085 = vpop.f32.mrb[0].mxu0
        %v2086 = vadd.f32 0.0, %v2085
        %v2087 = vpop.f32.mrb[0].mxu0
        %v2088 = vpop.f32.mrb[0].mxu0
        %v2089 = vadd.f32 0.0, %v2088
        %v2090 = vpop.f32.mrb[0].mxu0
        %2091 = vmatprep.mubr.bf16.mxu0 0
        %2092 = vmatmul.mubr.bf16.gmra.mrb[0].mxu0 %v2023
        %v2093 = vpop.f32.mrb[0].mxu0
        %v2094 = vadd.f32 0.0, %v2093
        %v2095 = vpop.f32.mrb[0].mxu0
        %v2096 = vpop.f32.mrb[0].mxu0
        %v2097 = vadd.f32 0.0, %v2096
        %v2098 = vpop.f32.mrb[0].mxu0
        %2099 = vmatprep.mubr.bf16.mxu0 0
        %2100 = vmatmul.mubr.bf16.gmra.mrb[0].mxu0 %v2026
        %v2101 = vpop.f32.mrb[0].mxu0
        %v2102 = vadd.f32 0.0, %v2101
        %v2103 = vpop.f32.mrb[0].mxu0
        %v2104 = vpop.f32.mrb[0].mxu0
        %v2105 = vadd.f32 0.0, %v2104
        %v2106 = vpop.f32.mrb[0].mxu0
        %2107 = vmatprep.mubr.bf16.mxu0 0
        %2108 = vmatmul.mubr.bf16.gmra.mrb[0].mxu0 %v2029
        %v2109 = vpop.f32.mrb[0].mxu0
        %v2110 = vadd.f32 0.0, %v2109
        %v2111 = vpop.f32.mrb[0].mxu0
        %v2112 = vpop.f32.mrb[0].mxu0
        %v2113 = vadd.f32 0.0, %v2112
        %v2114 = vpop.f32.mrb[0].mxu0
        %2115 = vmatprep.mubr.bf16.mxu0 0
        %2116 = vmatmul.mubr.bf16.gmra.mrb[0].mxu0 %v2032
        %v2117 = vpop.f32.mrb[0].mxu0
        %v2118 = vadd.f32 0.0, %v2117
        %v2119 = vpop.f32.mrb[0].mxu0
        %v2120 = vpop.f32.mrb[0].mxu0
        %v2121 = vadd.f32 0.0, %v2120
        %v2122 = vpop.f32.mrb[0].mxu0
        %2123 = vmatprep.mubr.bf16.mxu0 0
        %2124 = vmatmul.mubr.bf16.gmra.mrb[0].mxu0 %v2035
        %v2125 = vpop.f32.mrb[0].mxu0
        %v2126 = vadd.f32 0.0, %v2125
        %v2127 = vpop.f32.mrb[0].mxu0
        %v2128 = vpop.f32.mrb[0].mxu0
        %v2129 = vadd.f32 0.0, %v2128
        %v2130 = vpop.f32.mrb[0].mxu0
        %2131 = vmatprep.mubr.bf16.mxu0 0
        %2132 = vmatmul.mubr.bf16.gmra.mrb[0].mxu0 %v2038
        %v2133 = vpop.f32.mrb[0].mxu0
        %v2134 = vadd.f32 0.0, %v2133
        %v2135 = vpop.f32.mrb[0].mxu0
        %v2136 = vpop.f32.mrb[0].mxu0
        %v2137 = vadd.f32 0.0, %v2136
        %v2138 = vpop.f32.mrb[0].mxu0
        %2139 = vdwg.mxu0
        %v2140 = vadd.f32 %v1710, %v2078
        %v2141 = vadd.f32 %v1711, %v2081
        %v2142 = vadd.f32 %v1712, %v2086
        %v2143 = vadd.f32 %v1713, %v2089
        %v2144 = vadd.f32 %v1714, %v2094
        %v2145 = vadd.f32 %v1715, %v2097
        %v2146 = vadd.f32 %v1716, %v2102
        %v2147 = vadd.f32 %v1717, %v2105
        %v2148 = vadd.f32 %v1718, %v2110
        %v2149 = vadd.f32 %v1719, %v2113
        %v2150 = vadd.f32 %v1720, %v2118
        %v2151 = vadd.f32 %v1721, %v2121
        %v2152 = vadd.f32 %v1722, %v2126
        %v2153 = vadd.f32 %v1723, %v2129
        %v2154 = vadd.f32 %v1724, %v2134
        %v2155 = vadd.f32 %v1725, %v2137
        %s2156 = scalar_lea.vmem [#allocation2], 28
        %v2157 = vld [vmem:[%s2156] sm:$0xf]
        %vm2158 = vsmask.f32 7424
        %v2159 = vrot.slane %v1948, 1
        %v2160 = vor.u32 %v1945, %v2159
        %v2161 = vrot.slane %v1957, 1
        %v2162 = vsel %vm2158, %v2160, %v2161
        %v2163 = vor.u32 %v1954, %v2161
        %v2164 = vrot.slane %v1966, 1
        %v2165 = vsel %vm2158, %v2163, %v2164
        %v2166 = vor.u32 %v1963, %v2164
        %v2167 = vrot.slane %v1975, 1
        %v2168 = vsel %vm2158, %v2166, %v2167
        %v2169 = vor.u32 %v1972, %v2167
        %v2170 = vrot.slane %v1984, 1
        %v2171 = vsel %vm2158, %v2169, %v2170
        %v2172 = vor.u32 %v1981, %v2170
        %v2173 = vrot.slane %v1993, 1
        %v2174 = vsel %vm2158, %v2172, %v2173
        %v2175 = vor.u32 %v1990, %v2173
        %v2176 = vrot.slane %v2002, 1
        %v2177 = vsel %vm2158, %v2175, %v2176
        %v2178 = vor.u32 %v1999, %v2176
        %v2179 = vrot.slane %v2011, 1
        %v2180 = vsel %vm2158, %v2178, %v2179
        %v2181 = vor.u32 %v2008, %v2179
        %v2182 = vrot.slane %v1019, 1
        %v2183 = vsel %vm2158, %v2181, %v2182
        %v2185 = vsel %vm891, %v2162, 0
        %v2188 = vsel %vm891, %v2165, 0
        %v2191 = vsel %vm891, %v2168, 0
        %v2194 = vsel %vm891, %v2171, 0
        %v2197 = vsel %vm891, %v2174, 0
        %v2200 = vsel %vm891, %v2177, 0
        %v2203 = vsel %vm891, %v2180, 0
        %v2206 = vsel %vm891, %v2183, 0
        %v2209 = vsel %vm916, %v2157, 0
        %2211 = vmatprep.subr.bf16.mxu0 0
        %2212 = vmatpush1.bf16.msra.mxu0 %v2209
        %2213 = vmatprep.subr.bf16.mxu0 0
        %2214 = vmatpush1.bf16.msra.mxu0 0
        %2215 = vmatprep.subr.bf16.mxu0 0
        %2216 = vmatpush1.bf16.msra.mxu0 0
        %2217 = vmatprep.subr.bf16.mxu0 0
        %2218 = vmatpush1.bf16.msra.mxu0 0
        %2219 = vmatprep.subr.bf16.mxu0 0
        %2220 = vmatpush1.bf16.msra.mxu0 0
        %2221 = vmatprep.subr.bf16.mxu0 0
        %2222 = vmatpush1.bf16.msra.mxu0 0
        %2223 = vmatprep.subr.bf16.mxu0 0
        %2224 = vmatpush1.bf16.msra.mxu0 0
        %2225 = vmatprep.subr.bf16.mxu0 0
        %2226 = vmatpush1.bf16.msra.mxu0 0
        %2227 = vmatprep.subr.bf16.mxu0 0
        %2228 = vmatpush1.bf16.msra.mxu0 0
        %2229 = vmatprep.subr.bf16.mxu0 0
        %2230 = vmatpush1.bf16.msra.mxu0 0
        %2231 = vmatprep.subr.bf16.mxu0 0
        %2232 = vmatpush1.bf16.msra.mxu0 0
        %2233 = vmatprep.subr.bf16.mxu0 0
        %2234 = vmatpush1.bf16.msra.mxu0 0
        %2235 = vmatprep.subr.bf16.mxu0 0
        %2236 = vmatpush1.bf16.msra.mxu0 0
        %2237 = vmatprep.subr.bf16.mxu0 0
        %2238 = vmatpush1.bf16.msra.mxu0 0
        %2239 = vmatprep.subr.bf16.mxu0 0
        %2240 = vmatpush1.bf16.msra.mxu0 0
        %2241 = vmatprep.subr.bf16.mxu0 0
        %2242 = vmatpush1.bf16.msra.mxu0 0
        %2243 = vmatprep.mubr.bf16.mxu0 0
        %2244 = vmatmul.mubr.bf16.gmra.mrb[0].mxu0 %v2185
        %v2245 = vpop.f32.mrb[0].mxu0
        %v2246 = vadd.f32 0.0, %v2245
        %v2247 = vpop.f32.mrb[0].mxu0
        %v2248 = vpop.f32.mrb[0].mxu0
        %v2249 = vadd.f32 0.0, %v2248
        %v2250 = vpop.f32.mrb[0].mxu0
        %2251 = vmatprep.mubr.bf16.mxu0 0
        %2252 = vmatmul.mubr.bf16.gmra.mrb[0].mxu0 %v2188
        %v2253 = vpop.f32.mrb[0].mxu0
        %v2254 = vadd.f32 0.0, %v2253
        %v2255 = vpop.f32.mrb[0].mxu0
        %v2256 = vpop.f32.mrb[0].mxu0
        %v2257 = vadd.f32 0.0, %v2256
        %v2258 = vpop.f32.mrb[0].mxu0
        %2259 = vmatprep.mubr.bf16.mxu0 0
        %2260 = vmatmul.mubr.bf16.gmra.mrb[0].mxu0 %v2191
        %v2261 = vpop.f32.mrb[0].mxu0
        %v2262 = vadd.f32 0.0, %v2261
        %v2263 = vpop.f32.mrb[0].mxu0
        %v2264 = vpop.f32.mrb[0].mxu0
        %v2265 = vadd.f32 0.0, %v2264
        %v2266 = vpop.f32.mrb[0].mxu0
        %2267 = vmatprep.mubr.bf16.mxu0 0
        %2268 = vmatmul.mubr.bf16.gmra.mrb[0].mxu0 %v2194
        %v2269 = vpop.f32.mrb[0].mxu0
        %v2270 = vadd.f32 0.0, %v2269
        %v2271 = vpop.f32.mrb[0].mxu0
        %v2272 = vpop.f32.mrb[0].mxu0
        %v2273 = vadd.f32 0.0, %v2272
        %v2274 = vpop.f32.mrb[0].mxu0
        %2275 = vmatprep.mubr.bf16.mxu0 0
        %2276 = vmatmul.mubr.bf16.gmra.mrb[0].mxu0 %v2197
        %v2277 = vpop.f32.mrb[0].mxu0
        %v2278 = vadd.f32 0.0, %v2277
        %v2279 = vpop.f32.mrb[0].mxu0
        %v2280 = vpop.f32.mrb[0].mxu0
        %v2281 = vadd.f32 0.0, %v2280
        %v2282 = vpop.f32.mrb[0].mxu0
        %2283 = vmatprep.mubr.bf16.mxu0 0
        %2284 = vmatmul.mubr.bf16.gmra.mrb[0].mxu0 %v2200
        %v2285 = vpop.f32.mrb[0].mxu0
        %v2286 = vadd.f32 0.0, %v2285
        %v2287 = vpop.f32.mrb[0].mxu0
        %v2288 = vpop.f32.mrb[0].mxu0
        %v2289 = vadd.f32 0.0, %v2288
        %v2290 = vpop.f32.mrb[0].mxu0
        %2291 = vmatprep.mubr.bf16.mxu0 0
        %2292 = vmatmul.mubr.bf16.gmra.mrb[0].mxu0 %v2203
        %v2293 = vpop.f32.mrb[0].mxu0
        %v2294 = vadd.f32 0.0, %v2293
        %v2295 = vpop.f32.mrb[0].mxu0
        %v2296 = vpop.f32.mrb[0].mxu0
        %v2297 = vadd.f32 0.0, %v2296
        %v2298 = vpop.f32.mrb[0].mxu0
        %2299 = vmatprep.mubr.bf16.mxu0 0
        %2300 = vmatmul.mubr.bf16.gmra.mrb[0].mxu0 %v2206
        %v2301 = vpop.f32.mrb[0].mxu0
        %v2302 = vadd.f32 0.0, %v2301
        %v2303 = vpop.f32.mrb[0].mxu0
        %v2304 = vpop.f32.mrb[0].mxu0
        %v2305 = vadd.f32 0.0, %v2304
        %v2306 = vpop.f32.mrb[0].mxu0
        %2307 = vdwg.mxu0
        %v2308 = vadd.f32 %v2140, %v2246
        %v2309 = vadd.f32 %v2141, %v2249
        %v2310 = vadd.f32 %v2142, %v2254
        %v2311 = vadd.f32 %v2143, %v2257
        %v2312 = vadd.f32 %v2144, %v2262
        %v2313 = vadd.f32 %v2145, %v2265
        %v2314 = vadd.f32 %v2146, %v2270
        %v2315 = vadd.f32 %v2147, %v2273
        %v2316 = vadd.f32 %v2148, %v2278
        %v2317 = vadd.f32 %v2149, %v2281
        %v2318 = vadd.f32 %v2150, %v2286
        %v2319 = vadd.f32 %v2151, %v2289
        %v2320 = vadd.f32 %v2152, %v2294
        %v2321 = vadd.f32 %v2153, %v2297
        %v2322 = vadd.f32 %v2154, %v2302
        %v2323 = vadd.f32 %v2155, %v2305
        %s2324 = scalar_lea.vmem [#allocation2], 32
        %v2325 = vld [vmem:[%s2324] sm:$0xf]
        %v2326 = vsel %vm722, %v2014, %v1943
        %v2328 = vsel %vm891, %v2326, 0
        %v2331 = vsel %vm916, %v2325, 0
        %2333 = vmatprep.subr.bf16.mxu0 0
        %2334 = vmatpush1.bf16.msra.mxu0 %v2331
        %2335 = vmatprep.subr.bf16.mxu0 0
        %2336 = vmatpush1.bf16.msra.mxu0 0
        %2337 = vmatprep.subr.bf16.mxu0 0
        %2338 = vmatpush1.bf16.msra.mxu0 0
        %2339 = vmatprep.subr.bf16.mxu0 0
        %2340 = vmatpush1.bf16.msra.mxu0 0
        %2341 = vmatprep.subr.bf16.mxu0 0
        %2342 = vmatpush1.bf16.msra.mxu0 0
        %2343 = vmatprep.subr.bf16.mxu0 0
        %2344 = vmatpush1.bf16.msra.mxu0 0
        %2345 = vmatprep.subr.bf16.mxu0 0
        %2346 = vmatpush1.bf16.msra.mxu0 0
        %2347 = vmatprep.subr.bf16.mxu0 0
        %2348 = vmatpush1.bf16.msra.mxu0 0
        %2349 = vmatprep.subr.bf16.mxu0 0
        %2350 = vmatpush1.bf16.msra.mxu0 0
        %2351 = vmatprep.subr.bf16.mxu0 0
        %2352 = vmatpush1.bf16.msra.mxu0 0
        %2353 = vmatprep.subr.bf16.mxu0 0
        %2354 = vmatpush1.bf16.msra.mxu0 0
        %2355 = vmatprep.subr.bf16.mxu0 0
        %2356 = vmatpush1.bf16.msra.mxu0 0
        %2357 = vmatprep.subr.bf16.mxu0 0
        %2358 = vmatpush1.bf16.msra.mxu0 0
        %2359 = vmatprep.subr.bf16.mxu0 0
        %2360 = vmatpush1.bf16.msra.mxu0 0
        %2361 = vmatprep.subr.bf16.mxu0 0
        %2362 = vmatpush1.bf16.msra.mxu0 0
        %2363 = vmatprep.subr.bf16.mxu0 0
        %2364 = vmatpush1.bf16.msra.mxu0 0
        %2365 = vmatprep.mubr.bf16.mxu0 0
        %2366 = vmatmul.mubr.bf16.gmra.mrb[0].mxu0 %v2020
        %v2367 = vpop.f32.mrb[0].mxu0
        %v2368 = vadd.f32 0.0, %v2367
        %v2369 = vpop.f32.mrb[0].mxu0
        %v2370 = vpop.f32.mrb[0].mxu0
        %v2371 = vadd.f32 0.0, %v2370
        %v2372 = vpop.f32.mrb[0].mxu0
        %2373 = vmatprep.mubr.bf16.mxu0 0
        %2374 = vmatmul.mubr.bf16.gmra.mrb[0].mxu0 %v2023
        %v2375 = vpop.f32.mrb[0].mxu0
        %v2376 = vadd.f32 0.0, %v2375
        %v2377 = vpop.f32.mrb[0].mxu0
        %v2378 = vpop.f32.mrb[0].mxu0
        %v2379 = vadd.f32 0.0, %v2378
        %v2380 = vpop.f32.mrb[0].mxu0
        %2381 = vmatprep.mubr.bf16.mxu0 0
        %2382 = vmatmul.mubr.bf16.gmra.mrb[0].mxu0 %v2026
        %v2383 = vpop.f32.mrb[0].mxu0
        %v2384 = vadd.f32 0.0, %v2383
        %v2385 = vpop.f32.mrb[0].mxu0
        %v2386 = vpop.f32.mrb[0].mxu0
        %v2387 = vadd.f32 0.0, %v2386
        %v2388 = vpop.f32.mrb[0].mxu0
        %2389 = vmatprep.mubr.bf16.mxu0 0
        %2390 = vmatmul.mubr.bf16.gmra.mrb[0].mxu0 %v2029
        %v2391 = vpop.f32.mrb[0].mxu0
        %v2392 = vadd.f32 0.0, %v2391
        %v2393 = vpop.f32.mrb[0].mxu0
        %v2394 = vpop.f32.mrb[0].mxu0
        %v2395 = vadd.f32 0.0, %v2394
        %v2396 = vpop.f32.mrb[0].mxu0
        %2397 = vmatprep.mubr.bf16.mxu0 0
        %2398 = vmatmul.mubr.bf16.gmra.mrb[0].mxu0 %v2032
        %v2399 = vpop.f32.mrb[0].mxu0
        %v2400 = vadd.f32 0.0, %v2399
        %v2401 = vpop.f32.mrb[0].mxu0
        %v2402 = vpop.f32.mrb[0].mxu0
        %v2403 = vadd.f32 0.0, %v2402
        %v2404 = vpop.f32.mrb[0].mxu0
        %2405 = vmatprep.mubr.bf16.mxu0 0
        %2406 = vmatmul.mubr.bf16.gmra.mrb[0].mxu0 %v2035
        %v2407 = vpop.f32.mrb[0].mxu0
        %v2408 = vadd.f32 0.0, %v2407
        %v2409 = vpop.f32.mrb[0].mxu0
        %v2410 = vpop.f32.mrb[0].mxu0
        %v2411 = vadd.f32 0.0, %v2410
        %v2412 = vpop.f32.mrb[0].mxu0
        %2413 = vmatprep.mubr.bf16.mxu0 0
        %2414 = vmatmul.mubr.bf16.gmra.mrb[0].mxu0 %v2038
        %v2415 = vpop.f32.mrb[0].mxu0
        %v2416 = vadd.f32 0.0, %v2415
        %v2417 = vpop.f32.mrb[0].mxu0
        %v2418 = vpop.f32.mrb[0].mxu0
        %v2419 = vadd.f32 0.0, %v2418
        %v2420 = vpop.f32.mrb[0].mxu0
        %2421 = vmatprep.mubr.bf16.mxu0 0
        %2422 = vmatmul.mubr.bf16.gmra.mrb[0].mxu0 %v2328
        %v2423 = vpop.f32.mrb[0].mxu0
        %v2424 = vadd.f32 0.0, %v2423
        %v2425 = vpop.f32.mrb[0].mxu0
        %v2426 = vpop.f32.mrb[0].mxu0
        %v2427 = vadd.f32 0.0, %v2426
        %v2428 = vpop.f32.mrb[0].mxu0
        %2429 = vdwg.mxu0
        %v2430 = vadd.f32 %v2308, %v2368
        %v2431 = vadd.f32 %v2309, %v2371
        %v2432 = vadd.f32 %v2310, %v2376
        %v2433 = vadd.f32 %v2311, %v2379
        %v2434 = vadd.f32 %v2312, %v2384
        %v2435 = vadd.f32 %v2313, %v2387
        %v2436 = vadd.f32 %v2314, %v2392
        %v2437 = vadd.f32 %v2315, %v2395
        %v2438 = vadd.f32 %v2316, %v2400
        %v2439 = vadd.f32 %v2317, %v2403
        %v2440 = vadd.f32 %v2318, %v2408
        %v2441 = vadd.f32 %v2319, %v2411
        %v2442 = vadd.f32 %v2320, %v2416
        %v2443 = vadd.f32 %v2321, %v2419
        %v2444 = vadd.f32 %v2322, %v2424
        %v2445 = vadd.f32 %v2323, %v2427
        %v2446 = vld [vmem:[%s326] sm:$0xf]
        %v2447 = vld [vmem:[%s326 + $0x4] sm:$0xf]
        %v2448 = vld [vmem:[%s326 + $0x8] sm:$0xf]
        %v2449 = vld [vmem:[%s326 + $0xc] sm:$0xf]
        %v2450 = vld [vmem:[%s326 + $0x10] sm:$0xf]
        %v2451 = vld [vmem:[%s326 + $0x14] sm:$0xf]
        %v2452 = vld [vmem:[%s326 + $0x18] sm:$0xf]
        %v2453 = vld [vmem:[%s326 + $0x1c] sm:$0xf]
        %v2454 = vld [vmem:[%s326 + $0x20] sm:$0xf]
        %v2455 = vld [vmem:[%s326 + $0x24] sm:$0xf]
        %v2456 = vld [vmem:[%s326 + $0x28] sm:$0xf]
        %v2457 = vld [vmem:[%s326 + $0x2c] sm:$0xf]
        %v2458 = vld [vmem:[%s326 + $0x30] sm:$0xf]
        %v2459 = vld [vmem:[%s326 + $0x34] sm:$0xf]
        %v2460 = vld [vmem:[%s326 + $0x38] sm:$0xf]
        %v2461 = vld [vmem:[%s326 + $0x3c] sm:$0xf]
        %v2478 = vunpack.c.l.b16 %v2446
        %v2479 = vunpack.c.l.b16 %v2447
        %v2480 = vunpack.c.l.b16 %v2448
        %v2481 = vunpack.c.l.b16 %v2449
        %v2482 = vunpack.c.l.b16 %v2450
        %v2483 = vunpack.c.l.b16 %v2451
        %v2484 = vunpack.c.l.b16 %v2452
        %v2485 = vunpack.c.l.b16 %v2453
        %v2486 = vunpack.c.l.b16 %v2454
        %v2487 = vunpack.c.l.b16 %v2455
        %v2488 = vunpack.c.l.b16 %v2456
        %v2489 = vunpack.c.l.b16 %v2457
        %v2490 = vunpack.c.l.b16 %v2458
        %v2491 = vunpack.c.l.b16 %v2459
        %v2492 = vunpack.c.l.b16 %v2460
        %v2493 = vunpack.c.l.b16 %v2461
        %v2494 = vpack.c.b16 %v2479, %v2478
        %v2495 = vpack.c.b16 %v2481, %v2480
        %v2496 = vpack.c.b16 %v2483, %v2482
        %v2497 = vpack.c.b16 %v2485, %v2484
        %v2498 = vpack.c.b16 %v2487, %v2486
        %v2499 = vpack.c.b16 %v2489, %v2488
        %v2500 = vpack.c.b16 %v2491, %v2490
        %v2501 = vpack.c.b16 %v2493, %v2492
        %v2510 = vsel %vm803, 0, %v2494
        %v2511 = vsel %vm804, 0, %v2495
        %v2512 = vsel %vm805, 0, %v2496
        %v2513 = vsel %vm806, 0, %v2497
        %v2514 = vsel %vm807, 0, %v2498
        %v2515 = vsel %vm808, 0, %v2499
        %v2516 = vsel %vm809, 0, %v2500
        %v2517 = vsel %vm810, 0, %v2501
        %v2518 = vld [vmem:[%s3] sm:$0xf]
        %v2519 = vld [vmem:[%s3 + $0x4] sm:$0xf]
        %v2521 = vshrl.u32 %v2510, 16
        %v2523 = vrot.slane %v2521, 3
        %v2524 = vshll.u32 %v2510, 16
        %v2526 = vrot.slane %v2524, 4
        %v2527 = vor.u32 %v2523, %v2526
        %v2528 = vsel %vm1017, %v1022, %v2527
        %v2530 = vshrl.u32 %v2511, 16
        %v2532 = vrot.slane %v2530, 3
        %v2533 = vshll.u32 %v2511, 16
        %v2535 = vrot.slane %v2533, 4
        %v2536 = vor.u32 %v2532, %v2535
        %v2537 = vsel %vm1017, %v2527, %v2536
        %v2539 = vshrl.u32 %v2512, 16
        %v2541 = vrot.slane %v2539, 3
        %v2542 = vshll.u32 %v2512, 16
        %v2544 = vrot.slane %v2542, 4
        %v2545 = vor.u32 %v2541, %v2544
        %v2546 = vsel %vm1017, %v2536, %v2545
        %v2548 = vshrl.u32 %v2513, 16
        %v2550 = vrot.slane %v2548, 3
        %v2551 = vshll.u32 %v2513, 16
        %v2553 = vrot.slane %v2551, 4
        %v2554 = vor.u32 %v2550, %v2553
        %v2555 = vsel %vm1017, %v2545, %v2554
        %v2557 = vshrl.u32 %v2514, 16
        %v2559 = vrot.slane %v2557, 3
        %v2560 = vshll.u32 %v2514, 16
        %v2562 = vrot.slane %v2560, 4
        %v2563 = vor.u32 %v2559, %v2562
        %v2564 = vsel %vm1017, %v2554, %v2563
        %v2566 = vshrl.u32 %v2515, 16
        %v2568 = vrot.slane %v2566, 3
        %v2569 = vshll.u32 %v2515, 16
        %v2571 = vrot.slane %v2569, 4
        %v2572 = vor.u32 %v2568, %v2571
        %v2573 = vsel %vm1017, %v2563, %v2572
        %v2575 = vshrl.u32 %v2516, 16
        %v2577 = vrot.slane %v2575, 3
        %v2578 = vshll.u32 %v2516, 16
        %v2580 = vrot.slane %v2578, 4
        %v2581 = vor.u32 %v2577, %v2580
        %v2582 = vsel %vm1017, %v2572, %v2581
        %v2584 = vshrl.u32 %v2517, 16
        %v2586 = vrot.slane %v2584, 3
        %v2587 = vshll.u32 %v2517, 16
        %v2589 = vrot.slane %v2587, 4
        %v2590 = vor.u32 %v2586, %v2589
        %v2591 = vsel %vm1017, %v2581, %v2590
        %v2594 = vunpack.c.l.b16 %v2518
        %v2595 = vunpack.c.l.b16 %v2519
        %v2596 = vpack.c.b16 %v2595, %v2594
        %vm2598 = vcmask 130048
        %v2600 = vsel %vm2598, %v2528, 0
        %v2603 = vsel %vm2598, %v2537, 0
        %v2606 = vsel %vm2598, %v2546, 0
        %v2609 = vsel %vm2598, %v2555, 0
        %v2612 = vsel %vm2598, %v2564, 0
        %v2615 = vsel %vm2598, %v2573, 0
        %v2618 = vsel %vm2598, %v2582, 0
        %v2621 = vsel %vm2598, %v2591, 0
        %2623 = vmatprep.subr.bf16.mxu0 0
        %2624 = vmatpush1.bf16.msra.mxu0 %v2596
        %2625 = vmatprep.subr.bf16.mxu0 0
        %2626 = vmatpush1.bf16.msra.mxu0 0
        %2627 = vmatprep.subr.bf16.mxu0 0
        %2628 = vmatpush1.bf16.msra.mxu0 0
        %2629 = vmatprep.subr.bf16.mxu0 0
        %2630 = vmatpush1.bf16.msra.mxu0 0
        %2631 = vmatprep.subr.bf16.mxu0 0
        %2632 = vmatpush1.bf16.msra.mxu0 0
        %2633 = vmatprep.subr.bf16.mxu0 0
        %2634 = vmatpush1.bf16.msra.mxu0 0
        %2635 = vmatprep.subr.bf16.mxu0 0
        %2636 = vmatpush1.bf16.msra.mxu0 0
        %2637 = vmatprep.subr.bf16.mxu0 0
        %2638 = vmatpush1.bf16.msra.mxu0 0
        %2639 = vmatprep.subr.bf16.mxu0 0
        %2640 = vmatpush1.bf16.msra.mxu0 0
        %2641 = vmatprep.subr.bf16.mxu0 0
        %2642 = vmatpush1.bf16.msra.mxu0 0
        %2643 = vmatprep.subr.bf16.mxu0 0
        %2644 = vmatpush1.bf16.msra.mxu0 0
        %2645 = vmatprep.subr.bf16.mxu0 0
        %2646 = vmatpush1.bf16.msra.mxu0 0
        %2647 = vmatprep.subr.bf16.mxu0 0
        %2648 = vmatpush1.bf16.msra.mxu0 0
        %2649 = vmatprep.subr.bf16.mxu0 0
        %2650 = vmatpush1.bf16.msra.mxu0 0
        %2651 = vmatprep.subr.bf16.mxu0 0
        %2652 = vmatpush1.bf16.msra.mxu0 0
        %2653 = vmatprep.subr.bf16.mxu0 0
        %2654 = vmatpush1.bf16.msra.mxu0 0
        %2655 = vmatprep.mubr.bf16.mxu0 0
        %2656 = vmatmul.mubr.bf16.gmra.mrb[0].mxu0 %v2600
        %v2657 = vpop.f32.mrb[0].mxu0
        %v2658 = vadd.f32 0.0, %v2657
        %v2659 = vpop.f32.mrb[0].mxu0
        %v2660 = vpop.f32.mrb[0].mxu0
        %v2661 = vadd.f32 0.0, %v2660
        %v2662 = vpop.f32.mrb[0].mxu0
        %2663 = vmatprep.mubr.bf16.mxu0 0
        %2664 = vmatmul.mubr.bf16.gmra.mrb[0].mxu0 %v2603
        %v2665 = vpop.f32.mrb[0].mxu0
        %v2666 = vadd.f32 0.0, %v2665
        %v2667 = vpop.f32.mrb[0].mxu0
        %v2668 = vpop.f32.mrb[0].mxu0
        %v2669 = vadd.f32 0.0, %v2668
        %v2670 = vpop.f32.mrb[0].mxu0
        %2671 = vmatprep.mubr.bf16.mxu0 0
        %2672 = vmatmul.mubr.bf16.gmra.mrb[0].mxu0 %v2606
        %v2673 = vpop.f32.mrb[0].mxu0
        %v2674 = vadd.f32 0.0, %v2673
        %v2675 = vpop.f32.mrb[0].mxu0
        %v2676 = vpop.f32.mrb[0].mxu0
        %v2677 = vadd.f32 0.0, %v2676
        %v2678 = vpop.f32.mrb[0].mxu0
        %2679 = vmatprep.mubr.bf16.mxu0 0
        %2680 = vmatmul.mubr.bf16.gmra.mrb[0].mxu0 %v2609
        %v2681 = vpop.f32.mrb[0].mxu0
        %v2682 = vadd.f32 0.0, %v2681
        %v2683 = vpop.f32.mrb[0].mxu0
        %v2684 = vpop.f32.mrb[0].mxu0
        %v2685 = vadd.f32 0.0, %v2684
        %v2686 = vpop.f32.mrb[0].mxu0
        %2687 = vmatprep.mubr.bf16.mxu0 0
        %2688 = vmatmul.mubr.bf16.gmra.mrb[0].mxu0 %v2612
        %v2689 = vpop.f32.mrb[0].mxu0
        %v2690 = vadd.f32 0.0, %v2689
        %v2691 = vpop.f32.mrb[0].mxu0
        %v2692 = vpop.f32.mrb[0].mxu0
        %v2693 = vadd.f32 0.0, %v2692
        %v2694 = vpop.f32.mrb[0].mxu0
        %2695 = vmatprep.mubr.bf16.mxu0 0
        %2696 = vmatmul.mubr.bf16.gmra.mrb[0].mxu0 %v2615
        %v2697 = vpop.f32.mrb[0].mxu0
        %v2698 = vadd.f32 0.0, %v2697
        %v2699 = vpop.f32.mrb[0].mxu0
        %v2700 = vpop.f32.mrb[0].mxu0
        %v2701 = vadd.f32 0.0, %v2700
        %v2702 = vpop.f32.mrb[0].mxu0
        %2703 = vmatprep.mubr.bf16.mxu0 0
        %2704 = vmatmul.mubr.bf16.gmra.mrb[0].mxu0 %v2618
        %v2705 = vpop.f32.mrb[0].mxu0
        %v2706 = vadd.f32 0.0, %v2705
        %v2707 = vpop.f32.mrb[0].mxu0
        %v2708 = vpop.f32.mrb[0].mxu0
        %v2709 = vadd.f32 0.0, %v2708
        %v2710 = vpop.f32.mrb[0].mxu0
        %2711 = vmatprep.mubr.bf16.mxu0 0
        %2712 = vmatmul.mubr.bf16.gmra.mrb[0].mxu0 %v2621
        %v2713 = vpop.f32.mrb[0].mxu0
        %v2714 = vadd.f32 0.0, %v2713
        %v2715 = vpop.f32.mrb[0].mxu0
        %v2716 = vpop.f32.mrb[0].mxu0
        %v2717 = vadd.f32 0.0, %v2716
        %v2718 = vpop.f32.mrb[0].mxu0
        %2719 = vdwg.mxu0
        %v2720 = vadd.f32 %v2430, %v2658
        %v2721 = vadd.f32 %v2431, %v2661
        %v2722 = vadd.f32 %v2432, %v2666
        %v2723 = vadd.f32 %v2433, %v2669
        %v2724 = vadd.f32 %v2434, %v2674
        %v2725 = vadd.f32 %v2435, %v2677
        %v2726 = vadd.f32 %v2436, %v2682
        %v2727 = vadd.f32 %v2437, %v2685
        %v2728 = vadd.f32 %v2438, %v2690
        %v2729 = vadd.f32 %v2439, %v2693
        %v2730 = vadd.f32 %v2440, %v2698
        %v2731 = vadd.f32 %v2441, %v2701
        %v2732 = vadd.f32 %v2442, %v2706
        %v2733 = vadd.f32 %v2443, %v2709
        %v2734 = vadd.f32 %v2444, %v2714
        %v2735 = vadd.f32 %v2445, %v2717
        %s2736 = scalar_lea.vmem %s3, 8
        %v2737 = vld [vmem:[%s2736] sm:$0xf]
        %v2738 = vld [vmem:[%s2736 + $0x4] sm:$0xf]
        %v2739 = vrot.slane %v2521, 7
        %v2740 = vor.u32 %v2739, %v2524
        %v2741 = vsel %vm822, %v826, %v2740
        %v2742 = vrot.slane %v2530, 7
        %v2743 = vor.u32 %v2742, %v2533
        %v2744 = vsel %vm822, %v2739, %v2743
        %v2745 = vrot.slane %v2539, 7
        %v2746 = vor.u32 %v2745, %v2542
        %v2747 = vsel %vm822, %v2742, %v2746
        %v2748 = vrot.slane %v2548, 7
        %v2749 = vor.u32 %v2748, %v2551
        %v2750 = vsel %vm822, %v2745, %v2749
        %v2751 = vrot.slane %v2557, 7
        %v2752 = vor.u32 %v2751, %v2560
        %v2753 = vsel %vm822, %v2748, %v2752
        %v2754 = vrot.slane %v2566, 7
        %v2755 = vor.u32 %v2754, %v2569
        %v2756 = vsel %vm822, %v2751, %v2755
        %v2757 = vrot.slane %v2575, 7
        %v2758 = vor.u32 %v2757, %v2578
        %v2759 = vsel %vm822, %v2754, %v2758
        %v2760 = vrot.slane %v2584, 7
        %v2761 = vor.u32 %v2760, %v2587
        %v2762 = vsel %vm822, %v2757, %v2761
        %v2765 = vunpack.c.l.b16 %v2737
        %v2766 = vunpack.c.l.b16 %v2738
        %v2767 = vpack.c.b16 %v2766, %v2765
        %v2770 = vsel %vm2598, %v2741, 0
        %v2773 = vsel %vm2598, %v2744, 0
        %v2776 = vsel %vm2598, %v2747, 0
        %v2779 = vsel %vm2598, %v2750, 0
        %v2782 = vsel %vm2598, %v2753, 0
        %v2785 = vsel %vm2598, %v2756, 0
        %v2788 = vsel %vm2598, %v2759, 0
        %v2791 = vsel %vm2598, %v2762, 0
        %2793 = vmatprep.subr.bf16.mxu0 0
        %2794 = vmatpush1.bf16.msra.mxu0 %v2767
        %2795 = vmatprep.subr.bf16.mxu0 0
        %2796 = vmatpush1.bf16.msra.mxu0 0
        %2797 = vmatprep.subr.bf16.mxu0 0
        %2798 = vmatpush1.bf16.msra.mxu0 0
        %2799 = vmatprep.subr.bf16.mxu0 0
        %2800 = vmatpush1.bf16.msra.mxu0 0
        %2801 = vmatprep.subr.bf16.mxu0 0
        %2802 = vmatpush1.bf16.msra.mxu0 0
        %2803 = vmatprep.subr.bf16.mxu0 0
        %2804 = vmatpush1.bf16.msra.mxu0 0
        %2805 = vmatprep.subr.bf16.mxu0 0
        %2806 = vmatpush1.bf16.msra.mxu0 0
        %2807 = vmatprep.subr.bf16.mxu0 0
        %2808 = vmatpush1.bf16.msra.mxu0 0
        %2809 = vmatprep.subr.bf16.mxu0 0
        %2810 = vmatpush1.bf16.msra.mxu0 0
        %2811 = vmatprep.subr.bf16.mxu0 0
        %2812 = vmatpush1.bf16.msra.mxu0 0
        %2813 = vmatprep.subr.bf16.mxu0 0
        %2814 = vmatpush1.bf16.msra.mxu0 0
        %2815 = vmatprep.subr.bf16.mxu0 0
        %2816 = vmatpush1.bf16.msra.mxu0 0
        %2817 = vmatprep.subr.bf16.mxu0 0
        %2818 = vmatpush1.bf16.msra.mxu0 0
        %2819 = vmatprep.subr.bf16.mxu0 0
        %2820 = vmatpush1.bf16.msra.mxu0 0
        %2821 = vmatprep.subr.bf16.mxu0 0
        %2822 = vmatpush1.bf16.msra.mxu0 0
        %2823 = vmatprep.subr.bf16.mxu0 0
        %2824 = vmatpush1.bf16.msra.mxu0 0
        %2825 = vmatprep.mubr.bf16.mxu0 0
        %2826 = vmatmul.mubr.bf16.gmra.mrb[0].mxu0 %v2770
        %v2827 = vpop.f32.mrb[0].mxu0
        %v2828 = vadd.f32 0.0, %v2827
        %v2829 = vpop.f32.mrb[0].mxu0
        %v2830 = vpop.f32.mrb[0].mxu0
        %v2831 = vadd.f32 0.0, %v2830
        %v2832 = vpop.f32.mrb[0].mxu0
        %2833 = vmatprep.mubr.bf16.mxu0 0
        %2834 = vmatmul.mubr.bf16.gmra.mrb[0].mxu0 %v2773
        %v2835 = vpop.f32.mrb[0].mxu0
        %v2836 = vadd.f32 0.0, %v2835
        %v2837 = vpop.f32.mrb[0].mxu0
        %v2838 = vpop.f32.mrb[0].mxu0
        %v2839 = vadd.f32 0.0, %v2838
        %v2840 = vpop.f32.mrb[0].mxu0
        %2841 = vmatprep.mubr.bf16.mxu0 0
        %2842 = vmatmul.mubr.bf16.gmra.mrb[0].mxu0 %v2776
        %v2843 = vpop.f32.mrb[0].mxu0
        %v2844 = vadd.f32 0.0, %v2843
        %v2845 = vpop.f32.mrb[0].mxu0
        %v2846 = vpop.f32.mrb[0].mxu0
        %v2847 = vadd.f32 0.0, %v2846
        %v2848 = vpop.f32.mrb[0].mxu0
        %2849 = vmatprep.mubr.bf16.mxu0 0
        %2850 = vmatmul.mubr.bf16.gmra.mrb[0].mxu0 %v2779
        %v2851 = vpop.f32.mrb[0].mxu0
        %v2852 = vadd.f32 0.0, %v2851
        %v2853 = vpop.f32.mrb[0].mxu0
        %v2854 = vpop.f32.mrb[0].mxu0
        %v2855 = vadd.f32 0.0, %v2854
        %v2856 = vpop.f32.mrb[0].mxu0
        %2857 = vmatprep.mubr.bf16.mxu0 0
        %2858 = vmatmul.mubr.bf16.gmra.mrb[0].mxu0 %v2782
        %v2859 = vpop.f32.mrb[0].mxu0
        %v2860 = vadd.f32 0.0, %v2859
        %v2861 = vpop.f32.mrb[0].mxu0
        %v2862 = vpop.f32.mrb[0].mxu0
        %v2863 = vadd.f32 0.0, %v2862
        %v2864 = vpop.f32.mrb[0].mxu0
        %2865 = vmatprep.mubr.bf16.mxu0 0
        %2866 = vmatmul.mubr.bf16.gmra.mrb[0].mxu0 %v2785
        %v2867 = vpop.f32.mrb[0].mxu0
        %v2868 = vadd.f32 0.0, %v2867
        %v2869 = vpop.f32.mrb[0].mxu0
        %v2870 = vpop.f32.mrb[0].mxu0
        %v2871 = vadd.f32 0.0, %v2870
        %v2872 = vpop.f32.mrb[0].mxu0
        %2873 = vmatprep.mubr.bf16.mxu0 0
        %2874 = vmatmul.mubr.bf16.gmra.mrb[0].mxu0 %v2788
        %v2875 = vpop.f32.mrb[0].mxu0
        %v2876 = vadd.f32 0.0, %v2875
        %v2877 = vpop.f32.mrb[0].mxu0
        %v2878 = vpop.f32.mrb[0].mxu0
        %v2879 = vadd.f32 0.0, %v2878
        %v2880 = vpop.f32.mrb[0].mxu0
        %2881 = vmatprep.mubr.bf16.mxu0 0
        %2882 = vmatmul.mubr.bf16.gmra.mrb[0].mxu0 %v2791
        %v2883 = vpop.f32.mrb[0].mxu0
        %v2884 = vadd.f32 0.0, %v2883
        %v2885 = vpop.f32.mrb[0].mxu0
        %v2886 = vpop.f32.mrb[0].mxu0
        %v2887 = vadd.f32 0.0, %v2886
        %v2888 = vpop.f32.mrb[0].mxu0
        %2889 = vdwg.mxu0
        %v2890 = vadd.f32 %v2720, %v2828
        %v2891 = vadd.f32 %v2721, %v2831
        %v2892 = vadd.f32 %v2722, %v2836
        %v2893 = vadd.f32 %v2723, %v2839
        %v2894 = vadd.f32 %v2724, %v2844
        %v2895 = vadd.f32 %v2725, %v2847
        %v2896 = vadd.f32 %v2726, %v2852
        %v2897 = vadd.f32 %v2727, %v2855
        %v2898 = vadd.f32 %v2728, %v2860
        %v2899 = vadd.f32 %v2729, %v2863
        %v2900 = vadd.f32 %v2730, %v2868
        %v2901 = vadd.f32 %v2731, %v2871
        %v2902 = vadd.f32 %v2732, %v2876
        %v2903 = vadd.f32 %v2733, %v2879
        %v2904 = vadd.f32 %v2734, %v2884
        %v2905 = vadd.f32 %v2735, %v2887
        %s2906 = scalar_lea.vmem %s3, 16
        %v2907 = vld [vmem:[%s2906] sm:$0xf]
        %v2908 = vld [vmem:[%s2906 + $0x4] sm:$0xf]
        %v2909 = vsel %vm1017, %v2590, %v1022
        %v2912 = vunpack.c.l.b16 %v2907
        %v2913 = vunpack.c.l.b16 %v2908
        %v2914 = vpack.c.b16 %v2913, %v2912
        %v2917 = vsel %vm2598, %v2909, 0
        %2919 = vmatprep.subr.bf16.mxu0 0
        %2920 = vmatpush1.bf16.msra.mxu0 %v2914
        %2921 = vmatprep.subr.bf16.mxu0 0
        %2922 = vmatpush1.bf16.msra.mxu0 0
        %2923 = vmatprep.subr.bf16.mxu0 0
        %2924 = vmatpush1.bf16.msra.mxu0 0
        %2925 = vmatprep.subr.bf16.mxu0 0
        %2926 = vmatpush1.bf16.msra.mxu0 0
        %2927 = vmatprep.subr.bf16.mxu0 0
        %2928 = vmatpush1.bf16.msra.mxu0 0
        %2929 = vmatprep.subr.bf16.mxu0 0
        %2930 = vmatpush1.bf16.msra.mxu0 0
        %2931 = vmatprep.subr.bf16.mxu0 0
        %2932 = vmatpush1.bf16.msra.mxu0 0
        %2933 = vmatprep.subr.bf16.mxu0 0
        %2934 = vmatpush1.bf16.msra.mxu0 0
        %2935 = vmatprep.subr.bf16.mxu0 0
        %2936 = vmatpush1.bf16.msra.mxu0 0
        %2937 = vmatprep.subr.bf16.mxu0 0
        %2938 = vmatpush1.bf16.msra.mxu0 0
        %2939 = vmatprep.subr.bf16.mxu0 0
        %2940 = vmatpush1.bf16.msra.mxu0 0
        %2941 = vmatprep.subr.bf16.mxu0 0
        %2942 = vmatpush1.bf16.msra.mxu0 0
        %2943 = vmatprep.subr.bf16.mxu0 0
        %2944 = vmatpush1.bf16.msra.mxu0 0
        %2945 = vmatprep.subr.bf16.mxu0 0
        %2946 = vmatpush1.bf16.msra.mxu0 0
        %2947 = vmatprep.subr.bf16.mxu0 0
        %2948 = vmatpush1.bf16.msra.mxu0 0
        %2949 = vmatprep.subr.bf16.mxu0 0
        %2950 = vmatpush1.bf16.msra.mxu0 0
        %2951 = vmatprep.mubr.bf16.mxu0 0
        %2952 = vmatmul.mubr.bf16.gmra.mrb[0].mxu0 %v2603
        %v2953 = vpop.f32.mrb[0].mxu0
        %v2954 = vadd.f32 0.0, %v2953
        %v2955 = vpop.f32.mrb[0].mxu0
        %v2956 = vpop.f32.mrb[0].mxu0
        %v2957 = vadd.f32 0.0, %v2956
        %v2958 = vpop.f32.mrb[0].mxu0
        %2959 = vmatprep.mubr.bf16.mxu0 0
        %2960 = vmatmul.mubr.bf16.gmra.mrb[0].mxu0 %v2606
        %v2961 = vpop.f32.mrb[0].mxu0
        %v2962 = vadd.f32 0.0, %v2961
        %v2963 = vpop.f32.mrb[0].mxu0
        %v2964 = vpop.f32.mrb[0].mxu0
        %v2965 = vadd.f32 0.0, %v2964
        %v2966 = vpop.f32.mrb[0].mxu0
        %2967 = vmatprep.mubr.bf16.mxu0 0
        %2968 = vmatmul.mubr.bf16.gmra.mrb[0].mxu0 %v2609
        %v2969 = vpop.f32.mrb[0].mxu0
        %v2970 = vadd.f32 0.0, %v2969
        %v2971 = vpop.f32.mrb[0].mxu0
        %v2972 = vpop.f32.mrb[0].mxu0
        %v2973 = vadd.f32 0.0, %v2972
        %v2974 = vpop.f32.mrb[0].mxu0
        %2975 = vmatprep.mubr.bf16.mxu0 0
        %2976 = vmatmul.mubr.bf16.gmra.mrb[0].mxu0 %v2612
        %v2977 = vpop.f32.mrb[0].mxu0
        %v2978 = vadd.f32 0.0, %v2977
        %v2979 = vpop.f32.mrb[0].mxu0
        %v2980 = vpop.f32.mrb[0].mxu0
        %v2981 = vadd.f32 0.0, %v2980
        %v2982 = vpop.f32.mrb[0].mxu0
        %2983 = vmatprep.mubr.bf16.mxu0 0
        %2984 = vmatmul.mubr.bf16.gmra.mrb[0].mxu0 %v2615
        %v2985 = vpop.f32.mrb[0].mxu0
        %v2986 = vadd.f32 0.0, %v2985
        %v2987 = vpop.f32.mrb[0].mxu0
        %v2988 = vpop.f32.mrb[0].mxu0
        %v2989 = vadd.f32 0.0, %v2988
        %v2990 = vpop.f32.mrb[0].mxu0
        %2991 = vmatprep.mubr.bf16.mxu0 0
        %2992 = vmatmul.mubr.bf16.gmra.mrb[0].mxu0 %v2618
        %v2993 = vpop.f32.mrb[0].mxu0
        %v2994 = vadd.f32 0.0, %v2993
        %v2995 = vpop.f32.mrb[0].mxu0
        %v2996 = vpop.f32.mrb[0].mxu0
        %v2997 = vadd.f32 0.0, %v2996
        %v2998 = vpop.f32.mrb[0].mxu0
        %2999 = vmatprep.mubr.bf16.mxu0 0
        %3000 = vmatmul.mubr.bf16.gmra.mrb[0].mxu0 %v2621
        %v3001 = vpop.f32.mrb[0].mxu0
        %v3002 = vadd.f32 0.0, %v3001
        %v3003 = vpop.f32.mrb[0].mxu0
        %v3004 = vpop.f32.mrb[0].mxu0
        %v3005 = vadd.f32 0.0, %v3004
        %v3006 = vpop.f32.mrb[0].mxu0
        %3007 = vmatprep.mubr.bf16.mxu0 0
        %3008 = vmatmul.mubr.bf16.gmra.mrb[0].mxu0 %v2917
        %v3009 = vpop.f32.mrb[0].mxu0
        %v3010 = vadd.f32 0.0, %v3009
        %v3011 = vpop.f32.mrb[0].mxu0
        %v3012 = vpop.f32.mrb[0].mxu0
        %v3013 = vadd.f32 0.0, %v3012
        %v3014 = vpop.f32.mrb[0].mxu0
        %3015 = vdwg.mxu0
        %v3016 = vadd.f32 %v2890, %v2954
        %v3017 = vadd.f32 %v2891, %v2957
        %v3018 = vadd.f32 %v2892, %v2962
        %v3019 = vadd.f32 %v2893, %v2965
        %v3020 = vadd.f32 %v2894, %v2970
        %v3021 = vadd.f32 %v2895, %v2973
        %v3022 = vadd.f32 %v2896, %v2978
        %v3023 = vadd.f32 %v2897, %v2981
        %v3024 = vadd.f32 %v2898, %v2986
        %v3025 = vadd.f32 %v2899, %v2989
        %v3026 = vadd.f32 %v2900, %v2994
        %v3027 = vadd.f32 %v2901, %v2997
        %v3028 = vadd.f32 %v2902, %v3002
        %v3029 = vadd.f32 %v2903, %v3005
        %v3030 = vadd.f32 %v2904, %v3010
        %v3031 = vadd.f32 %v2905, %v3013
        %s3032 = scalar_lea.vmem %s3, 24
        %v3033 = vld [vmem:[%s3032] sm:$0xf]
        %v3034 = vld [vmem:[%s3032 + $0x4] sm:$0xf]
        %v3035 = vrot.slane %v2494, 4
        %v3036 = vsel %vm1304, %v1305, %v3035
        %v3037 = vrot.slane %v2495, 4
        %v3038 = vsel %vm1304, %v3035, %v3037
        %v3039 = vrot.slane %v2496, 4
        %v3040 = vsel %vm1304, %v3037, %v3039
        %v3041 = vrot.slane %v2497, 4
        %v3042 = vsel %vm1304, %v3039, %v3041
        %v3043 = vrot.slane %v2498, 4
        %v3044 = vsel %vm1304, %v3041, %v3043
        %v3045 = vrot.slane %v2499, 4
        %v3046 = vsel %vm1304, %v3043, %v3045
        %v3047 = vrot.slane %v2500, 4
        %v3048 = vsel %vm1304, %v3045, %v3047
        %v3049 = vrot.slane %v2501, 4
        %v3050 = vsel %vm1304, %v3047, %v3049
        %v3053 = vunpack.c.l.b16 %v3033
        %v3054 = vunpack.c.l.b16 %v3034
        %v3055 = vpack.c.b16 %v3054, %v3053
        %v3058 = vsel %vm2598, %v3036, 0
        %v3061 = vsel %vm2598, %v3038, 0
        %v3064 = vsel %vm2598, %v3040, 0
        %v3067 = vsel %vm2598, %v3042, 0
        %v3070 = vsel %vm2598, %v3044, 0
        %v3073 = vsel %vm2598, %v3046, 0
        %v3076 = vsel %vm2598, %v3048, 0
        %v3079 = vsel %vm2598, %v3050, 0
        %3081 = vmatprep.subr.bf16.mxu0 0
        %3082 = vmatpush1.bf16.msra.mxu0 %v3055
        %3083 = vmatprep.subr.bf16.mxu0 0
        %3084 = vmatpush1.bf16.msra.mxu0 0
        %3085 = vmatprep.subr.bf16.mxu0 0
        %3086 = vmatpush1.bf16.msra.mxu0 0
        %3087 = vmatprep.subr.bf16.mxu0 0
        %3088 = vmatpush1.bf16.msra.mxu0 0
        %3089 = vmatprep.subr.bf16.mxu0 0
        %3090 = vmatpush1.bf16.msra.mxu0 0
        %3091 = vmatprep.subr.bf16.mxu0 0
        %3092 = vmatpush1.bf16.msra.mxu0 0
        %3093 = vmatprep.subr.bf16.mxu0 0
        %3094 = vmatpush1.bf16.msra.mxu0 0
        %3095 = vmatprep.subr.bf16.mxu0 0
        %3096 = vmatpush1.bf16.msra.mxu0 0
        %3097 = vmatprep.subr.bf16.mxu0 0
        %3098 = vmatpush1.bf16.msra.mxu0 0
        %3099 = vmatprep.subr.bf16.mxu0 0
        %3100 = vmatpush1.bf16.msra.mxu0 0
        %3101 = vmatprep.subr.bf16.mxu0 0
        %3102 = vmatpush1.bf16.msra.mxu0 0
        %3103 = vmatprep.subr.bf16.mxu0 0
        %3104 = vmatpush1.bf16.msra.mxu0 0
        %3105 = vmatprep.subr.bf16.mxu0 0
        %3106 = vmatpush1.bf16.msra.mxu0 0
        %3107 = vmatprep.subr.bf16.mxu0 0
        %3108 = vmatpush1.bf16.msra.mxu0 0
        %3109 = vmatprep.subr.bf16.mxu0 0
        %3110 = vmatpush1.bf16.msra.mxu0 0
        %3111 = vmatprep.subr.bf16.mxu0 0
        %3112 = vmatpush1.bf16.msra.mxu0 0
        %3113 = vmatprep.mubr.bf16.mxu0 0
        %3114 = vmatmul.mubr.bf16.gmra.mrb[0].mxu0 %v3058
        %v3115 = vpop.f32.mrb[0].mxu0
        %v3116 = vadd.f32 0.0, %v3115
        %v3117 = vpop.f32.mrb[0].mxu0
        %v3118 = vpop.f32.mrb[0].mxu0
        %v3119 = vadd.f32 0.0, %v3118
        %v3120 = vpop.f32.mrb[0].mxu0
        %3121 = vmatprep.mubr.bf16.mxu0 0
        %3122 = vmatmul.mubr.bf16.gmra.mrb[0].mxu0 %v3061
        %v3123 = vpop.f32.mrb[0].mxu0
        %v3124 = vadd.f32 0.0, %v3123
        %v3125 = vpop.f32.mrb[0].mxu0
        %v3126 = vpop.f32.mrb[0].mxu0
        %v3127 = vadd.f32 0.0, %v3126
        %v3128 = vpop.f32.mrb[0].mxu0
        %3129 = vmatprep.mubr.bf16.mxu0 0
        %3130 = vmatmul.mubr.bf16.gmra.mrb[0].mxu0 %v3064
        %v3131 = vpop.f32.mrb[0].mxu0
        %v3132 = vadd.f32 0.0, %v3131
        %v3133 = vpop.f32.mrb[0].mxu0
        %v3134 = vpop.f32.mrb[0].mxu0
        %v3135 = vadd.f32 0.0, %v3134
        %v3136 = vpop.f32.mrb[0].mxu0
        %3137 = vmatprep.mubr.bf16.mxu0 0
        %3138 = vmatmul.mubr.bf16.gmra.mrb[0].mxu0 %v3067
        %v3139 = vpop.f32.mrb[0].mxu0
        %v3140 = vadd.f32 0.0, %v3139
        %v3141 = vpop.f32.mrb[0].mxu0
        %v3142 = vpop.f32.mrb[0].mxu0
        %v3143 = vadd.f32 0.0, %v3142
        %v3144 = vpop.f32.mrb[0].mxu0
        %3145 = vmatprep.mubr.bf16.mxu0 0
        %3146 = vmatmul.mubr.bf16.gmra.mrb[0].mxu0 %v3070
        %v3147 = vpop.f32.mrb[0].mxu0
        %v3148 = vadd.f32 0.0, %v3147
        %v3149 = vpop.f32.mrb[0].mxu0
        %v3150 = vpop.f32.mrb[0].mxu0
        %v3151 = vadd.f32 0.0, %v3150
        %v3152 = vpop.f32.mrb[0].mxu0
        %3153 = vmatprep.mubr.bf16.mxu0 0
        %3154 = vmatmul.mubr.bf16.gmra.mrb[0].mxu0 %v3073
        %v3155 = vpop.f32.mrb[0].mxu0
        %v3156 = vadd.f32 0.0, %v3155
        %v3157 = vpop.f32.mrb[0].mxu0
        %v3158 = vpop.f32.mrb[0].mxu0
        %v3159 = vadd.f32 0.0, %v3158
        %v3160 = vpop.f32.mrb[0].mxu0
        %3161 = vmatprep.mubr.bf16.mxu0 0
        %3162 = vmatmul.mubr.bf16.gmra.mrb[0].mxu0 %v3076
        %v3163 = vpop.f32.mrb[0].mxu0
        %v3164 = vadd.f32 0.0, %v3163
        %v3165 = vpop.f32.mrb[0].mxu0
        %v3166 = vpop.f32.mrb[0].mxu0
        %v3167 = vadd.f32 0.0, %v3166
        %v3168 = vpop.f32.mrb[0].mxu0
        %3169 = vmatprep.mubr.bf16.mxu0 0
        %3170 = vmatmul.mubr.bf16.gmra.mrb[0].mxu0 %v3079
        %v3171 = vpop.f32.mrb[0].mxu0
        %v3172 = vadd.f32 0.0, %v3171
        %v3173 = vpop.f32.mrb[0].mxu0
        %v3174 = vpop.f32.mrb[0].mxu0
        %v3175 = vadd.f32 0.0, %v3174
        %v3176 = vpop.f32.mrb[0].mxu0
        %3177 = vdwg.mxu0
        %v3178 = vadd.f32 %v3016, %v3116
        %v3179 = vadd.f32 %v3017, %v3119
        %v3180 = vadd.f32 %v3018, %v3124
        %v3181 = vadd.f32 %v3019, %v3127
        %v3182 = vadd.f32 %v3020, %v3132
        %v3183 = vadd.f32 %v3021, %v3135
        %v3184 = vadd.f32 %v3022, %v3140
        %v3185 = vadd.f32 %v3023, %v3143
        %v3186 = vadd.f32 %v3024, %v3148
        %v3187 = vadd.f32 %v3025, %v3151
        %v3188 = vadd.f32 %v3026, %v3156
        %v3189 = vadd.f32 %v3027, %v3159
        %v3190 = vadd.f32 %v3028, %v3164
        %v3191 = vadd.f32 %v3029, %v3167
        %v3192 = vadd.f32 %v3030, %v3172
        %v3193 = vadd.f32 %v3031, %v3175
        %s3194 = scalar_lea.vmem %s3, 32
        %v3195 = vld [vmem:[%s3194] sm:$0xf]
        %v3196 = vld [vmem:[%s3194 + $0x4] sm:$0xf]
        %v3199 = vunpack.c.l.b16 %v3195
        %v3200 = vunpack.c.l.b16 %v3196
        %v3201 = vpack.c.b16 %v3200, %v3199
        %v3204 = vsel %vm2598, %v2494, 0
        %v3207 = vsel %vm2598, %v2495, 0
        %v3210 = vsel %vm2598, %v2496, 0
        %v3213 = vsel %vm2598, %v2497, 0
        %v3216 = vsel %vm2598, %v2498, 0
        %v3219 = vsel %vm2598, %v2499, 0
        %v3222 = vsel %vm2598, %v2500, 0
        %v3225 = vsel %vm2598, %v2501, 0
        %3227 = vmatprep.subr.bf16.mxu0 0
        %3228 = vmatpush1.bf16.msra.mxu0 %v3201
        %3229 = vmatprep.subr.bf16.mxu0 0
        %3230 = vmatpush1.bf16.msra.mxu0 0
        %3231 = vmatprep.subr.bf16.mxu0 0
        %3232 = vmatpush1.bf16.msra.mxu0 0
        %3233 = vmatprep.subr.bf16.mxu0 0
        %3234 = vmatpush1.bf16.msra.mxu0 0
        %3235 = vmatprep.subr.bf16.mxu0 0
        %3236 = vmatpush1.bf16.msra.mxu0 0
        %3237 = vmatprep.subr.bf16.mxu0 0
        %3238 = vmatpush1.bf16.msra.mxu0 0
        %3239 = vmatprep.subr.bf16.mxu0 0
        %3240 = vmatpush1.bf16.msra.mxu0 0
        %3241 = vmatprep.subr.bf16.mxu0 0
        %3242 = vmatpush1.bf16.msra.mxu0 0
        %3243 = vmatprep.subr.bf16.mxu0 0
        %3244 = vmatpush1.bf16.msra.mxu0 0
        %3245 = vmatprep.subr.bf16.mxu0 0
        %3246 = vmatpush1.bf16.msra.mxu0 0
        %3247 = vmatprep.subr.bf16.mxu0 0
        %3248 = vmatpush1.bf16.msra.mxu0 0
        %3249 = vmatprep.subr.bf16.mxu0 0
        %3250 = vmatpush1.bf16.msra.mxu0 0
        %3251 = vmatprep.subr.bf16.mxu0 0
        %3252 = vmatpush1.bf16.msra.mxu0 0
        %3253 = vmatprep.subr.bf16.mxu0 0
        %3254 = vmatpush1.bf16.msra.mxu0 0
        %3255 = vmatprep.subr.bf16.mxu0 0
        %3256 = vmatpush1.bf16.msra.mxu0 0
        %3257 = vmatprep.subr.bf16.mxu0 0
        %3258 = vmatpush1.bf16.msra.mxu0 0
        %3259 = vmatprep.mubr.bf16.mxu0 0
        %3260 = vmatmul.mubr.bf16.gmra.mrb[0].mxu0 %v3204
        %v3261 = vpop.f32.mrb[0].mxu0
        %v3262 = vadd.f32 0.0, %v3261
        %v3263 = vpop.f32.mrb[0].mxu0
        %v3264 = vpop.f32.mrb[0].mxu0
        %v3265 = vadd.f32 0.0, %v3264
        %v3266 = vpop.f32.mrb[0].mxu0
        %3267 = vmatprep.mubr.bf16.mxu0 0
        %3268 = vmatmul.mubr.bf16.gmra.mrb[0].mxu0 %v3207
        %v3269 = vpop.f32.mrb[0].mxu0
        %v3270 = vadd.f32 0.0, %v3269
        %v3271 = vpop.f32.mrb[0].mxu0
        %v3272 = vpop.f32.mrb[0].mxu0
        %v3273 = vadd.f32 0.0, %v3272
        %v3274 = vpop.f32.mrb[0].mxu0
        %3275 = vmatprep.mubr.bf16.mxu0 0
        %3276 = vmatmul.mubr.bf16.gmra.mrb[0].mxu0 %v3210
        %v3277 = vpop.f32.mrb[0].mxu0
        %v3278 = vadd.f32 0.0, %v3277
        %v3279 = vpop.f32.mrb[0].mxu0
        %v3280 = vpop.f32.mrb[0].mxu0
        %v3281 = vadd.f32 0.0, %v3280
        %v3282 = vpop.f32.mrb[0].mxu0
        %3283 = vmatprep.mubr.bf16.mxu0 0
        %3284 = vmatmul.mubr.bf16.gmra.mrb[0].mxu0 %v3213
        %v3285 = vpop.f32.mrb[0].mxu0
        %v3286 = vadd.f32 0.0, %v3285
        %v3287 = vpop.f32.mrb[0].mxu0
        %v3288 = vpop.f32.mrb[0].mxu0
        %v3289 = vadd.f32 0.0, %v3288
        %v3290 = vpop.f32.mrb[0].mxu0
        %3291 = vmatprep.mubr.bf16.mxu0 0
        %3292 = vmatmul.mubr.bf16.gmra.mrb[0].mxu0 %v3216
        %v3293 = vpop.f32.mrb[0].mxu0
        %v3294 = vadd.f32 0.0, %v3293
        %v3295 = vpop.f32.mrb[0].mxu0
        %v3296 = vpop.f32.mrb[0].mxu0
        %v3297 = vadd.f32 0.0, %v3296
        %v3298 = vpop.f32.mrb[0].mxu0
        %3299 = vmatprep.mubr.bf16.mxu0 0
        %3300 = vmatmul.mubr.bf16.gmra.mrb[0].mxu0 %v3219
        %v3301 = vpop.f32.mrb[0].mxu0
        %v3302 = vadd.f32 0.0, %v3301
        %v3303 = vpop.f32.mrb[0].mxu0
        %v3304 = vpop.f32.mrb[0].mxu0
        %v3305 = vadd.f32 0.0, %v3304
        %v3306 = vpop.f32.mrb[0].mxu0
        %3307 = vmatprep.mubr.bf16.mxu0 0
        %3308 = vmatmul.mubr.bf16.gmra.mrb[0].mxu0 %v3222
        %v3309 = vpop.f32.mrb[0].mxu0
        %v3310 = vadd.f32 0.0, %v3309
        %v3311 = vpop.f32.mrb[0].mxu0
        %v3312 = vpop.f32.mrb[0].mxu0
        %v3313 = vadd.f32 0.0, %v3312
        %v3314 = vpop.f32.mrb[0].mxu0
        %3315 = vmatprep.mubr.bf16.mxu0 0
        %3316 = vmatmul.mubr.bf16.gmra.mrb[0].mxu0 %v3225
        %v3317 = vpop.f32.mrb[0].mxu0
        %v3318 = vadd.f32 0.0, %v3317
        %v3319 = vpop.f32.mrb[0].mxu0
        %v3320 = vpop.f32.mrb[0].mxu0
        %v3321 = vadd.f32 0.0, %v3320
        %v3322 = vpop.f32.mrb[0].mxu0
        %3323 = vdwg.mxu0
        %v3324 = vadd.f32 %v3178, %v3262
        %v3325 = vadd.f32 %v3179, %v3265
        %v3326 = vadd.f32 %v3180, %v3270
        %v3327 = vadd.f32 %v3181, %v3273
        %v3328 = vadd.f32 %v3182, %v3278
        %v3329 = vadd.f32 %v3183, %v3281
        %v3330 = vadd.f32 %v3184, %v3286
        %v3331 = vadd.f32 %v3185, %v3289
        %v3332 = vadd.f32 %v3186, %v3294
        %v3333 = vadd.f32 %v3187, %v3297
        %v3334 = vadd.f32 %v3188, %v3302
        %v3335 = vadd.f32 %v3189, %v3305
        %v3336 = vadd.f32 %v3190, %v3310
        %v3337 = vadd.f32 %v3191, %v3313
        %v3338 = vadd.f32 %v3192, %v3318
        %v3339 = vadd.f32 %v3193, %v3321
        %s3340 = scalar_lea.vmem %s3, 40
        %v3341 = vld [vmem:[%s3340] sm:$0xf]
        %v3342 = vld [vmem:[%s3340 + $0x4] sm:$0xf]
        %v3343 = vsel %vm1304, %v3049, %v1305
        %v3346 = vunpack.c.l.b16 %v3341
        %v3347 = vunpack.c.l.b16 %v3342
        %v3348 = vpack.c.b16 %v3347, %v3346
        %v3351 = vsel %vm2598, %v3343, 0
        %3353 = vmatprep.subr.bf16.mxu0 0
        %3354 = vmatpush1.bf16.msra.mxu0 %v3348
        %3355 = vmatprep.subr.bf16.mxu0 0
        %3356 = vmatpush1.bf16.msra.mxu0 0
        %3357 = vmatprep.subr.bf16.mxu0 0
        %3358 = vmatpush1.bf16.msra.mxu0 0
        %3359 = vmatprep.subr.bf16.mxu0 0
        %3360 = vmatpush1.bf16.msra.mxu0 0
        %3361 = vmatprep.subr.bf16.mxu0 0
        %3362 = vmatpush1.bf16.msra.mxu0 0
        %3363 = vmatprep.subr.bf16.mxu0 0
        %3364 = vmatpush1.bf16.msra.mxu0 0
        %3365 = vmatprep.subr.bf16.mxu0 0
        %3366 = vmatpush1.bf16.msra.mxu0 0
        %3367 = vmatprep.subr.bf16.mxu0 0
        %3368 = vmatpush1.bf16.msra.mxu0 0
        %3369 = vmatprep.subr.bf16.mxu0 0
        %3370 = vmatpush1.bf16.msra.mxu0 0
        %3371 = vmatprep.subr.bf16.mxu0 0
        %3372 = vmatpush1.bf16.msra.mxu0 0
        %3373 = vmatprep.subr.bf16.mxu0 0
        %3374 = vmatpush1.bf16.msra.mxu0 0
        %3375 = vmatprep.subr.bf16.mxu0 0
        %3376 = vmatpush1.bf16.msra.mxu0 0
        %3377 = vmatprep.subr.bf16.mxu0 0
        %3378 = vmatpush1.bf16.msra.mxu0 0
        %3379 = vmatprep.subr.bf16.mxu0 0
        %3380 = vmatpush1.bf16.msra.mxu0 0
        %3381 = vmatprep.subr.bf16.mxu0 0
        %3382 = vmatpush1.bf16.msra.mxu0 0
        %3383 = vmatprep.subr.bf16.mxu0 0
        %3384 = vmatpush1.bf16.msra.mxu0 0
        %3385 = vmatprep.mubr.bf16.mxu0 0
        %3386 = vmatmul.mubr.bf16.gmra.mrb[0].mxu0 %v3061
        %v3387 = vpop.f32.mrb[0].mxu0
        %v3388 = vadd.f32 0.0, %v3387
        %v3389 = vpop.f32.mrb[0].mxu0
        %v3390 = vpop.f32.mrb[0].mxu0
        %v3391 = vadd.f32 0.0, %v3390
        %v3392 = vpop.f32.mrb[0].mxu0
        %3393 = vmatprep.mubr.bf16.mxu0 0
        %3394 = vmatmul.mubr.bf16.gmra.mrb[0].mxu0 %v3064
        %v3395 = vpop.f32.mrb[0].mxu0
        %v3396 = vadd.f32 0.0, %v3395
        %v3397 = vpop.f32.mrb[0].mxu0
        %v3398 = vpop.f32.mrb[0].mxu0
        %v3399 = vadd.f32 0.0, %v3398
        %v3400 = vpop.f32.mrb[0].mxu0
        %3401 = vmatprep.mubr.bf16.mxu0 0
        %3402 = vmatmul.mubr.bf16.gmra.mrb[0].mxu0 %v3067
        %v3403 = vpop.f32.mrb[0].mxu0
        %v3404 = vadd.f32 0.0, %v3403
        %v3405 = vpop.f32.mrb[0].mxu0
        %v3406 = vpop.f32.mrb[0].mxu0
        %v3407 = vadd.f32 0.0, %v3406
        %v3408 = vpop.f32.mrb[0].mxu0
        %3409 = vmatprep.mubr.bf16.mxu0 0
        %3410 = vmatmul.mubr.bf16.gmra.mrb[0].mxu0 %v3070
        %v3411 = vpop.f32.mrb[0].mxu0
        %v3412 = vadd.f32 0.0, %v3411
        %v3413 = vpop.f32.mrb[0].mxu0
        %v3414 = vpop.f32.mrb[0].mxu0
        %v3415 = vadd.f32 0.0, %v3414
        %v3416 = vpop.f32.mrb[0].mxu0
        %3417 = vmatprep.mubr.bf16.mxu0 0
        %3418 = vmatmul.mubr.bf16.gmra.mrb[0].mxu0 %v3073
        %v3419 = vpop.f32.mrb[0].mxu0
        %v3420 = vadd.f32 0.0, %v3419
        %v3421 = vpop.f32.mrb[0].mxu0
        %v3422 = vpop.f32.mrb[0].mxu0
        %v3423 = vadd.f32 0.0, %v3422
        %v3424 = vpop.f32.mrb[0].mxu0
        %3425 = vmatprep.mubr.bf16.mxu0 0
        %3426 = vmatmul.mubr.bf16.gmra.mrb[0].mxu0 %v3076
        %v3427 = vpop.f32.mrb[0].mxu0
        %v3428 = vadd.f32 0.0, %v3427
        %v3429 = vpop.f32.mrb[0].mxu0
        %v3430 = vpop.f32.mrb[0].mxu0
        %v3431 = vadd.f32 0.0, %v3430
        %v3432 = vpop.f32.mrb[0].mxu0
        %3433 = vmatprep.mubr.bf16.mxu0 0
        %3434 = vmatmul.mubr.bf16.gmra.mrb[0].mxu0 %v3079
        %v3435 = vpop.f32.mrb[0].mxu0
        %v3436 = vadd.f32 0.0, %v3435
        %v3437 = vpop.f32.mrb[0].mxu0
        %v3438 = vpop.f32.mrb[0].mxu0
        %v3439 = vadd.f32 0.0, %v3438
        %v3440 = vpop.f32.mrb[0].mxu0
        %3441 = vmatprep.mubr.bf16.mxu0 0
        %3442 = vmatmul.mubr.bf16.gmra.mrb[0].mxu0 %v3351
        %v3443 = vpop.f32.mrb[0].mxu0
        %v3444 = vadd.f32 0.0, %v3443
        %v3445 = vpop.f32.mrb[0].mxu0
        %v3446 = vpop.f32.mrb[0].mxu0
        %v3447 = vadd.f32 0.0, %v3446
        %v3448 = vpop.f32.mrb[0].mxu0
        %3449 = vdwg.mxu0
        %v3450 = vadd.f32 %v3324, %v3388
        %v3451 = vadd.f32 %v3325, %v3391
        %v3452 = vadd.f32 %v3326, %v3396
        %v3453 = vadd.f32 %v3327, %v3399
        %v3454 = vadd.f32 %v3328, %v3404
        %v3455 = vadd.f32 %v3329, %v3407
        %v3456 = vadd.f32 %v3330, %v3412
        %v3457 = vadd.f32 %v3331, %v3415
        %v3458 = vadd.f32 %v3332, %v3420
        %v3459 = vadd.f32 %v3333, %v3423
        %v3460 = vadd.f32 %v3334, %v3428
        %v3461 = vadd.f32 %v3335, %v3431
        %v3462 = vadd.f32 %v3336, %v3436
        %v3463 = vadd.f32 %v3337, %v3439
        %v3464 = vadd.f32 %v3338, %v3444
        %v3465 = vadd.f32 %v3339, %v3447
        %v3466 = vsel %vm1923, 0, %v2494
        %v3467 = vsel %vm1924, 0, %v2495
        %v3468 = vsel %vm1925, 0, %v2496
        %v3469 = vsel %vm1926, 0, %v2497
        %v3470 = vsel %vm1927, 0, %v2498
        %v3471 = vsel %vm1928, 0, %v2499
        %v3472 = vsel %vm1929, 0, %v2500
        %v3473 = vsel %vm1930, 0, %v2501
        %s3474 = scalar_lea.vmem %s3, 48
        %v3475 = vld [vmem:[%s3474] sm:$0xf]
        %v3476 = vld [vmem:[%s3474 + $0x4] sm:$0xf]
        %v3478 = vshrl.u32 %v3466, 16
        %v3480 = vrot.slane %v3478, 4
        %v3481 = vshll.u32 %v3466, 16
        %v3483 = vrot.slane %v3481, 5
        %v3484 = vor.u32 %v3480, %v3483
        %v3485 = vsel %vm722, %v1943, %v3484
        %v3487 = vshrl.u32 %v3467, 16
        %v3489 = vrot.slane %v3487, 4
        %v3490 = vshll.u32 %v3467, 16
        %v3492 = vrot.slane %v3490, 5
        %v3493 = vor.u32 %v3489, %v3492
        %v3494 = vsel %vm722, %v3484, %v3493
        %v3496 = vshrl.u32 %v3468, 16
        %v3498 = vrot.slane %v3496, 4
        %v3499 = vshll.u32 %v3468, 16
        %v3501 = vrot.slane %v3499, 5
        %v3502 = vor.u32 %v3498, %v3501
        %v3503 = vsel %vm722, %v3493, %v3502
        %v3505 = vshrl.u32 %v3469, 16
        %v3507 = vrot.slane %v3505, 4
        %v3508 = vshll.u32 %v3469, 16
        %v3510 = vrot.slane %v3508, 5
        %v3511 = vor.u32 %v3507, %v3510
        %v3512 = vsel %vm722, %v3502, %v3511
        %v3514 = vshrl.u32 %v3470, 16
        %v3516 = vrot.slane %v3514, 4
        %v3517 = vshll.u32 %v3470, 16
        %v3519 = vrot.slane %v3517, 5
        %v3520 = vor.u32 %v3516, %v3519
        %v3521 = vsel %vm722, %v3511, %v3520
        %v3523 = vshrl.u32 %v3471, 16
        %v3525 = vrot.slane %v3523, 4
        %v3526 = vshll.u32 %v3471, 16
        %v3528 = vrot.slane %v3526, 5
        %v3529 = vor.u32 %v3525, %v3528
        %v3530 = vsel %vm722, %v3520, %v3529
        %v3532 = vshrl.u32 %v3472, 16
        %v3534 = vrot.slane %v3532, 4
        %v3535 = vshll.u32 %v3472, 16
        %v3537 = vrot.slane %v3535, 5
        %v3538 = vor.u32 %v3534, %v3537
        %v3539 = vsel %vm722, %v3529, %v3538
        %v3541 = vshrl.u32 %v3473, 16
        %v3543 = vrot.slane %v3541, 4
        %v3544 = vshll.u32 %v3473, 16
        %v3546 = vrot.slane %v3544, 5
        %v3547 = vor.u32 %v3543, %v3546
        %v3548 = vsel %vm722, %v3538, %v3547
        %v3551 = vunpack.c.l.b16 %v3475
        %v3552 = vunpack.c.l.b16 %v3476
        %v3553 = vpack.c.b16 %v3552, %v3551
        %v3556 = vsel %vm2598, %v3485, 0
        %v3559 = vsel %vm2598, %v3494, 0
        %v3562 = vsel %vm2598, %v3503, 0
        %v3565 = vsel %vm2598, %v3512, 0
        %v3568 = vsel %vm2598, %v3521, 0
        %v3571 = vsel %vm2598, %v3530, 0
        %v3574 = vsel %vm2598, %v3539, 0
        %v3577 = vsel %vm2598, %v3548, 0
        %3579 = vmatprep.subr.bf16.mxu0 0
        %3580 = vmatpush1.bf16.msra.mxu0 %v3553
        %3581 = vmatprep.subr.bf16.mxu0 0
        %3582 = vmatpush1.bf16.msra.mxu0 0
        %3583 = vmatprep.subr.bf16.mxu0 0
        %3584 = vmatpush1.bf16.msra.mxu0 0
        %3585 = vmatprep.subr.bf16.mxu0 0
        %3586 = vmatpush1.bf16.msra.mxu0 0
        %3587 = vmatprep.subr.bf16.mxu0 0
        %3588 = vmatpush1.bf16.msra.mxu0 0
        %3589 = vmatprep.subr.bf16.mxu0 0
        %3590 = vmatpush1.bf16.msra.mxu0 0
        %3591 = vmatprep.subr.bf16.mxu0 0
        %3592 = vmatpush1.bf16.msra.mxu0 0
        %3593 = vmatprep.subr.bf16.mxu0 0
        %3594 = vmatpush1.bf16.msra.mxu0 0
        %3595 = vmatprep.subr.bf16.mxu0 0
        %3596 = vmatpush1.bf16.msra.mxu0 0
        %3597 = vmatprep.subr.bf16.mxu0 0
        %3598 = vmatpush1.bf16.msra.mxu0 0
        %3599 = vmatprep.subr.bf16.mxu0 0
        %3600 = vmatpush1.bf16.msra.mxu0 0
        %3601 = vmatprep.subr.bf16.mxu0 0
        %3602 = vmatpush1.bf16.msra.mxu0 0
        %3603 = vmatprep.subr.bf16.mxu0 0
        %3604 = vmatpush1.bf16.msra.mxu0 0
        %3605 = vmatprep.subr.bf16.mxu0 0
        %3606 = vmatpush1.bf16.msra.mxu0 0
        %3607 = vmatprep.subr.bf16.mxu0 0
        %3608 = vmatpush1.bf16.msra.mxu0 0
        %3609 = vmatprep.subr.bf16.mxu0 0
        %3610 = vmatpush1.bf16.msra.mxu0 0
        %3611 = vmatprep.mubr.bf16.mxu0 0
        %3612 = vmatmul.mubr.bf16.gmra.mrb[0].mxu0 %v3556
        %v3613 = vpop.f32.mrb[0].mxu0
        %v3614 = vadd.f32 0.0, %v3613
        %v3615 = vpop.f32.mrb[0].mxu0
        %v3616 = vpop.f32.mrb[0].mxu0
        %v3617 = vadd.f32 0.0, %v3616
        %v3618 = vpop.f32.mrb[0].mxu0
        %3619 = vmatprep.mubr.bf16.mxu0 0
        %3620 = vmatmul.mubr.bf16.gmra.mrb[0].mxu0 %v3559
        %v3621 = vpop.f32.mrb[0].mxu0
        %v3622 = vadd.f32 0.0, %v3621
        %v3623 = vpop.f32.mrb[0].mxu0
        %v3624 = vpop.f32.mrb[0].mxu0
        %v3625 = vadd.f32 0.0, %v3624
        %v3626 = vpop.f32.mrb[0].mxu0
        %3627 = vmatprep.mubr.bf16.mxu0 0
        %3628 = vmatmul.mubr.bf16.gmra.mrb[0].mxu0 %v3562
        %v3629 = vpop.f32.mrb[0].mxu0
        %v3630 = vadd.f32 0.0, %v3629
        %v3631 = vpop.f32.mrb[0].mxu0
        %v3632 = vpop.f32.mrb[0].mxu0
        %v3633 = vadd.f32 0.0, %v3632
        %v3634 = vpop.f32.mrb[0].mxu0
        %3635 = vmatprep.mubr.bf16.mxu0 0
        %3636 = vmatmul.mubr.bf16.gmra.mrb[0].mxu0 %v3565
        %v3637 = vpop.f32.mrb[0].mxu0
        %v3638 = vadd.f32 0.0, %v3637
        %v3639 = vpop.f32.mrb[0].mxu0
        %v3640 = vpop.f32.mrb[0].mxu0
        %v3641 = vadd.f32 0.0, %v3640
        %v3642 = vpop.f32.mrb[0].mxu0
        %3643 = vmatprep.mubr.bf16.mxu0 0
        %3644 = vmatmul.mubr.bf16.gmra.mrb[0].mxu0 %v3568
        %v3645 = vpop.f32.mrb[0].mxu0
        %v3646 = vadd.f32 0.0, %v3645
        %v3647 = vpop.f32.mrb[0].mxu0
        %v3648 = vpop.f32.mrb[0].mxu0
        %v3649 = vadd.f32 0.0, %v3648
        %v3650 = vpop.f32.mrb[0].mxu0
        %3651 = vmatprep.mubr.bf16.mxu0 0
        %3652 = vmatmul.mubr.bf16.gmra.mrb[0].mxu0 %v3571
        %v3653 = vpop.f32.mrb[0].mxu0
        %v3654 = vadd.f32 0.0, %v3653
        %v3655 = vpop.f32.mrb[0].mxu0
        %v3656 = vpop.f32.mrb[0].mxu0
        %v3657 = vadd.f32 0.0, %v3656
        %v3658 = vpop.f32.mrb[0].mxu0
        %3659 = vmatprep.mubr.bf16.mxu0 0
        %3660 = vmatmul.mubr.bf16.gmra.mrb[0].mxu0 %v3574
        %v3661 = vpop.f32.mrb[0].mxu0
        %v3662 = vadd.f32 0.0, %v3661
        %v3663 = vpop.f32.mrb[0].mxu0
        %v3664 = vpop.f32.mrb[0].mxu0
        %v3665 = vadd.f32 0.0, %v3664
        %v3666 = vpop.f32.mrb[0].mxu0
        %3667 = vmatprep.mubr.bf16.mxu0 0
        %3668 = vmatmul.mubr.bf16.gmra.mrb[0].mxu0 %v3577
        %v3669 = vpop.f32.mrb[0].mxu0
        %v3670 = vadd.f32 0.0, %v3669
        %v3671 = vpop.f32.mrb[0].mxu0
        %v3672 = vpop.f32.mrb[0].mxu0
        %v3673 = vadd.f32 0.0, %v3672
        %v3674 = vpop.f32.mrb[0].mxu0
        %3675 = vdwg.mxu0
        %v3676 = vadd.f32 %v3450, %v3614
        %v3677 = vadd.f32 %v3451, %v3617
        %v3678 = vadd.f32 %v3452, %v3622
        %v3679 = vadd.f32 %v3453, %v3625
        %v3680 = vadd.f32 %v3454, %v3630
        %v3681 = vadd.f32 %v3455, %v3633
        %v3682 = vadd.f32 %v3456, %v3638
        %v3683 = vadd.f32 %v3457, %v3641
        %v3684 = vadd.f32 %v3458, %v3646
        %v3685 = vadd.f32 %v3459, %v3649
        %v3686 = vadd.f32 %v3460, %v3654
        %v3687 = vadd.f32 %v3461, %v3657
        %v3688 = vadd.f32 %v3462, %v3662
        %v3689 = vadd.f32 %v3463, %v3665
        %v3690 = vadd.f32 %v3464, %v3670
        %v3691 = vadd.f32 %v3465, %v3673
        %s3692 = scalar_lea.vmem %s3, 56
        %v3693 = vld [vmem:[%s3692] sm:$0xf]
        %v3694 = vld [vmem:[%s3692 + $0x4] sm:$0xf]
        %v3695 = vrot.slane %v3481, 1
        %v3696 = vor.u32 %v3478, %v3695
        %v3697 = vrot.slane %v3490, 1
        %v3698 = vsel %vm2158, %v3696, %v3697
        %v3699 = vor.u32 %v3487, %v3697
        %v3700 = vrot.slane %v3499, 1
        %v3701 = vsel %vm2158, %v3699, %v3700
        %v3702 = vor.u32 %v3496, %v3700
        %v3703 = vrot.slane %v3508, 1
        %v3704 = vsel %vm2158, %v3702, %v3703
        %v3705 = vor.u32 %v3505, %v3703
        %v3706 = vrot.slane %v3517, 1
        %v3707 = vsel %vm2158, %v3705, %v3706
        %v3708 = vor.u32 %v3514, %v3706
        %v3709 = vrot.slane %v3526, 1
        %v3710 = vsel %vm2158, %v3708, %v3709
        %v3711 = vor.u32 %v3523, %v3709
        %v3712 = vrot.slane %v3535, 1
        %v3713 = vsel %vm2158, %v3711, %v3712
        %v3714 = vor.u32 %v3532, %v3712
        %v3715 = vrot.slane %v3544, 1
        %v3716 = vsel %vm2158, %v3714, %v3715
        %v3717 = vor.u32 %v3541, %v3715
        %v3718 = vsel %vm2158, %v3717, %v2182
        %v3721 = vunpack.c.l.b16 %v3693
        %v3722 = vunpack.c.l.b16 %v3694
        %v3723 = vpack.c.b16 %v3722, %v3721
        %v3726 = vsel %vm2598, %v3698, 0
        %v3729 = vsel %vm2598, %v3701, 0
        %v3732 = vsel %vm2598, %v3704, 0
        %v3735 = vsel %vm2598, %v3707, 0
        %v3738 = vsel %vm2598, %v3710, 0
        %v3741 = vsel %vm2598, %v3713, 0
        %v3744 = vsel %vm2598, %v3716, 0
        %v3747 = vsel %vm2598, %v3718, 0
        %3749 = vmatprep.subr.bf16.mxu0 0
        %3750 = vmatpush1.bf16.msra.mxu0 %v3723
        %3751 = vmatprep.subr.bf16.mxu0 0
        %3752 = vmatpush1.bf16.msra.mxu0 0
        %3753 = vmatprep.subr.bf16.mxu0 0
        %3754 = vmatpush1.bf16.msra.mxu0 0
        %3755 = vmatprep.subr.bf16.mxu0 0
        %3756 = vmatpush1.bf16.msra.mxu0 0
        %3757 = vmatprep.subr.bf16.mxu0 0
        %3758 = vmatpush1.bf16.msra.mxu0 0
        %3759 = vmatprep.subr.bf16.mxu0 0
        %3760 = vmatpush1.bf16.msra.mxu0 0
        %3761 = vmatprep.subr.bf16.mxu0 0
        %3762 = vmatpush1.bf16.msra.mxu0 0
        %3763 = vmatprep.subr.bf16.mxu0 0
        %3764 = vmatpush1.bf16.msra.mxu0 0
        %3765 = vmatprep.subr.bf16.mxu0 0
        %3766 = vmatpush1.bf16.msra.mxu0 0
        %3767 = vmatprep.subr.bf16.mxu0 0
        %3768 = vmatpush1.bf16.msra.mxu0 0
        %3769 = vmatprep.subr.bf16.mxu0 0
        %3770 = vmatpush1.bf16.msra.mxu0 0
        %3771 = vmatprep.subr.bf16.mxu0 0
        %3772 = vmatpush1.bf16.msra.mxu0 0
        %3773 = vmatprep.subr.bf16.mxu0 0
        %3774 = vmatpush1.bf16.msra.mxu0 0
        %3775 = vmatprep.subr.bf16.mxu0 0
        %3776 = vmatpush1.bf16.msra.mxu0 0
        %3777 = vmatprep.subr.bf16.mxu0 0
        %3778 = vmatpush1.bf16.msra.mxu0 0
        %3779 = vmatprep.subr.bf16.mxu0 0
        %3780 = vmatpush1.bf16.msra.mxu0 0
        %3781 = vmatprep.mubr.bf16.mxu0 0
        %3782 = vmatmul.mubr.bf16.gmra.mrb[0].mxu0 %v3726
        %v3783 = vpop.f32.mrb[0].mxu0
        %v3784 = vadd.f32 0.0, %v3783
        %v3785 = vpop.f32.mrb[0].mxu0
        %v3786 = vpop.f32.mrb[0].mxu0
        %v3787 = vadd.f32 0.0, %v3786
        %v3788 = vpop.f32.mrb[0].mxu0
        %3789 = vmatprep.mubr.bf16.mxu0 0
        %3790 = vmatmul.mubr.bf16.gmra.mrb[0].mxu0 %v3729
        %v3791 = vpop.f32.mrb[0].mxu0
        %v3792 = vadd.f32 0.0, %v3791
        %v3793 = vpop.f32.mrb[0].mxu0
        %v3794 = vpop.f32.mrb[0].mxu0
        %v3795 = vadd.f32 0.0, %v3794
        %v3796 = vpop.f32.mrb[0].mxu0
        %3797 = vmatprep.mubr.bf16.mxu0 0
        %3798 = vmatmul.mubr.bf16.gmra.mrb[0].mxu0 %v3732
        %v3799 = vpop.f32.mrb[0].mxu0
        %v3800 = vadd.f32 0.0, %v3799
        %v3801 = vpop.f32.mrb[0].mxu0
        %v3802 = vpop.f32.mrb[0].mxu0
        %v3803 = vadd.f32 0.0, %v3802
        %v3804 = vpop.f32.mrb[0].mxu0
        %3805 = vmatprep.mubr.bf16.mxu0 0
        %3806 = vmatmul.mubr.bf16.gmra.mrb[0].mxu0 %v3735
        %v3807 = vpop.f32.mrb[0].mxu0
        %v3808 = vadd.f32 0.0, %v3807
        %v3809 = vpop.f32.mrb[0].mxu0
        %v3810 = vpop.f32.mrb[0].mxu0
        %v3811 = vadd.f32 0.0, %v3810
        %v3812 = vpop.f32.mrb[0].mxu0
        %3813 = vmatprep.mubr.bf16.mxu0 0
        %3814 = vmatmul.mubr.bf16.gmra.mrb[0].mxu0 %v3738
        %v3815 = vpop.f32.mrb[0].mxu0
        %v3816 = vadd.f32 0.0, %v3815
        %v3817 = vpop.f32.mrb[0].mxu0
        %v3818 = vpop.f32.mrb[0].mxu0
        %v3819 = vadd.f32 0.0, %v3818
        %v3820 = vpop.f32.mrb[0].mxu0
        %3821 = vmatprep.mubr.bf16.mxu0 0
        %3822 = vmatmul.mubr.bf16.gmra.mrb[0].mxu0 %v3741
        %v3823 = vpop.f32.mrb[0].mxu0
        %v3824 = vadd.f32 0.0, %v3823
        %v3825 = vpop.f32.mrb[0].mxu0
        %v3826 = vpop.f32.mrb[0].mxu0
        %v3827 = vadd.f32 0.0, %v3826
        %v3828 = vpop.f32.mrb[0].mxu0
        %3829 = vmatprep.mubr.bf16.mxu0 0
        %3830 = vmatmul.mubr.bf16.gmra.mrb[0].mxu0 %v3744
        %v3831 = vpop.f32.mrb[0].mxu0
        %v3832 = vadd.f32 0.0, %v3831
        %v3833 = vpop.f32.mrb[0].mxu0
        %v3834 = vpop.f32.mrb[0].mxu0
        %v3835 = vadd.f32 0.0, %v3834
        %v3836 = vpop.f32.mrb[0].mxu0
        %3837 = vmatprep.mubr.bf16.mxu0 0
        %3838 = vmatmul.mubr.bf16.gmra.mrb[0].mxu0 %v3747
        %v3839 = vpop.f32.mrb[0].mxu0
        %v3840 = vadd.f32 0.0, %v3839
        %v3841 = vpop.f32.mrb[0].mxu0
        %v3842 = vpop.f32.mrb[0].mxu0
        %v3843 = vadd.f32 0.0, %v3842
        %v3844 = vpop.f32.mrb[0].mxu0
        %3845 = vdwg.mxu0
        %v3846 = vadd.f32 %v3676, %v3784
        %v3847 = vadd.f32 %v3677, %v3787
        %v3848 = vadd.f32 %v3678, %v3792
        %v3849 = vadd.f32 %v3679, %v3795
        %v3850 = vadd.f32 %v3680, %v3800
        %v3851 = vadd.f32 %v3681, %v3803
        %v3852 = vadd.f32 %v3682, %v3808
        %v3853 = vadd.f32 %v3683, %v3811
        %v3854 = vadd.f32 %v3684, %v3816
        %v3855 = vadd.f32 %v3685, %v3819
        %v3856 = vadd.f32 %v3686, %v3824
        %v3857 = vadd.f32 %v3687, %v3827
        %v3858 = vadd.f32 %v3688, %v3832
        %v3859 = vadd.f32 %v3689, %v3835
        %v3860 = vadd.f32 %v3690, %v3840
        %v3861 = vadd.f32 %v3691, %v3843
        %s3862 = scalar_lea.vmem %s3, 64
        %v3863 = vld [vmem:[%s3862] sm:$0xf]
        %v3864 = vld [vmem:[%s3862 + $0x4] sm:$0xf]
        %v3865 = vsel %vm722, %v3547, %v1943
        %v3868 = vunpack.c.l.b16 %v3863
        %v3869 = vunpack.c.l.b16 %v3864
        %v3870 = vpack.c.b16 %v3869, %v3868
        %v3873 = vsel %vm2598, %v3865, 0
        %3875 = vmatprep.subr.bf16.mxu0 0
        %3876 = vmatpush1.bf16.msra.mxu0 %v3870
        %3877 = vmatprep.subr.bf16.mxu0 0
        %3878 = vmatpush1.bf16.msra.mxu0 0
        %3879 = vmatprep.subr.bf16.mxu0 0
        %3880 = vmatpush1.bf16.msra.mxu0 0
        %3881 = vmatprep.subr.bf16.mxu0 0
        %3882 = vmatpush1.bf16.msra.mxu0 0
        %3883 = vmatprep.subr.bf16.mxu0 0
        %3884 = vmatpush1.bf16.msra.mxu0 0
        %3885 = vmatprep.subr.bf16.mxu0 0
        %3886 = vmatpush1.bf16.msra.mxu0 0
        %3887 = vmatprep.subr.bf16.mxu0 0
        %3888 = vmatpush1.bf16.msra.mxu0 0
        %3889 = vmatprep.subr.bf16.mxu0 0
        %3890 = vmatpush1.bf16.msra.mxu0 0
        %3891 = vmatprep.subr.bf16.mxu0 0
        %3892 = vmatpush1.bf16.msra.mxu0 0
        %3893 = vmatprep.subr.bf16.mxu0 0
        %3894 = vmatpush1.bf16.msra.mxu0 0
        %3895 = vmatprep.subr.bf16.mxu0 0
        %3896 = vmatpush1.bf16.msra.mxu0 0
        %3897 = vmatprep.subr.bf16.mxu0 0
        %3898 = vmatpush1.bf16.msra.mxu0 0
        %3899 = vmatprep.subr.bf16.mxu0 0
        %3900 = vmatpush1.bf16.msra.mxu0 0
        %3901 = vmatprep.subr.bf16.mxu0 0
        %3902 = vmatpush1.bf16.msra.mxu0 0
        %3903 = vmatprep.subr.bf16.mxu0 0
        %3904 = vmatpush1.bf16.msra.mxu0 0
        %3905 = vmatprep.subr.bf16.mxu0 0
        %3906 = vmatpush1.bf16.msra.mxu0 0
        %3907 = vmatprep.mubr.bf16.mxu0 0
        %3908 = vmatmul.mubr.bf16.gmra.mrb[0].mxu0 %v3559
        %v3909 = vpop.f32.mrb[0].mxu0
        %v3910 = vadd.f32 0.0, %v3909
        %v3911 = vpop.f32.mrb[0].mxu0
        %v3912 = vpop.f32.mrb[0].mxu0
        %v3913 = vadd.f32 0.0, %v3912
        %v3914 = vpop.f32.mrb[0].mxu0
        %3915 = vmatprep.mubr.bf16.mxu0 0
        %3916 = vmatmul.mubr.bf16.gmra.mrb[0].mxu0 %v3562
        %v3917 = vpop.f32.mrb[0].mxu0
        %v3918 = vadd.f32 0.0, %v3917
        %v3919 = vpop.f32.mrb[0].mxu0
        %v3920 = vpop.f32.mrb[0].mxu0
        %v3921 = vadd.f32 0.0, %v3920
        %v3922 = vpop.f32.mrb[0].mxu0
        %3923 = vmatprep.mubr.bf16.mxu0 0
        %3924 = vmatmul.mubr.bf16.gmra.mrb[0].mxu0 %v3565
        %v3925 = vpop.f32.mrb[0].mxu0
        %v3926 = vadd.f32 0.0, %v3925
        %v3927 = vpop.f32.mrb[0].mxu0
        %v3928 = vpop.f32.mrb[0].mxu0
        %v3929 = vadd.f32 0.0, %v3928
        %v3930 = vpop.f32.mrb[0].mxu0
        %3931 = vmatprep.mubr.bf16.mxu0 0
        %3932 = vmatmul.mubr.bf16.gmra.mrb[0].mxu0 %v3568
        %v3933 = vpop.f32.mrb[0].mxu0
        %v3934 = vadd.f32 0.0, %v3933
        %v3935 = vpop.f32.mrb[0].mxu0
        %v3936 = vpop.f32.mrb[0].mxu0
        %v3937 = vadd.f32 0.0, %v3936
        %v3938 = vpop.f32.mrb[0].mxu0
        %3939 = vmatprep.mubr.bf16.mxu0 0
        %3940 = vmatmul.mubr.bf16.gmra.mrb[0].mxu0 %v3571
        %v3941 = vpop.f32.mrb[0].mxu0
        %v3942 = vadd.f32 0.0, %v3941
        %v3943 = vpop.f32.mrb[0].mxu0
        %v3944 = vpop.f32.mrb[0].mxu0
        %v3945 = vadd.f32 0.0, %v3944
        %v3946 = vpop.f32.mrb[0].mxu0
        %3947 = vmatprep.mubr.bf16.mxu0 0
        %3948 = vmatmul.mubr.bf16.gmra.mrb[0].mxu0 %v3574
        %v3949 = vpop.f32.mrb[0].mxu0
        %v3950 = vadd.f32 0.0, %v3949
        %v3951 = vpop.f32.mrb[0].mxu0
        %v3952 = vpop.f32.mrb[0].mxu0
        %v3953 = vadd.f32 0.0, %v3952
        %v3954 = vpop.f32.mrb[0].mxu0
        %3955 = vmatprep.mubr.bf16.mxu0 0
        %3956 = vmatmul.mubr.bf16.gmra.mrb[0].mxu0 %v3577
        %v3957 = vpop.f32.mrb[0].mxu0
        %v3958 = vadd.f32 0.0, %v3957
        %v3959 = vpop.f32.mrb[0].mxu0
        %v3960 = vpop.f32.mrb[0].mxu0
        %v3961 = vadd.f32 0.0, %v3960
        %v3962 = vpop.f32.mrb[0].mxu0
        %3963 = vmatprep.mubr.bf16.mxu0 0
        %3964 = vmatmul.mubr.bf16.gmra.mrb[0].mxu0 %v3873
        %v3965 = vpop.f32.mrb[0].mxu0
        %v3966 = vadd.f32 0.0, %v3965
        %v3967 = vpop.f32.mrb[0].mxu0
        %v3968 = vpop.f32.mrb[0].mxu0
        %v3969 = vadd.f32 0.0, %v3968
        %v3970 = vpop.f32.mrb[0].mxu0
        %3971 = vdwg.mxu0
        %v3972 = vadd.f32 %v3846, %v3910
        %v3973 = vadd.f32 %v3847, %v3913
        %v3974 = vadd.f32 %v3848, %v3918
        %v3975 = vadd.f32 %v3849, %v3921
        %v3976 = vadd.f32 %v3850, %v3926
        %v3977 = vadd.f32 %v3851, %v3929
        %v3978 = vadd.f32 %v3852, %v3934
        %v3979 = vadd.f32 %v3853, %v3937
        %v3980 = vadd.f32 %v3854, %v3942
        %v3981 = vadd.f32 %v3855, %v3945
        %v3982 = vadd.f32 %v3856, %v3950
        %v3983 = vadd.f32 %v3857, %v3953
        %v3984 = vadd.f32 %v3858, %v3958
        %v3985 = vadd.f32 %v3859, %v3961
        %v3986 = vadd.f32 %v3860, %v3966
        %v3987 = vadd.f32 %v3861, %v3969
        %v3988 = vld [vmem:[%s4] sm:$0x1]
        %v3990 = vlaneseq
        %v3991 = vshrl.u32 %v3990, 7
        %v3992 = vsub.s32 0, %v3991
        %v3993 = vrot.slane %v3988, %v3992
        %v3995 = vadd.f32 %v3972, %v3993
        %v3996 = vadd.f32 %v3973, %v3993
        %v3997 = vadd.f32 %v3974, %v3993
        %v3998 = vadd.f32 %v3975, %v3993
        %v3999 = vadd.f32 %v3976, %v3993
        %v4000 = vadd.f32 %v3977, %v3993
        %v4001 = vadd.f32 %v3978, %v3993
        %v4002 = vadd.f32 %v3979, %v3993
        %v4003 = vadd.f32 %v3980, %v3993
        %v4004 = vadd.f32 %v3981, %v3993
        %v4005 = vadd.f32 %v3982, %v3993
        %v4006 = vadd.f32 %v3983, %v3993
        %v4007 = vadd.f32 %v3984, %v3993
        %v4008 = vadd.f32 %v3985, %v3993
        %v4009 = vadd.f32 %v3986, %v3993
        %v4010 = vadd.f32 %v3987, %v3993
        %v4011 = vmax.f32 %v3995, 0.0
        %v4012 = vmax.f32 %v3996, 0.0
        %v4013 = vmax.f32 %v3997, 0.0
        %v4014 = vmax.f32 %v3998, 0.0
        %v4015 = vmax.f32 %v3999, 0.0
        %v4016 = vmax.f32 %v4000, 0.0
        %v4017 = vmax.f32 %v4001, 0.0
        %v4018 = vmax.f32 %v4002, 0.0
        %v4019 = vmax.f32 %v4003, 0.0
        %v4020 = vmax.f32 %v4004, 0.0
        %v4021 = vmax.f32 %v4005, 0.0
        %v4022 = vmax.f32 %v4006, 0.0
        %v4023 = vmax.f32 %v4007, 0.0
        %v4024 = vmax.f32 %v4008, 0.0
        %v4025 = vmax.f32 %v4009, 0.0
        %v4026 = vmax.f32 %v4010, 0.0
        %v4027 = vpack.c.bf16 %v4012, %v4011
        %v4028 = vpack.c.bf16 %v4014, %v4013
        %v4029 = vpack.c.bf16 %v4016, %v4015
        %v4030 = vpack.c.bf16 %v4018, %v4017
        %v4031 = vpack.c.bf16 %v4020, %v4019
        %v4032 = vpack.c.bf16 %v4022, %v4021
        %v4033 = vpack.c.bf16 %v4024, %v4023
        %v4034 = vpack.c.bf16 %v4026, %v4025
        %v4035 = vsel %vm803, 0, %v4027
        %v4036 = vsel %vm804, 0, %v4028
        %v4037 = vsel %vm805, 0, %v4029
        %v4038 = vsel %vm806, 0, %v4030
        %v4039 = vsel %vm807, 0, %v4031
        %v4040 = vsel %vm808, 0, %v4032
        %v4041 = vsel %vm809, 0, %v4033
        %v4042 = vsel %vm810, 0, %v4034
        %v4043 = vld [vmem:[#allocation5] sm:$0xf]
        %v4044 = vld [vmem:[#allocation5 + $0x4] sm:$0xf]
        %v4045 = vld [vmem:[#allocation5 + $0x8] sm:$0xf]
        %v4046 = vld [vmem:[#allocation5 + $0xc] sm:$0xf]
        %v4047 = vld [vmem:[#allocation5 + $0x10] sm:$0xf]
        %v4048 = vld [vmem:[#allocation5 + $0x14] sm:$0xf]
        %v4049 = vld [vmem:[#allocation5 + $0x18] sm:$0xf]
        %v4050 = vld [vmem:[#allocation5 + $0x1c] sm:$0xf]
        %v4051 = vld [vmem:[#allocation5 + $0x20] sm:$0xf]
        %v4052 = vld [vmem:[#allocation5 + $0x24] sm:$0xf]
        %v4053 = vld [vmem:[#allocation5 + $0x28] sm:$0xf]
        %v4054 = vld [vmem:[#allocation5 + $0x2c] sm:$0xf]
        %v4055 = vld [vmem:[#allocation5 + $0x30] sm:$0xf]
        %v4056 = vld [vmem:[#allocation5 + $0x34] sm:$0xf]
        %v4057 = vld [vmem:[#allocation5 + $0x38] sm:$0xf]
        %v4058 = vld [vmem:[#allocation5 + $0x3c] sm:$0xf]
        %s4059 = scalar_lea.vmem [#allocation5], 64
        %v4060 = vld [vmem:[%s4059] sm:$0xf]
        %v4061 = vld [vmem:[%s4059 + $0x4] sm:$0xf]
        %v4062 = vld [vmem:[%s4059 + $0x8] sm:$0xf]
        %v4063 = vld [vmem:[%s4059 + $0xc] sm:$0xf]
        %v4064 = vld [vmem:[%s4059 + $0x10] sm:$0xf]
        %v4065 = vld [vmem:[%s4059 + $0x14] sm:$0xf]
        %v4066 = vld [vmem:[%s4059 + $0x18] sm:$0xf]
        %v4067 = vld [vmem:[%s4059 + $0x1c] sm:$0xf]
        %v4068 = vld [vmem:[%s4059 + $0x20] sm:$0xf]
        %v4069 = vld [vmem:[%s4059 + $0x24] sm:$0xf]
        %v4070 = vld [vmem:[%s4059 + $0x28] sm:$0xf]
        %v4071 = vld [vmem:[%s4059 + $0x2c] sm:$0xf]
        %v4072 = vld [vmem:[%s4059 + $0x30] sm:$0xf]
        %v4073 = vld [vmem:[%s4059 + $0x34] sm:$0xf]
        %v4074 = vld [vmem:[%s4059 + $0x38] sm:$0xf]
        %v4075 = vld [vmem:[%s4059 + $0x3c] sm:$0xf]
        %v4077 = vshrl.u32 %v4035, 16
        %v4079 = vrot.slane %v4077, 7
        %v4080 = vshll.u32 %v4035, 16
        %v4082 = vor.u32 %v4079, %v4080
        %v4083 = vsel %vm822, %v826, %v4082
        %v4085 = vshrl.u32 %v4036, 16
        %v4087 = vrot.slane %v4085, 7
        %v4088 = vshll.u32 %v4036, 16
        %v4090 = vor.u32 %v4087, %v4088
        %v4091 = vsel %vm822, %v4079, %v4090
        %v4093 = vshrl.u32 %v4037, 16
        %v4095 = vrot.slane %v4093, 7
        %v4096 = vshll.u32 %v4037, 16
        %v4098 = vor.u32 %v4095, %v4096
        %v4099 = vsel %vm822, %v4087, %v4098
        %v4101 = vshrl.u32 %v4038, 16
        %v4103 = vrot.slane %v4101, 7
        %v4104 = vshll.u32 %v4038, 16
        %v4106 = vor.u32 %v4103, %v4104
        %v4107 = vsel %vm822, %v4095, %v4106
        %v4109 = vshrl.u32 %v4039, 16
        %v4111 = vrot.slane %v4109, 7
        %v4112 = vshll.u32 %v4039, 16
        %v4114 = vor.u32 %v4111, %v4112
        %v4115 = vsel %vm822, %v4103, %v4114
        %v4117 = vshrl.u32 %v4040, 16
        %v4119 = vrot.slane %v4117, 7
        %v4120 = vshll.u32 %v4040, 16
        %v4122 = vor.u32 %v4119, %v4120
        %v4123 = vsel %vm822, %v4111, %v4122
        %v4125 = vshrl.u32 %v4041, 16
        %v4127 = vrot.slane %v4125, 7
        %v4128 = vshll.u32 %v4041, 16
        %v4130 = vor.u32 %v4127, %v4128
        %v4131 = vsel %vm822, %v4119, %v4130
        %v4133 = vshrl.u32 %v4042, 16
        %v4135 = vrot.slane %v4133, 7
        %v4136 = vshll.u32 %v4042, 16
        %v4138 = vor.u32 %v4135, %v4136
        %v4139 = vsel %vm822, %v4127, %v4138
        %v4164 = vunpack.c.l.b16 %v4060
        %v4165 = vunpack.c.l.b16 %v4061
        %v4166 = vunpack.c.l.b16 %v4062
        %v4167 = vunpack.c.l.b16 %v4063
        %v4168 = vunpack.c.l.b16 %v4064
        %v4169 = vunpack.c.l.b16 %v4065
        %v4170 = vunpack.c.l.b16 %v4066
        %v4171 = vunpack.c.l.b16 %v4067
        %v4172 = vunpack.c.l.b16 %v4068
        %v4173 = vunpack.c.l.b16 %v4069
        %v4174 = vunpack.c.l.b16 %v4070
        %v4175 = vunpack.c.l.b16 %v4071
        %v4176 = vunpack.c.l.b16 %v4072
        %v4177 = vunpack.c.l.b16 %v4073
        %v4178 = vunpack.c.l.b16 %v4074
        %v4179 = vunpack.c.l.b16 %v4075
        %v4180 = vpack.c.b16 %v4165, %v4164
        %v4181 = vpack.c.b16 %v4167, %v4166
        %v4182 = vpack.c.b16 %v4169, %v4168
        %v4183 = vpack.c.b16 %v4171, %v4170
        %v4184 = vpack.c.b16 %v4173, %v4172
        %v4185 = vpack.c.b16 %v4175, %v4174
        %v4186 = vpack.c.b16 %v4177, %v4176
        %v4187 = vpack.c.b16 %v4179, %v4178
        %4196 = vmatprep.subr.bf16.mxu0 0
        %4197 = vmatpush1.bf16.msra.mxu0 %v4180
        %4198 = vmatprep.subr.bf16.mxu0 0
        %4199 = vmatpush1.bf16.msra.mxu0 %v4181
        %4200 = vmatprep.subr.bf16.mxu0 0
        %4201 = vmatpush1.bf16.msra.mxu0 %v4182
        %4202 = vmatprep.subr.bf16.mxu0 0
        %4203 = vmatpush1.bf16.msra.mxu0 %v4183
        %4204 = vmatprep.subr.bf16.mxu0 0
        %4205 = vmatpush1.bf16.msra.mxu0 %v4184
        %4206 = vmatprep.subr.bf16.mxu0 0
        %4207 = vmatpush1.bf16.msra.mxu0 %v4185
        %4208 = vmatprep.subr.bf16.mxu0 0
        %4209 = vmatpush1.bf16.msra.mxu0 %v4186
        %4210 = vmatprep.subr.bf16.mxu0 0
        %4211 = vmatpush1.bf16.msra.mxu0 %v4187
        %4212 = vmatprep.subr.bf16.mxu0 0
        %4213 = vmatpush1.bf16.msra.mxu0 0
        %4214 = vmatprep.subr.bf16.mxu0 0
        %4215 = vmatpush1.bf16.msra.mxu0 0
        %4216 = vmatprep.subr.bf16.mxu0 0
        %4217 = vmatpush1.bf16.msra.mxu0 0
        %4218 = vmatprep.subr.bf16.mxu0 0
        %4219 = vmatpush1.bf16.msra.mxu0 0
        %4220 = vmatprep.subr.bf16.mxu0 0
        %4221 = vmatpush1.bf16.msra.mxu0 0
        %4222 = vmatprep.subr.bf16.mxu0 0
        %4223 = vmatpush1.bf16.msra.mxu0 0
        %4224 = vmatprep.subr.bf16.mxu0 0
        %4225 = vmatpush1.bf16.msra.mxu0 0
        %4226 = vmatprep.subr.bf16.mxu0 0
        %4227 = vmatpush1.bf16.msra.mxu0 0
        %4228 = vmatprep.mubr.bf16.mxu0 0
        %4229 = vmatmul.mubr.bf16.gmra.mrb[0].mxu0 %v4083
        %v4230 = vpop.f32.mrb[0].mxu0
        %v4231 = vadd.f32 0.0, %v4230
        %v4232 = vpop.f32.mrb[0].mxu0
        %v4233 = vpop.f32.mrb[0].mxu0
        %v4234 = vadd.f32 0.0, %v4233
        %v4235 = vpop.f32.mrb[0].mxu0
        %4236 = vmatprep.mubr.bf16.mxu0 0
        %4237 = vmatmul.mubr.bf16.gmra.mrb[0].mxu0 %v4091
        %v4238 = vpop.f32.mrb[0].mxu0
        %v4239 = vadd.f32 0.0, %v4238
        %v4240 = vpop.f32.mrb[0].mxu0
        %v4241 = vpop.f32.mrb[0].mxu0
        %v4242 = vadd.f32 0.0, %v4241
        %v4243 = vpop.f32.mrb[0].mxu0
        %4244 = vmatprep.mubr.bf16.mxu0 0
        %4245 = vmatmul.mubr.bf16.gmra.mrb[0].mxu0 %v4099
        %v4246 = vpop.f32.mrb[0].mxu0
        %v4247 = vadd.f32 0.0, %v4246
        %v4248 = vpop.f32.mrb[0].mxu0
        %v4249 = vpop.f32.mrb[0].mxu0
        %v4250 = vadd.f32 0.0, %v4249
        %v4251 = vpop.f32.mrb[0].mxu0
        %4252 = vmatprep.mubr.bf16.mxu0 0
        %4253 = vmatmul.mubr.bf16.gmra.mrb[0].mxu0 %v4107
        %v4254 = vpop.f32.mrb[0].mxu0
        %v4255 = vadd.f32 0.0, %v4254
        %v4256 = vpop.f32.mrb[0].mxu0
        %v4257 = vpop.f32.mrb[0].mxu0
        %v4258 = vadd.f32 0.0, %v4257
        %v4259 = vpop.f32.mrb[0].mxu0
        %4260 = vmatprep.mubr.bf16.mxu0 0
        %4261 = vmatmul.mubr.bf16.gmra.mrb[0].mxu0 %v4115
        %v4262 = vpop.f32.mrb[0].mxu0
        %v4263 = vadd.f32 0.0, %v4262
        %v4264 = vpop.f32.mrb[0].mxu0
        %v4265 = vpop.f32.mrb[0].mxu0
        %v4266 = vadd.f32 0.0, %v4265
        %v4267 = vpop.f32.mrb[0].mxu0
        %4268 = vmatprep.mubr.bf16.mxu0 0
        %4269 = vmatmul.mubr.bf16.gmra.mrb[0].mxu0 %v4123
        %v4270 = vpop.f32.mrb[0].mxu0
        %v4271 = vadd.f32 0.0, %v4270
        %v4272 = vpop.f32.mrb[0].mxu0
        %v4273 = vpop.f32.mrb[0].mxu0
        %v4274 = vadd.f32 0.0, %v4273
        %v4275 = vpop.f32.mrb[0].mxu0
        %4276 = vmatprep.mubr.bf16.mxu0 0
        %4277 = vmatmul.mubr.bf16.gmra.mrb[0].mxu0 %v4131
        %v4278 = vpop.f32.mrb[0].mxu0
        %v4279 = vadd.f32 0.0, %v4278
        %v4280 = vpop.f32.mrb[0].mxu0
        %v4281 = vpop.f32.mrb[0].mxu0
        %v4282 = vadd.f32 0.0, %v4281
        %v4283 = vpop.f32.mrb[0].mxu0
        %4284 = vmatprep.mubr.bf16.mxu0 0
        %4285 = vmatmul.mubr.bf16.gmra.mrb[0].mxu0 %v4139
        %v4286 = vpop.f32.mrb[0].mxu0
        %v4287 = vadd.f32 0.0, %v4286
        %v4288 = vpop.f32.mrb[0].mxu0
        %v4289 = vpop.f32.mrb[0].mxu0
        %v4290 = vadd.f32 0.0, %v4289
        %v4291 = vpop.f32.mrb[0].mxu0
        %4292 = vdwg.mxu0
        %v4293 = vrot.slane %v4077, 3
        %v4294 = vrot.slane %v4080, 4
        %v4295 = vor.u32 %v4293, %v4294
        %v4296 = vsel %vm1017, %v1022, %v4295
        %v4297 = vrot.slane %v4085, 3
        %v4298 = vrot.slane %v4088, 4
        %v4299 = vor.u32 %v4297, %v4298
        %v4300 = vsel %vm1017, %v4295, %v4299
        %v4301 = vrot.slane %v4093, 3
        %v4302 = vrot.slane %v4096, 4
        %v4303 = vor.u32 %v4301, %v4302
        %v4304 = vsel %vm1017, %v4299, %v4303
        %v4305 = vrot.slane %v4101, 3
        %v4306 = vrot.slane %v4104, 4
        %v4307 = vor.u32 %v4305, %v4306
        %v4308 = vsel %vm1017, %v4303, %v4307
        %v4309 = vrot.slane %v4109, 3
        %v4310 = vrot.slane %v4112, 4
        %v4311 = vor.u32 %v4309, %v4310
        %v4312 = vsel %vm1017, %v4307, %v4311
        %v4313 = vrot.slane %v4117, 3
        %v4314 = vrot.slane %v4120, 4
        %v4315 = vor.u32 %v4313, %v4314
        %v4316 = vsel %vm1017, %v4311, %v4315
        %v4317 = vrot.slane %v4125, 3
        %v4318 = vrot.slane %v4128, 4
        %v4319 = vor.u32 %v4317, %v4318
        %v4320 = vsel %vm1017, %v4315, %v4319
        %v4321 = vrot.slane %v4133, 3
        %v4322 = vrot.slane %v4136, 4
        %v4323 = vor.u32 %v4321, %v4322
        %v4324 = vsel %vm1017, %v4319, %v4323
        %v4349 = vunpack.c.l.b16 %v4043
        %v4350 = vunpack.c.l.b16 %v4044
        %v4351 = vunpack.c.l.b16 %v4045
        %v4352 = vunpack.c.l.b16 %v4046
        %v4353 = vunpack.c.l.b16 %v4047
        %v4354 = vunpack.c.l.b16 %v4048
        %v4355 = vunpack.c.l.b16 %v4049
        %v4356 = vunpack.c.l.b16 %v4050
        %v4357 = vunpack.c.l.b16 %v4051
        %v4358 = vunpack.c.l.b16 %v4052
        %v4359 = vunpack.c.l.b16 %v4053
        %v4360 = vunpack.c.l.b16 %v4054
        %v4361 = vunpack.c.l.b16 %v4055
        %v4362 = vunpack.c.l.b16 %v4056
        %v4363 = vunpack.c.l.b16 %v4057
        %v4364 = vunpack.c.l.b16 %v4058
        %v4365 = vpack.c.b16 %v4350, %v4349
        %v4366 = vpack.c.b16 %v4352, %v4351
        %v4367 = vpack.c.b16 %v4354, %v4353
        %v4368 = vpack.c.b16 %v4356, %v4355
        %v4369 = vpack.c.b16 %v4358, %v4357
        %v4370 = vpack.c.b16 %v4360, %v4359
        %v4371 = vpack.c.b16 %v4362, %v4361
        %v4372 = vpack.c.b16 %v4364, %v4363
        %4381 = vmatprep.subr.bf16.mxu0 0
        %4382 = vmatpush1.bf16.msra.mxu0 %v4365
        %4383 = vmatprep.subr.bf16.mxu0 0
        %4384 = vmatpush1.bf16.msra.mxu0 %v4366
        %4385 = vmatprep.subr.bf16.mxu0 0
        %4386 = vmatpush1.bf16.msra.mxu0 %v4367
        %4387 = vmatprep.subr.bf16.mxu0 0
        %4388 = vmatpush1.bf16.msra.mxu0 %v4368
        %4389 = vmatprep.subr.bf16.mxu0 0
        %4390 = vmatpush1.bf16.msra.mxu0 %v4369
        %4391 = vmatprep.subr.bf16.mxu0 0
        %4392 = vmatpush1.bf16.msra.mxu0 %v4370
        %4393 = vmatprep.subr.bf16.mxu0 0
        %4394 = vmatpush1.bf16.msra.mxu0 %v4371
        %4395 = vmatprep.subr.bf16.mxu0 0
        %4396 = vmatpush1.bf16.msra.mxu0 %v4372
        %4397 = vmatprep.subr.bf16.mxu0 0
        %4398 = vmatpush1.bf16.msra.mxu0 0
        %4399 = vmatprep.subr.bf16.mxu0 0
        %4400 = vmatpush1.bf16.msra.mxu0 0
        %4401 = vmatprep.subr.bf16.mxu0 0
        %4402 = vmatpush1.bf16.msra.mxu0 0
        %4403 = vmatprep.subr.bf16.mxu0 0
        %4404 = vmatpush1.bf16.msra.mxu0 0
        %4405 = vmatprep.subr.bf16.mxu0 0
        %4406 = vmatpush1.bf16.msra.mxu0 0
        %4407 = vmatprep.subr.bf16.mxu0 0
        %4408 = vmatpush1.bf16.msra.mxu0 0
        %4409 = vmatprep.subr.bf16.mxu0 0
        %4410 = vmatpush1.bf16.msra.mxu0 0
        %4411 = vmatprep.subr.bf16.mxu0 0
        %4412 = vmatpush1.bf16.msra.mxu0 0
        %4413 = vmatprep.mubr.bf16.mxu0 0
        %4414 = vmatmul.mubr.bf16.gmra.mrb[0].mxu0 %v4296
        %v4415 = vpop.f32.mrb[0].mxu0
        %v4416 = vadd.f32 %v4231, %v4415
        %v4417 = vpop.f32.mrb[0].mxu0
        %v4418 = vpop.f32.mrb[0].mxu0
        %v4419 = vadd.f32 %v4234, %v4418
        %v4420 = vpop.f32.mrb[0].mxu0
        %4421 = vmatprep.mubr.bf16.mxu0 0
        %4422 = vmatmul.mubr.bf16.gmra.mrb[0].mxu0 %v4300
        %v4423 = vpop.f32.mrb[0].mxu0
        %v4424 = vadd.f32 %v4239, %v4423
        %v4425 = vpop.f32.mrb[0].mxu0
        %v4426 = vpop.f32.mrb[0].mxu0
        %v4427 = vadd.f32 %v4242, %v4426
        %v4428 = vpop.f32.mrb[0].mxu0
        %4429 = vmatprep.mubr.bf16.mxu0 0
        %4430 = vmatmul.mubr.bf16.gmra.mrb[0].mxu0 %v4304
        %v4431 = vpop.f32.mrb[0].mxu0
        %v4432 = vadd.f32 %v4247, %v4431
        %v4433 = vpop.f32.mrb[0].mxu0
        %v4434 = vpop.f32.mrb[0].mxu0
        %v4435 = vadd.f32 %v4250, %v4434
        %v4436 = vpop.f32.mrb[0].mxu0
        %4437 = vmatprep.mubr.bf16.mxu0 0
        %4438 = vmatmul.mubr.bf16.gmra.mrb[0].mxu0 %v4308
        %v4439 = vpop.f32.mrb[0].mxu0
        %v4440 = vadd.f32 %v4255, %v4439
        %v4441 = vpop.f32.mrb[0].mxu0
        %v4442 = vpop.f32.mrb[0].mxu0
        %v4443 = vadd.f32 %v4258, %v4442
        %v4444 = vpop.f32.mrb[0].mxu0
        %4445 = vmatprep.mubr.bf16.mxu0 0
        %4446 = vmatmul.mubr.bf16.gmra.mrb[0].mxu0 %v4312
        %v4447 = vpop.f32.mrb[0].mxu0
        %v4448 = vadd.f32 %v4263, %v4447
        %v4449 = vpop.f32.mrb[0].mxu0
        %v4450 = vpop.f32.mrb[0].mxu0
        %v4451 = vadd.f32 %v4266, %v4450
        %v4452 = vpop.f32.mrb[0].mxu0
        %4453 = vmatprep.mubr.bf16.mxu0 0
        %4454 = vmatmul.mubr.bf16.gmra.mrb[0].mxu0 %v4316
        %v4455 = vpop.f32.mrb[0].mxu0
        %v4456 = vadd.f32 %v4271, %v4455
        %v4457 = vpop.f32.mrb[0].mxu0
        %v4458 = vpop.f32.mrb[0].mxu0
        %v4459 = vadd.f32 %v4274, %v4458
        %v4460 = vpop.f32.mrb[0].mxu0
        %4461 = vmatprep.mubr.bf16.mxu0 0
        %4462 = vmatmul.mubr.bf16.gmra.mrb[0].mxu0 %v4320
        %v4463 = vpop.f32.mrb[0].mxu0
        %v4464 = vadd.f32 %v4279, %v4463
        %v4465 = vpop.f32.mrb[0].mxu0
        %v4466 = vpop.f32.mrb[0].mxu0
        %v4467 = vadd.f32 %v4282, %v4466
        %v4468 = vpop.f32.mrb[0].mxu0
        %4469 = vmatprep.mubr.bf16.mxu0 0
        %4470 = vmatmul.mubr.bf16.gmra.mrb[0].mxu0 %v4324
        %v4471 = vpop.f32.mrb[0].mxu0
        %v4472 = vadd.f32 %v4287, %v4471
        %v4473 = vpop.f32.mrb[0].mxu0
        %v4474 = vpop.f32.mrb[0].mxu0
        %v4475 = vadd.f32 %v4290, %v4474
        %v4476 = vpop.f32.mrb[0].mxu0
        %4477 = vdwg.mxu0
        %s4478 = scalar_lea.vmem [#allocation5], 128
        %v4479 = vld [vmem:[%s4478] sm:$0xf]
        %v4480 = vld [vmem:[%s4478 + $0x4] sm:$0xf]
        %v4481 = vld [vmem:[%s4478 + $0x8] sm:$0xf]
        %v4482 = vld [vmem:[%s4478 + $0xc] sm:$0xf]
        %v4483 = vld [vmem:[%s4478 + $0x10] sm:$0xf]
        %v4484 = vld [vmem:[%s4478 + $0x14] sm:$0xf]
        %v4485 = vld [vmem:[%s4478 + $0x18] sm:$0xf]
        %v4486 = vld [vmem:[%s4478 + $0x1c] sm:$0xf]
        %v4487 = vld [vmem:[%s4478 + $0x20] sm:$0xf]
        %v4488 = vld [vmem:[%s4478 + $0x24] sm:$0xf]
        %v4489 = vld [vmem:[%s4478 + $0x28] sm:$0xf]
        %v4490 = vld [vmem:[%s4478 + $0x2c] sm:$0xf]
        %v4491 = vld [vmem:[%s4478 + $0x30] sm:$0xf]
        %v4492 = vld [vmem:[%s4478 + $0x34] sm:$0xf]
        %v4493 = vld [vmem:[%s4478 + $0x38] sm:$0xf]
        %v4494 = vld [vmem:[%s4478 + $0x3c] sm:$0xf]
        %v4495 = vsel %vm1017, %v4323, %v1022
        %v4513 = vunpack.c.l.b16 %v4479
        %v4514 = vunpack.c.l.b16 %v4480
        %v4515 = vunpack.c.l.b16 %v4481
        %v4516 = vunpack.c.l.b16 %v4482
        %v4517 = vunpack.c.l.b16 %v4483
        %v4518 = vunpack.c.l.b16 %v4484
        %v4519 = vunpack.c.l.b16 %v4485
        %v4520 = vunpack.c.l.b16 %v4486
        %v4521 = vunpack.c.l.b16 %v4487
        %v4522 = vunpack.c.l.b16 %v4488
        %v4523 = vunpack.c.l.b16 %v4489
        %v4524 = vunpack.c.l.b16 %v4490
        %v4525 = vunpack.c.l.b16 %v4491
        %v4526 = vunpack.c.l.b16 %v4492
        %v4527 = vunpack.c.l.b16 %v4493
        %v4528 = vunpack.c.l.b16 %v4494
        %v4529 = vpack.c.b16 %v4514, %v4513
        %v4530 = vpack.c.b16 %v4516, %v4515
        %v4531 = vpack.c.b16 %v4518, %v4517
        %v4532 = vpack.c.b16 %v4520, %v4519
        %v4533 = vpack.c.b16 %v4522, %v4521
        %v4534 = vpack.c.b16 %v4524, %v4523
        %v4535 = vpack.c.b16 %v4526, %v4525
        %v4536 = vpack.c.b16 %v4528, %v4527
        %4545 = vmatprep.subr.bf16.mxu0 0
        %4546 = vmatpush1.bf16.msra.mxu0 %v4529
        %4547 = vmatprep.subr.bf16.mxu0 0
        %4548 = vmatpush1.bf16.msra.mxu0 %v4530
        %4549 = vmatprep.subr.bf16.mxu0 0
        %4550 = vmatpush1.bf16.msra.mxu0 %v4531
        %4551 = vmatprep.subr.bf16.mxu0 0
        %4552 = vmatpush1.bf16.msra.mxu0 %v4532
        %4553 = vmatprep.subr.bf16.mxu0 0
        %4554 = vmatpush1.bf16.msra.mxu0 %v4533
        %4555 = vmatprep.subr.bf16.mxu0 0
        %4556 = vmatpush1.bf16.msra.mxu0 %v4534
        %4557 = vmatprep.subr.bf16.mxu0 0
        %4558 = vmatpush1.bf16.msra.mxu0 %v4535
        %4559 = vmatprep.subr.bf16.mxu0 0
        %4560 = vmatpush1.bf16.msra.mxu0 %v4536
        %4561 = vmatprep.subr.bf16.mxu0 0
        %4562 = vmatpush1.bf16.msra.mxu0 0
        %4563 = vmatprep.subr.bf16.mxu0 0
        %4564 = vmatpush1.bf16.msra.mxu0 0
        %4565 = vmatprep.subr.bf16.mxu0 0
        %4566 = vmatpush1.bf16.msra.mxu0 0
        %4567 = vmatprep.subr.bf16.mxu0 0
        %4568 = vmatpush1.bf16.msra.mxu0 0
        %4569 = vmatprep.subr.bf16.mxu0 0
        %4570 = vmatpush1.bf16.msra.mxu0 0
        %4571 = vmatprep.subr.bf16.mxu0 0
        %4572 = vmatpush1.bf16.msra.mxu0 0
        %4573 = vmatprep.subr.bf16.mxu0 0
        %4574 = vmatpush1.bf16.msra.mxu0 0
        %4575 = vmatprep.subr.bf16.mxu0 0
        %4576 = vmatpush1.bf16.msra.mxu0 0
        %4577 = vmatprep.mubr.bf16.mxu0 0
        %4578 = vmatmul.mubr.bf16.gmra.mrb[0].mxu0 %v4300
        %v4579 = vpop.f32.mrb[0].mxu0
        %v4580 = vadd.f32 0.0, %v4579
        %v4581 = vpop.f32.mrb[0].mxu0
        %v4582 = vpop.f32.mrb[0].mxu0
        %v4583 = vadd.f32 0.0, %v4582
        %v4584 = vpop.f32.mrb[0].mxu0
        %4585 = vmatprep.mubr.bf16.mxu0 0
        %4586 = vmatmul.mubr.bf16.gmra.mrb[0].mxu0 %v4304
        %v4587 = vpop.f32.mrb[0].mxu0
        %v4588 = vadd.f32 0.0, %v4587
        %v4589 = vpop.f32.mrb[0].mxu0
        %v4590 = vpop.f32.mrb[0].mxu0
        %v4591 = vadd.f32 0.0, %v4590
        %v4592 = vpop.f32.mrb[0].mxu0
        %4593 = vmatprep.mubr.bf16.mxu0 0
        %4594 = vmatmul.mubr.bf16.gmra.mrb[0].mxu0 %v4308
        %v4595 = vpop.f32.mrb[0].mxu0
        %v4596 = vadd.f32 0.0, %v4595
        %v4597 = vpop.f32.mrb[0].mxu0
        %v4598 = vpop.f32.mrb[0].mxu0
        %v4599 = vadd.f32 0.0, %v4598
        %v4600 = vpop.f32.mrb[0].mxu0
        %4601 = vmatprep.mubr.bf16.mxu0 0
        %4602 = vmatmul.mubr.bf16.gmra.mrb[0].mxu0 %v4312
        %v4603 = vpop.f32.mrb[0].mxu0
        %v4604 = vadd.f32 0.0, %v4603
        %v4605 = vpop.f32.mrb[0].mxu0
        %v4606 = vpop.f32.mrb[0].mxu0
        %v4607 = vadd.f32 0.0, %v4606
        %v4608 = vpop.f32.mrb[0].mxu0
        %4609 = vmatprep.mubr.bf16.mxu0 0
        %4610 = vmatmul.mubr.bf16.gmra.mrb[0].mxu0 %v4316
        %v4611 = vpop.f32.mrb[0].mxu0
        %v4612 = vadd.f32 0.0, %v4611
        %v4613 = vpop.f32.mrb[0].mxu0
        %v4614 = vpop.f32.mrb[0].mxu0
        %v4615 = vadd.f32 0.0, %v4614
        %v4616 = vpop.f32.mrb[0].mxu0
        %4617 = vmatprep.mubr.bf16.mxu0 0
        %4618 = vmatmul.mubr.bf16.gmra.mrb[0].mxu0 %v4320
        %v4619 = vpop.f32.mrb[0].mxu0
        %v4620 = vadd.f32 0.0, %v4619
        %v4621 = vpop.f32.mrb[0].mxu0
        %v4622 = vpop.f32.mrb[0].mxu0
        %v4623 = vadd.f32 0.0, %v4622
        %v4624 = vpop.f32.mrb[0].mxu0
        %4625 = vmatprep.mubr.bf16.mxu0 0
        %4626 = vmatmul.mubr.bf16.gmra.mrb[0].mxu0 %v4324
        %v4627 = vpop.f32.mrb[0].mxu0
        %v4628 = vadd.f32 0.0, %v4627
        %v4629 = vpop.f32.mrb[0].mxu0
        %v4630 = vpop.f32.mrb[0].mxu0
        %v4631 = vadd.f32 0.0, %v4630
        %v4632 = vpop.f32.mrb[0].mxu0
        %4633 = vmatprep.mubr.bf16.mxu0 0
        %4634 = vmatmul.mubr.bf16.gmra.mrb[0].mxu0 %v4495
        %v4635 = vpop.f32.mrb[0].mxu0
        %v4636 = vadd.f32 0.0, %v4635
        %v4637 = vpop.f32.mrb[0].mxu0
        %v4638 = vpop.f32.mrb[0].mxu0
        %v4639 = vadd.f32 0.0, %v4638
        %v4640 = vpop.f32.mrb[0].mxu0
        %4641 = vdwg.mxu0
        %v4642 = vadd.f32 %v4416, %v4580
        %v4643 = vadd.f32 %v4419, %v4583
        %v4644 = vadd.f32 %v4424, %v4588
        %v4645 = vadd.f32 %v4427, %v4591
        %v4646 = vadd.f32 %v4432, %v4596
        %v4647 = vadd.f32 %v4435, %v4599
        %v4648 = vadd.f32 %v4440, %v4604
        %v4649 = vadd.f32 %v4443, %v4607
        %v4650 = vadd.f32 %v4448, %v4612
        %v4651 = vadd.f32 %v4451, %v4615
        %v4652 = vadd.f32 %v4456, %v4620
        %v4653 = vadd.f32 %v4459, %v4623
        %v4654 = vadd.f32 %v4464, %v4628
        %v4655 = vadd.f32 %v4467, %v4631
        %v4656 = vadd.f32 %v4472, %v4636
        %v4657 = vadd.f32 %v4475, %v4639
        %s4658 = scalar_lea.vmem [#allocation5], 192
        %v4659 = vld [vmem:[%s4658] sm:$0xf]
        %v4660 = vld [vmem:[%s4658 + $0x4] sm:$0xf]
        %v4661 = vld [vmem:[%s4658 + $0x8] sm:$0xf]
        %v4662 = vld [vmem:[%s4658 + $0xc] sm:$0xf]
        %v4663 = vld [vmem:[%s4658 + $0x10] sm:$0xf]
        %v4664 = vld [vmem:[%s4658 + $0x14] sm:$0xf]
        %v4665 = vld [vmem:[%s4658 + $0x18] sm:$0xf]
        %v4666 = vld [vmem:[%s4658 + $0x1c] sm:$0xf]
        %v4667 = vld [vmem:[%s4658 + $0x20] sm:$0xf]
        %v4668 = vld [vmem:[%s4658 + $0x24] sm:$0xf]
        %v4669 = vld [vmem:[%s4658 + $0x28] sm:$0xf]
        %v4670 = vld [vmem:[%s4658 + $0x2c] sm:$0xf]
        %v4671 = vld [vmem:[%s4658 + $0x30] sm:$0xf]
        %v4672 = vld [vmem:[%s4658 + $0x34] sm:$0xf]
        %v4673 = vld [vmem:[%s4658 + $0x38] sm:$0xf]
        %v4674 = vld [vmem:[%s4658 + $0x3c] sm:$0xf]
        %v4683 = vrot.slane %v4027, 4
        %v4684 = vsel %vm1304, %v1305, %v4683
        %v4685 = vrot.slane %v4028, 4
        %v4686 = vsel %vm1304, %v4683, %v4685
        %v4687 = vrot.slane %v4029, 4
        %v4688 = vsel %vm1304, %v4685, %v4687
        %v4689 = vrot.slane %v4030, 4
        %v4690 = vsel %vm1304, %v4687, %v4689
        %v4691 = vrot.slane %v4031, 4
        %v4692 = vsel %vm1304, %v4689, %v4691
        %v4693 = vrot.slane %v4032, 4
        %v4694 = vsel %vm1304, %v4691, %v4693
        %v4695 = vrot.slane %v4033, 4
        %v4696 = vsel %vm1304, %v4693, %v4695
        %v4697 = vrot.slane %v4034, 4
        %v4698 = vsel %vm1304, %v4695, %v4697
        %v4723 = vunpack.c.l.b16 %v4659
        %v4724 = vunpack.c.l.b16 %v4660
        %v4725 = vunpack.c.l.b16 %v4661
        %v4726 = vunpack.c.l.b16 %v4662
        %v4727 = vunpack.c.l.b16 %v4663
        %v4728 = vunpack.c.l.b16 %v4664
        %v4729 = vunpack.c.l.b16 %v4665
        %v4730 = vunpack.c.l.b16 %v4666
        %v4731 = vunpack.c.l.b16 %v4667
        %v4732 = vunpack.c.l.b16 %v4668
        %v4733 = vunpack.c.l.b16 %v4669
        %v4734 = vunpack.c.l.b16 %v4670
        %v4735 = vunpack.c.l.b16 %v4671
        %v4736 = vunpack.c.l.b16 %v4672
        %v4737 = vunpack.c.l.b16 %v4673
        %v4738 = vunpack.c.l.b16 %v4674
        %v4739 = vpack.c.b16 %v4724, %v4723
        %v4740 = vpack.c.b16 %v4726, %v4725
        %v4741 = vpack.c.b16 %v4728, %v4727
        %v4742 = vpack.c.b16 %v4730, %v4729
        %v4743 = vpack.c.b16 %v4732, %v4731
        %v4744 = vpack.c.b16 %v4734, %v4733
        %v4745 = vpack.c.b16 %v4736, %v4735
        %v4746 = vpack.c.b16 %v4738, %v4737
        %4755 = vmatprep.subr.bf16.mxu0 0
        %4756 = vmatpush1.bf16.msra.mxu0 %v4739
        %4757 = vmatprep.subr.bf16.mxu0 0
        %4758 = vmatpush1.bf16.msra.mxu0 %v4740
        %4759 = vmatprep.subr.bf16.mxu0 0
        %4760 = vmatpush1.bf16.msra.mxu0 %v4741
        %4761 = vmatprep.subr.bf16.mxu0 0
        %4762 = vmatpush1.bf16.msra.mxu0 %v4742
        %4763 = vmatprep.subr.bf16.mxu0 0
        %4764 = vmatpush1.bf16.msra.mxu0 %v4743
        %4765 = vmatprep.subr.bf16.mxu0 0
        %4766 = vmatpush1.bf16.msra.mxu0 %v4744
        %4767 = vmatprep.subr.bf16.mxu0 0
        %4768 = vmatpush1.bf16.msra.mxu0 %v4745
        %4769 = vmatprep.subr.bf16.mxu0 0
        %4770 = vmatpush1.bf16.msra.mxu0 %v4746
        %4771 = vmatprep.subr.bf16.mxu0 0
        %4772 = vmatpush1.bf16.msra.mxu0 0
        %4773 = vmatprep.subr.bf16.mxu0 0
        %4774 = vmatpush1.bf16.msra.mxu0 0
        %4775 = vmatprep.subr.bf16.mxu0 0
        %4776 = vmatpush1.bf16.msra.mxu0 0
        %4777 = vmatprep.subr.bf16.mxu0 0
        %4778 = vmatpush1.bf16.msra.mxu0 0
        %4779 = vmatprep.subr.bf16.mxu0 0
        %4780 = vmatpush1.bf16.msra.mxu0 0
        %4781 = vmatprep.subr.bf16.mxu0 0
        %4782 = vmatpush1.bf16.msra.mxu0 0
        %4783 = vmatprep.subr.bf16.mxu0 0
        %4784 = vmatpush1.bf16.msra.mxu0 0
        %4785 = vmatprep.subr.bf16.mxu0 0
        %4786 = vmatpush1.bf16.msra.mxu0 0
        %4787 = vmatprep.mubr.bf16.mxu0 0
        %4788 = vmatmul.mubr.bf16.gmra.mrb[0].mxu0 %v4684
        %v4789 = vpop.f32.mrb[0].mxu0
        %v4790 = vadd.f32 0.0, %v4789
        %v4791 = vpop.f32.mrb[0].mxu0
        %v4792 = vpop.f32.mrb[0].mxu0
        %v4793 = vadd.f32 0.0, %v4792
        %v4794 = vpop.f32.mrb[0].mxu0
        %4795 = vmatprep.mubr.bf16.mxu0 0
        %4796 = vmatmul.mubr.bf16.gmra.mrb[0].mxu0 %v4686
        %v4797 = vpop.f32.mrb[0].mxu0
        %v4798 = vadd.f32 0.0, %v4797
        %v4799 = vpop.f32.mrb[0].mxu0
        %v4800 = vpop.f32.mrb[0].mxu0
        %v4801 = vadd.f32 0.0, %v4800
        %v4802 = vpop.f32.mrb[0].mxu0
        %4803 = vmatprep.mubr.bf16.mxu0 0
        %4804 = vmatmul.mubr.bf16.gmra.mrb[0].mxu0 %v4688
        %v4805 = vpop.f32.mrb[0].mxu0
        %v4806 = vadd.f32 0.0, %v4805
        %v4807 = vpop.f32.mrb[0].mxu0
        %v4808 = vpop.f32.mrb[0].mxu0
        %v4809 = vadd.f32 0.0, %v4808
        %v4810 = vpop.f32.mrb[0].mxu0
        %4811 = vmatprep.mubr.bf16.mxu0 0
        %4812 = vmatmul.mubr.bf16.gmra.mrb[0].mxu0 %v4690
        %v4813 = vpop.f32.mrb[0].mxu0
        %v4814 = vadd.f32 0.0, %v4813
        %v4815 = vpop.f32.mrb[0].mxu0
        %v4816 = vpop.f32.mrb[0].mxu0
        %v4817 = vadd.f32 0.0, %v4816
        %v4818 = vpop.f32.mrb[0].mxu0
        %4819 = vmatprep.mubr.bf16.mxu0 0
        %4820 = vmatmul.mubr.bf16.gmra.mrb[0].mxu0 %v4692
        %v4821 = vpop.f32.mrb[0].mxu0
        %v4822 = vadd.f32 0.0, %v4821
        %v4823 = vpop.f32.mrb[0].mxu0
        %v4824 = vpop.f32.mrb[0].mxu0
        %v4825 = vadd.f32 0.0, %v4824
        %v4826 = vpop.f32.mrb[0].mxu0
        %4827 = vmatprep.mubr.bf16.mxu0 0
        %4828 = vmatmul.mubr.bf16.gmra.mrb[0].mxu0 %v4694
        %v4829 = vpop.f32.mrb[0].mxu0
        %v4830 = vadd.f32 0.0, %v4829
        %v4831 = vpop.f32.mrb[0].mxu0
        %v4832 = vpop.f32.mrb[0].mxu0
        %v4833 = vadd.f32 0.0, %v4832
        %v4834 = vpop.f32.mrb[0].mxu0
        %4835 = vmatprep.mubr.bf16.mxu0 0
        %4836 = vmatmul.mubr.bf16.gmra.mrb[0].mxu0 %v4696
        %v4837 = vpop.f32.mrb[0].mxu0
        %v4838 = vadd.f32 0.0, %v4837
        %v4839 = vpop.f32.mrb[0].mxu0
        %v4840 = vpop.f32.mrb[0].mxu0
        %v4841 = vadd.f32 0.0, %v4840
        %v4842 = vpop.f32.mrb[0].mxu0
        %4843 = vmatprep.mubr.bf16.mxu0 0
        %4844 = vmatmul.mubr.bf16.gmra.mrb[0].mxu0 %v4698
        %v4845 = vpop.f32.mrb[0].mxu0
        %v4846 = vadd.f32 0.0, %v4845
        %v4847 = vpop.f32.mrb[0].mxu0
        %v4848 = vpop.f32.mrb[0].mxu0
        %v4849 = vadd.f32 0.0, %v4848
        %v4850 = vpop.f32.mrb[0].mxu0
        %4851 = vdwg.mxu0
        %v4852 = vadd.f32 %v4642, %v4790
        %v4853 = vadd.f32 %v4643, %v4793
        %v4854 = vadd.f32 %v4644, %v4798
        %v4855 = vadd.f32 %v4645, %v4801
        %v4856 = vadd.f32 %v4646, %v4806
        %v4857 = vadd.f32 %v4647, %v4809
        %v4858 = vadd.f32 %v4648, %v4814
        %v4859 = vadd.f32 %v4649, %v4817
        %v4860 = vadd.f32 %v4650, %v4822
        %v4861 = vadd.f32 %v4651, %v4825
        %v4862 = vadd.f32 %v4652, %v4830
        %v4863 = vadd.f32 %v4653, %v4833
        %v4864 = vadd.f32 %v4654, %v4838
        %v4865 = vadd.f32 %v4655, %v4841
        %v4866 = vadd.f32 %v4656, %v4846
        %v4867 = vadd.f32 %v4657, %v4849
        %s4868 = scalar_lea.vmem [#allocation5], 256
        %v4869 = vld [vmem:[%s4868] sm:$0xf]
        %v4870 = vld [vmem:[%s4868 + $0x4] sm:$0xf]
        %v4871 = vld [vmem:[%s4868 + $0x8] sm:$0xf]
        %v4872 = vld [vmem:[%s4868 + $0xc] sm:$0xf]
        %v4873 = vld [vmem:[%s4868 + $0x10] sm:$0xf]
        %v4874 = vld [vmem:[%s4868 + $0x14] sm:$0xf]
        %v4875 = vld [vmem:[%s4868 + $0x18] sm:$0xf]
        %v4876 = vld [vmem:[%s4868 + $0x1c] sm:$0xf]
        %v4877 = vld [vmem:[%s4868 + $0x20] sm:$0xf]
        %v4878 = vld [vmem:[%s4868 + $0x24] sm:$0xf]
        %v4879 = vld [vmem:[%s4868 + $0x28] sm:$0xf]
        %v4880 = vld [vmem:[%s4868 + $0x2c] sm:$0xf]
        %v4881 = vld [vmem:[%s4868 + $0x30] sm:$0xf]
        %v4882 = vld [vmem:[%s4868 + $0x34] sm:$0xf]
        %v4883 = vld [vmem:[%s4868 + $0x38] sm:$0xf]
        %v4884 = vld [vmem:[%s4868 + $0x3c] sm:$0xf]
        %v4901 = vunpack.c.l.b16 %v4869
        %v4902 = vunpack.c.l.b16 %v4870
        %v4903 = vunpack.c.l.b16 %v4871
        %v4904 = vunpack.c.l.b16 %v4872
        %v4905 = vunpack.c.l.b16 %v4873
        %v4906 = vunpack.c.l.b16 %v4874
        %v4907 = vunpack.c.l.b16 %v4875
        %v4908 = vunpack.c.l.b16 %v4876
        %v4909 = vunpack.c.l.b16 %v4877
        %v4910 = vunpack.c.l.b16 %v4878
        %v4911 = vunpack.c.l.b16 %v4879
        %v4912 = vunpack.c.l.b16 %v4880
        %v4913 = vunpack.c.l.b16 %v4881
        %v4914 = vunpack.c.l.b16 %v4882
        %v4915 = vunpack.c.l.b16 %v4883
        %v4916 = vunpack.c.l.b16 %v4884
        %v4917 = vpack.c.b16 %v4902, %v4901
        %v4918 = vpack.c.b16 %v4904, %v4903
        %v4919 = vpack.c.b16 %v4906, %v4905
        %v4920 = vpack.c.b16 %v4908, %v4907
        %v4921 = vpack.c.b16 %v4910, %v4909
        %v4922 = vpack.c.b16 %v4912, %v4911
        %v4923 = vpack.c.b16 %v4914, %v4913
        %v4924 = vpack.c.b16 %v4916, %v4915
        %4933 = vmatprep.subr.bf16.mxu0 0
        %4934 = vmatpush1.bf16.msra.mxu0 %v4917
        %4935 = vmatprep.subr.bf16.mxu0 0
        %4936 = vmatpush1.bf16.msra.mxu0 %v4918
        %4937 = vmatprep.subr.bf16.mxu0 0
        %4938 = vmatpush1.bf16.msra.mxu0 %v4919
        %4939 = vmatprep.subr.bf16.mxu0 0
        %4940 = vmatpush1.bf16.msra.mxu0 %v4920
        %4941 = vmatprep.subr.bf16.mxu0 0
        %4942 = vmatpush1.bf16.msra.mxu0 %v4921
        %4943 = vmatprep.subr.bf16.mxu0 0
        %4944 = vmatpush1.bf16.msra.mxu0 %v4922
        %4945 = vmatprep.subr.bf16.mxu0 0
        %4946 = vmatpush1.bf16.msra.mxu0 %v4923
        %4947 = vmatprep.subr.bf16.mxu0 0
        %4948 = vmatpush1.bf16.msra.mxu0 %v4924
        %4949 = vmatprep.subr.bf16.mxu0 0
        %4950 = vmatpush1.bf16.msra.mxu0 0
        %4951 = vmatprep.subr.bf16.mxu0 0
        %4952 = vmatpush1.bf16.msra.mxu0 0
        %4953 = vmatprep.subr.bf16.mxu0 0
        %4954 = vmatpush1.bf16.msra.mxu0 0
        %4955 = vmatprep.subr.bf16.mxu0 0
        %4956 = vmatpush1.bf16.msra.mxu0 0
        %4957 = vmatprep.subr.bf16.mxu0 0
        %4958 = vmatpush1.bf16.msra.mxu0 0
        %4959 = vmatprep.subr.bf16.mxu0 0
        %4960 = vmatpush1.bf16.msra.mxu0 0
        %4961 = vmatprep.subr.bf16.mxu0 0
        %4962 = vmatpush1.bf16.msra.mxu0 0
        %4963 = vmatprep.subr.bf16.mxu0 0
        %4964 = vmatpush1.bf16.msra.mxu0 0
        %4965 = vmatprep.mubr.bf16.mxu0 0
        %4966 = vmatmul.mubr.bf16.gmra.mrb[0].mxu0 %v4027
        %v4967 = vpop.f32.mrb[0].mxu0
        %v4968 = vadd.f32 0.0, %v4967
        %v4969 = vpop.f32.mrb[0].mxu0
        %v4970 = vpop.f32.mrb[0].mxu0
        %v4971 = vadd.f32 0.0, %v4970
        %v4972 = vpop.f32.mrb[0].mxu0
        %4973 = vmatprep.mubr.bf16.mxu0 0
        %4974 = vmatmul.mubr.bf16.gmra.mrb[0].mxu0 %v4028
        %v4975 = vpop.f32.mrb[0].mxu0
        %v4976 = vadd.f32 0.0, %v4975
        %v4977 = vpop.f32.mrb[0].mxu0
        %v4978 = vpop.f32.mrb[0].mxu0
        %v4979 = vadd.f32 0.0, %v4978
        %v4980 = vpop.f32.mrb[0].mxu0
        %4981 = vmatprep.mubr.bf16.mxu0 0
        %4982 = vmatmul.mubr.bf16.gmra.mrb[0].mxu0 %v4029
        %v4983 = vpop.f32.mrb[0].mxu0
        %v4984 = vadd.f32 0.0, %v4983
        %v4985 = vpop.f32.mrb[0].mxu0
        %v4986 = vpop.f32.mrb[0].mxu0
        %v4987 = vadd.f32 0.0, %v4986
        %v4988 = vpop.f32.mrb[0].mxu0
        %4989 = vmatprep.mubr.bf16.mxu0 0
        %4990 = vmatmul.mubr.bf16.gmra.mrb[0].mxu0 %v4030
        %v4991 = vpop.f32.mrb[0].mxu0
        %v4992 = vadd.f32 0.0, %v4991
        %v4993 = vpop.f32.mrb[0].mxu0
        %v4994 = vpop.f32.mrb[0].mxu0
        %v4995 = vadd.f32 0.0, %v4994
        %v4996 = vpop.f32.mrb[0].mxu0
        %4997 = vmatprep.mubr.bf16.mxu0 0
        %4998 = vmatmul.mubr.bf16.gmra.mrb[0].mxu0 %v4031
        %v4999 = vpop.f32.mrb[0].mxu0
        %v5000 = vadd.f32 0.0, %v4999
        %v5001 = vpop.f32.mrb[0].mxu0
        %v5002 = vpop.f32.mrb[0].mxu0
        %v5003 = vadd.f32 0.0, %v5002
        %v5004 = vpop.f32.mrb[0].mxu0
        %5005 = vmatprep.mubr.bf16.mxu0 0
        %5006 = vmatmul.mubr.bf16.gmra.mrb[0].mxu0 %v4032
        %v5007 = vpop.f32.mrb[0].mxu0
        %v5008 = vadd.f32 0.0, %v5007
        %v5009 = vpop.f32.mrb[0].mxu0
        %v5010 = vpop.f32.mrb[0].mxu0
        %v5011 = vadd.f32 0.0, %v5010
        %v5012 = vpop.f32.mrb[0].mxu0
        %5013 = vmatprep.mubr.bf16.mxu0 0
        %5014 = vmatmul.mubr.bf16.gmra.mrb[0].mxu0 %v4033
        %v5015 = vpop.f32.mrb[0].mxu0
        %v5016 = vadd.f32 0.0, %v5015
        %v5017 = vpop.f32.mrb[0].mxu0
        %v5018 = vpop.f32.mrb[0].mxu0
        %v5019 = vadd.f32 0.0, %v5018
        %v5020 = vpop.f32.mrb[0].mxu0
        %5021 = vmatprep.mubr.bf16.mxu0 0
        %5022 = vmatmul.mubr.bf16.gmra.mrb[0].mxu0 %v4034
        %v5023 = vpop.f32.mrb[0].mxu0
        %v5024 = vadd.f32 0.0, %v5023
        %v5025 = vpop.f32.mrb[0].mxu0
        %v5026 = vpop.f32.mrb[0].mxu0
        %v5027 = vadd.f32 0.0, %v5026
        %v5028 = vpop.f32.mrb[0].mxu0
        %5029 = vdwg.mxu0
        %v5030 = vadd.f32 %v4852, %v4968
        %v5031 = vadd.f32 %v4853, %v4971
        %v5032 = vadd.f32 %v4854, %v4976
        %v5033 = vadd.f32 %v4855, %v4979
        %v5034 = vadd.f32 %v4856, %v4984
        %v5035 = vadd.f32 %v4857, %v4987
        %v5036 = vadd.f32 %v4858, %v4992
        %v5037 = vadd.f32 %v4859, %v4995
        %v5038 = vadd.f32 %v4860, %v5000
        %v5039 = vadd.f32 %v4861, %v5003
        %v5040 = vadd.f32 %v4862, %v5008
        %v5041 = vadd.f32 %v4863, %v5011
        %v5042 = vadd.f32 %v4864, %v5016
        %v5043 = vadd.f32 %v4865, %v5019
        %v5044 = vadd.f32 %v4866, %v5024
        %v5045 = vadd.f32 %v4867, %v5027
        %s5046 = scalar_lea.vmem [#allocation5], 320
        %v5047 = vld [vmem:[%s5046] sm:$0xf]
        %v5048 = vld [vmem:[%s5046 + $0x4] sm:$0xf]
        %v5049 = vld [vmem:[%s5046 + $0x8] sm:$0xf]
        %v5050 = vld [vmem:[%s5046 + $0xc] sm:$0xf]
        %v5051 = vld [vmem:[%s5046 + $0x10] sm:$0xf]
        %v5052 = vld [vmem:[%s5046 + $0x14] sm:$0xf]
        %v5053 = vld [vmem:[%s5046 + $0x18] sm:$0xf]
        %v5054 = vld [vmem:[%s5046 + $0x1c] sm:$0xf]
        %v5055 = vld [vmem:[%s5046 + $0x20] sm:$0xf]
        %v5056 = vld [vmem:[%s5046 + $0x24] sm:$0xf]
        %v5057 = vld [vmem:[%s5046 + $0x28] sm:$0xf]
        %v5058 = vld [vmem:[%s5046 + $0x2c] sm:$0xf]
        %v5059 = vld [vmem:[%s5046 + $0x30] sm:$0xf]
        %v5060 = vld [vmem:[%s5046 + $0x34] sm:$0xf]
        %v5061 = vld [vmem:[%s5046 + $0x38] sm:$0xf]
        %v5062 = vld [vmem:[%s5046 + $0x3c] sm:$0xf]
        %v5063 = vsel %vm1304, %v4697, %v1305
        %v5081 = vunpack.c.l.b16 %v5047
        %v5082 = vunpack.c.l.b16 %v5048
        %v5083 = vunpack.c.l.b16 %v5049
        %v5084 = vunpack.c.l.b16 %v5050
        %v5085 = vunpack.c.l.b16 %v5051
        %v5086 = vunpack.c.l.b16 %v5052
        %v5087 = vunpack.c.l.b16 %v5053
        %v5088 = vunpack.c.l.b16 %v5054
        %v5089 = vunpack.c.l.b16 %v5055
        %v5090 = vunpack.c.l.b16 %v5056
        %v5091 = vunpack.c.l.b16 %v5057
        %v5092 = vunpack.c.l.b16 %v5058
        %v5093 = vunpack.c.l.b16 %v5059
        %v5094 = vunpack.c.l.b16 %v5060
        %v5095 = vunpack.c.l.b16 %v5061
        %v5096 = vunpack.c.l.b16 %v5062
        %v5097 = vpack.c.b16 %v5082, %v5081
        %v5098 = vpack.c.b16 %v5084, %v5083
        %v5099 = vpack.c.b16 %v5086, %v5085
        %v5100 = vpack.c.b16 %v5088, %v5087
        %v5101 = vpack.c.b16 %v5090, %v5089
        %v5102 = vpack.c.b16 %v5092, %v5091
        %v5103 = vpack.c.b16 %v5094, %v5093
        %v5104 = vpack.c.b16 %v5096, %v5095
        %5113 = vmatprep.subr.bf16.mxu0 0
        %5114 = vmatpush1.bf16.msra.mxu0 %v5097
        %5115 = vmatprep.subr.bf16.mxu0 0
        %5116 = vmatpush1.bf16.msra.mxu0 %v5098
        %5117 = vmatprep.subr.bf16.mxu0 0
        %5118 = vmatpush1.bf16.msra.mxu0 %v5099
        %5119 = vmatprep.subr.bf16.mxu0 0
        %5120 = vmatpush1.bf16.msra.mxu0 %v5100
        %5121 = vmatprep.subr.bf16.mxu0 0
        %5122 = vmatpush1.bf16.msra.mxu0 %v5101
        %5123 = vmatprep.subr.bf16.mxu0 0
        %5124 = vmatpush1.bf16.msra.mxu0 %v5102
        %5125 = vmatprep.subr.bf16.mxu0 0
        %5126 = vmatpush1.bf16.msra.mxu0 %v5103
        %5127 = vmatprep.subr.bf16.mxu0 0
        %5128 = vmatpush1.bf16.msra.mxu0 %v5104
        %5129 = vmatprep.subr.bf16.mxu0 0
        %5130 = vmatpush1.bf16.msra.mxu0 0
        %5131 = vmatprep.subr.bf16.mxu0 0
        %5132 = vmatpush1.bf16.msra.mxu0 0
        %5133 = vmatprep.subr.bf16.mxu0 0
        %5134 = vmatpush1.bf16.msra.mxu0 0
        %5135 = vmatprep.subr.bf16.mxu0 0
        %5136 = vmatpush1.bf16.msra.mxu0 0
        %5137 = vmatprep.subr.bf16.mxu0 0
        %5138 = vmatpush1.bf16.msra.mxu0 0
        %5139 = vmatprep.subr.bf16.mxu0 0
        %5140 = vmatpush1.bf16.msra.mxu0 0
        %5141 = vmatprep.subr.bf16.mxu0 0
        %5142 = vmatpush1.bf16.msra.mxu0 0
        %5143 = vmatprep.subr.bf16.mxu0 0
        %5144 = vmatpush1.bf16.msra.mxu0 0
        %5145 = vmatprep.mubr.bf16.mxu0 0
        %5146 = vmatmul.mubr.bf16.gmra.mrb[0].mxu0 %v4686
        %v5147 = vpop.f32.mrb[0].mxu0
        %v5148 = vadd.f32 0.0, %v5147
        %v5149 = vpop.f32.mrb[0].mxu0
        %v5150 = vpop.f32.mrb[0].mxu0
        %v5151 = vadd.f32 0.0, %v5150
        %v5152 = vpop.f32.mrb[0].mxu0
        %5153 = vmatprep.mubr.bf16.mxu0 0
        %5154 = vmatmul.mubr.bf16.gmra.mrb[0].mxu0 %v4688
        %v5155 = vpop.f32.mrb[0].mxu0
        %v5156 = vadd.f32 0.0, %v5155
        %v5157 = vpop.f32.mrb[0].mxu0
        %v5158 = vpop.f32.mrb[0].mxu0
        %v5159 = vadd.f32 0.0, %v5158
        %v5160 = vpop.f32.mrb[0].mxu0
        %5161 = vmatprep.mubr.bf16.mxu0 0
        %5162 = vmatmul.mubr.bf16.gmra.mrb[0].mxu0 %v4690
        %v5163 = vpop.f32.mrb[0].mxu0
        %v5164 = vadd.f32 0.0, %v5163
        %v5165 = vpop.f32.mrb[0].mxu0
        %v5166 = vpop.f32.mrb[0].mxu0
        %v5167 = vadd.f32 0.0, %v5166
        %v5168 = vpop.f32.mrb[0].mxu0
        %5169 = vmatprep.mubr.bf16.mxu0 0
        %5170 = vmatmul.mubr.bf16.gmra.mrb[0].mxu0 %v4692
        %v5171 = vpop.f32.mrb[0].mxu0
        %v5172 = vadd.f32 0.0, %v5171
        %v5173 = vpop.f32.mrb[0].mxu0
        %v5174 = vpop.f32.mrb[0].mxu0
        %v5175 = vadd.f32 0.0, %v5174
        %v5176 = vpop.f32.mrb[0].mxu0
        %5177 = vmatprep.mubr.bf16.mxu0 0
        %5178 = vmatmul.mubr.bf16.gmra.mrb[0].mxu0 %v4694
        %v5179 = vpop.f32.mrb[0].mxu0
        %v5180 = vadd.f32 0.0, %v5179
        %v5181 = vpop.f32.mrb[0].mxu0
        %v5182 = vpop.f32.mrb[0].mxu0
        %v5183 = vadd.f32 0.0, %v5182
        %v5184 = vpop.f32.mrb[0].mxu0
        %5185 = vmatprep.mubr.bf16.mxu0 0
        %5186 = vmatmul.mubr.bf16.gmra.mrb[0].mxu0 %v4696
        %v5187 = vpop.f32.mrb[0].mxu0
        %v5188 = vadd.f32 0.0, %v5187
        %v5189 = vpop.f32.mrb[0].mxu0
        %v5190 = vpop.f32.mrb[0].mxu0
        %v5191 = vadd.f32 0.0, %v5190
        %v5192 = vpop.f32.mrb[0].mxu0
        %5193 = vmatprep.mubr.bf16.mxu0 0
        %5194 = vmatmul.mubr.bf16.gmra.mrb[0].mxu0 %v4698
        %v5195 = vpop.f32.mrb[0].mxu0
        %v5196 = vadd.f32 0.0, %v5195
        %v5197 = vpop.f32.mrb[0].mxu0
        %v5198 = vpop.f32.mrb[0].mxu0
        %v5199 = vadd.f32 0.0, %v5198
        %v5200 = vpop.f32.mrb[0].mxu0
        %5201 = vmatprep.mubr.bf16.mxu0 0
        %5202 = vmatmul.mubr.bf16.gmra.mrb[0].mxu0 %v5063
        %v5203 = vpop.f32.mrb[0].mxu0
        %v5204 = vadd.f32 0.0, %v5203
        %v5205 = vpop.f32.mrb[0].mxu0
        %v5206 = vpop.f32.mrb[0].mxu0
        %v5207 = vadd.f32 0.0, %v5206
        %v5208 = vpop.f32.mrb[0].mxu0
        %5209 = vdwg.mxu0
        %v5210 = vadd.f32 %v5030, %v5148
        %v5211 = vadd.f32 %v5031, %v5151
        %v5212 = vadd.f32 %v5032, %v5156
        %v5213 = vadd.f32 %v5033, %v5159
        %v5214 = vadd.f32 %v5034, %v5164
        %v5215 = vadd.f32 %v5035, %v5167
        %v5216 = vadd.f32 %v5036, %v5172
        %v5217 = vadd.f32 %v5037, %v5175
        %v5218 = vadd.f32 %v5038, %v5180
        %v5219 = vadd.f32 %v5039, %v5183
        %v5220 = vadd.f32 %v5040, %v5188
        %v5221 = vadd.f32 %v5041, %v5191
        %v5222 = vadd.f32 %v5042, %v5196
        %v5223 = vadd.f32 %v5043, %v5199
        %v5224 = vadd.f32 %v5044, %v5204
        %v5225 = vadd.f32 %v5045, %v5207
        %v5226 = vsel %vm1923, 0, %v4027
        %v5227 = vsel %vm1924, 0, %v4028
        %v5228 = vsel %vm1925, 0, %v4029
        %v5229 = vsel %vm1926, 0, %v4030
        %v5230 = vsel %vm1927, 0, %v4031
        %v5231 = vsel %vm1928, 0, %v4032
        %v5232 = vsel %vm1929, 0, %v4033
        %v5233 = vsel %vm1930, 0, %v4034
        %s5234 = scalar_lea.vmem [#allocation5], 384
        %v5235 = vld [vmem:[%s5234] sm:$0xf]
        %v5236 = vld [vmem:[%s5234 + $0x4] sm:$0xf]
        %v5237 = vld [vmem:[%s5234 + $0x8] sm:$0xf]
        %v5238 = vld [vmem:[%s5234 + $0xc] sm:$0xf]
        %v5239 = vld [vmem:[%s5234 + $0x10] sm:$0xf]
        %v5240 = vld [vmem:[%s5234 + $0x14] sm:$0xf]
        %v5241 = vld [vmem:[%s5234 + $0x18] sm:$0xf]
        %v5242 = vld [vmem:[%s5234 + $0x1c] sm:$0xf]
        %v5243 = vld [vmem:[%s5234 + $0x20] sm:$0xf]
        %v5244 = vld [vmem:[%s5234 + $0x24] sm:$0xf]
        %v5245 = vld [vmem:[%s5234 + $0x28] sm:$0xf]
        %v5246 = vld [vmem:[%s5234 + $0x2c] sm:$0xf]
        %v5247 = vld [vmem:[%s5234 + $0x30] sm:$0xf]
        %v5248 = vld [vmem:[%s5234 + $0x34] sm:$0xf]
        %v5249 = vld [vmem:[%s5234 + $0x38] sm:$0xf]
        %v5250 = vld [vmem:[%s5234 + $0x3c] sm:$0xf]
        %v5252 = vshrl.u32 %v5226, 16
        %v5254 = vrot.slane %v5252, 4
        %v5255 = vshll.u32 %v5226, 16
        %v5257 = vrot.slane %v5255, 5
        %v5258 = vor.u32 %v5254, %v5257
        %v5259 = vsel %vm722, %v1943, %v5258
        %v5261 = vshrl.u32 %v5227, 16
        %v5263 = vrot.slane %v5261, 4
        %v5264 = vshll.u32 %v5227, 16
        %v5266 = vrot.slane %v5264, 5
        %v5267 = vor.u32 %v5263, %v5266
        %v5268 = vsel %vm722, %v5258, %v5267
        %v5270 = vshrl.u32 %v5228, 16
        %v5272 = vrot.slane %v5270, 4
        %v5273 = vshll.u32 %v5228, 16
        %v5275 = vrot.slane %v5273, 5
        %v5276 = vor.u32 %v5272, %v5275
        %v5277 = vsel %vm722, %v5267, %v5276
        %v5279 = vshrl.u32 %v5229, 16
        %v5281 = vrot.slane %v5279, 4
        %v5282 = vshll.u32 %v5229, 16
        %v5284 = vrot.slane %v5282, 5
        %v5285 = vor.u32 %v5281, %v5284
        %v5286 = vsel %vm722, %v5276, %v5285
        %v5288 = vshrl.u32 %v5230, 16
        %v5290 = vrot.slane %v5288, 4
        %v5291 = vshll.u32 %v5230, 16
        %v5293 = vrot.slane %v5291, 5
        %v5294 = vor.u32 %v5290, %v5293
        %v5295 = vsel %vm722, %v5285, %v5294
        %v5297 = vshrl.u32 %v5231, 16
        %v5299 = vrot.slane %v5297, 4
        %v5300 = vshll.u32 %v5231, 16
        %v5302 = vrot.slane %v5300, 5
        %v5303 = vor.u32 %v5299, %v5302
        %v5304 = vsel %vm722, %v5294, %v5303
        %v5306 = vshrl.u32 %v5232, 16
        %v5308 = vrot.slane %v5306, 4
        %v5309 = vshll.u32 %v5232, 16
        %v5311 = vrot.slane %v5309, 5
        %v5312 = vor.u32 %v5308, %v5311
        %v5313 = vsel %vm722, %v5303, %v5312
        %v5315 = vshrl.u32 %v5233, 16
        %v5317 = vrot.slane %v5315, 4
        %v5318 = vshll.u32 %v5233, 16
        %v5320 = vrot.slane %v5318, 5
        %v5321 = vor.u32 %v5317, %v5320
        %v5322 = vsel %vm722, %v5312, %v5321
        %v5347 = vunpack.c.l.b16 %v5235
        %v5348 = vunpack.c.l.b16 %v5236
        %v5349 = vunpack.c.l.b16 %v5237
        %v5350 = vunpack.c.l.b16 %v5238
        %v5351 = vunpack.c.l.b16 %v5239
        %v5352 = vunpack.c.l.b16 %v5240
        %v5353 = vunpack.c.l.b16 %v5241
        %v5354 = vunpack.c.l.b16 %v5242
        %v5355 = vunpack.c.l.b16 %v5243
        %v5356 = vunpack.c.l.b16 %v5244
        %v5357 = vunpack.c.l.b16 %v5245
        %v5358 = vunpack.c.l.b16 %v5246
        %v5359 = vunpack.c.l.b16 %v5247
        %v5360 = vunpack.c.l.b16 %v5248
        %v5361 = vunpack.c.l.b16 %v5249
        %v5362 = vunpack.c.l.b16 %v5250
        %v5363 = vpack.c.b16 %v5348, %v5347
        %v5364 = vpack.c.b16 %v5350, %v5349
        %v5365 = vpack.c.b16 %v5352, %v5351
        %v5366 = vpack.c.b16 %v5354, %v5353
        %v5367 = vpack.c.b16 %v5356, %v5355
        %v5368 = vpack.c.b16 %v5358, %v5357
        %v5369 = vpack.c.b16 %v5360, %v5359
        %v5370 = vpack.c.b16 %v5362, %v5361
        %5379 = vmatprep.subr.bf16.mxu0 0
        %5380 = vmatpush1.bf16.msra.mxu0 %v5363
        %5381 = vmatprep.subr.bf16.mxu0 0
        %5382 = vmatpush1.bf16.msra.mxu0 %v5364
        %5383 = vmatprep.subr.bf16.mxu0 0
        %5384 = vmatpush1.bf16.msra.mxu0 %v5365
        %5385 = vmatprep.subr.bf16.mxu0 0
        %5386 = vmatpush1.bf16.msra.mxu0 %v5366
        %5387 = vmatprep.subr.bf16.mxu0 0
        %5388 = vmatpush1.bf16.msra.mxu0 %v5367
        %5389 = vmatprep.subr.bf16.mxu0 0
        %5390 = vmatpush1.bf16.msra.mxu0 %v5368
        %5391 = vmatprep.subr.bf16.mxu0 0
        %5392 = vmatpush1.bf16.msra.mxu0 %v5369
        %5393 = vmatprep.subr.bf16.mxu0 0
        %5394 = vmatpush1.bf16.msra.mxu0 %v5370
        %5395 = vmatprep.subr.bf16.mxu0 0
        %5396 = vmatpush1.bf16.msra.mxu0 0
        %5397 = vmatprep.subr.bf16.mxu0 0
        %5398 = vmatpush1.bf16.msra.mxu0 0
        %5399 = vmatprep.subr.bf16.mxu0 0
        %5400 = vmatpush1.bf16.msra.mxu0 0
        %5401 = vmatprep.subr.bf16.mxu0 0
        %5402 = vmatpush1.bf16.msra.mxu0 0
        %5403 = vmatprep.subr.bf16.mxu0 0
        %5404 = vmatpush1.bf16.msra.mxu0 0
        %5405 = vmatprep.subr.bf16.mxu0 0
        %5406 = vmatpush1.bf16.msra.mxu0 0
        %5407 = vmatprep.subr.bf16.mxu0 0
        %5408 = vmatpush1.bf16.msra.mxu0 0
        %5409 = vmatprep.subr.bf16.mxu0 0
        %5410 = vmatpush1.bf16.msra.mxu0 0
        %5411 = vmatprep.mubr.bf16.mxu0 0
        %5412 = vmatmul.mubr.bf16.gmra.mrb[0].mxu0 %v5259
        %v5413 = vpop.f32.mrb[0].mxu0
        %v5414 = vadd.f32 0.0, %v5413
        %v5415 = vpop.f32.mrb[0].mxu0
        %v5416 = vpop.f32.mrb[0].mxu0
        %v5417 = vadd.f32 0.0, %v5416
        %v5418 = vpop.f32.mrb[0].mxu0
        %5419 = vmatprep.mubr.bf16.mxu0 0
        %5420 = vmatmul.mubr.bf16.gmra.mrb[0].mxu0 %v5268
        %v5421 = vpop.f32.mrb[0].mxu0
        %v5422 = vadd.f32 0.0, %v5421
        %v5423 = vpop.f32.mrb[0].mxu0
        %v5424 = vpop.f32.mrb[0].mxu0
        %v5425 = vadd.f32 0.0, %v5424
        %v5426 = vpop.f32.mrb[0].mxu0
        %5427 = vmatprep.mubr.bf16.mxu0 0
        %5428 = vmatmul.mubr.bf16.gmra.mrb[0].mxu0 %v5277
        %v5429 = vpop.f32.mrb[0].mxu0
        %v5430 = vadd.f32 0.0, %v5429
        %v5431 = vpop.f32.mrb[0].mxu0
        %v5432 = vpop.f32.mrb[0].mxu0
        %v5433 = vadd.f32 0.0, %v5432
        %v5434 = vpop.f32.mrb[0].mxu0
        %5435 = vmatprep.mubr.bf16.mxu0 0
        %5436 = vmatmul.mubr.bf16.gmra.mrb[0].mxu0 %v5286
        %v5437 = vpop.f32.mrb[0].mxu0
        %v5438 = vadd.f32 0.0, %v5437
        %v5439 = vpop.f32.mrb[0].mxu0
        %v5440 = vpop.f32.mrb[0].mxu0
        %v5441 = vadd.f32 0.0, %v5440
        %v5442 = vpop.f32.mrb[0].mxu0
        %5443 = vmatprep.mubr.bf16.mxu0 0
        %5444 = vmatmul.mubr.bf16.gmra.mrb[0].mxu0 %v5295
        %v5445 = vpop.f32.mrb[0].mxu0
        %v5446 = vadd.f32 0.0, %v5445
        %v5447 = vpop.f32.mrb[0].mxu0
        %v5448 = vpop.f32.mrb[0].mxu0
        %v5449 = vadd.f32 0.0, %v5448
        %v5450 = vpop.f32.mrb[0].mxu0
        %5451 = vmatprep.mubr.bf16.mxu0 0
        %5452 = vmatmul.mubr.bf16.gmra.mrb[0].mxu0 %v5304
        %v5453 = vpop.f32.mrb[0].mxu0
        %v5454 = vadd.f32 0.0, %v5453
        %v5455 = vpop.f32.mrb[0].mxu0
        %v5456 = vpop.f32.mrb[0].mxu0
        %v5457 = vadd.f32 0.0, %v5456
        %v5458 = vpop.f32.mrb[0].mxu0
        %5459 = vmatprep.mubr.bf16.mxu0 0
        %5460 = vmatmul.mubr.bf16.gmra.mrb[0].mxu0 %v5313
        %v5461 = vpop.f32.mrb[0].mxu0
        %v5462 = vadd.f32 0.0, %v5461
        %v5463 = vpop.f32.mrb[0].mxu0
        %v5464 = vpop.f32.mrb[0].mxu0
        %v5465 = vadd.f32 0.0, %v5464
        %v5466 = vpop.f32.mrb[0].mxu0
        %5467 = vmatprep.mubr.bf16.mxu0 0
        %5468 = vmatmul.mubr.bf16.gmra.mrb[0].mxu0 %v5322
        %v5469 = vpop.f32.mrb[0].mxu0
        %v5470 = vadd.f32 0.0, %v5469
        %v5471 = vpop.f32.mrb[0].mxu0
        %v5472 = vpop.f32.mrb[0].mxu0
        %v5473 = vadd.f32 0.0, %v5472
        %v5474 = vpop.f32.mrb[0].mxu0
        %5475 = vdwg.mxu0
        %v5476 = vadd.f32 %v5210, %v5414
        %v5477 = vadd.f32 %v5211, %v5417
        %v5478 = vadd.f32 %v5212, %v5422
        %v5479 = vadd.f32 %v5213, %v5425
        %v5480 = vadd.f32 %v5214, %v5430
        %v5481 = vadd.f32 %v5215, %v5433
        %v5482 = vadd.f32 %v5216, %v5438
        %v5483 = vadd.f32 %v5217, %v5441
        %v5484 = vadd.f32 %v5218, %v5446
        %v5485 = vadd.f32 %v5219, %v5449
        %v5486 = vadd.f32 %v5220, %v5454
        %v5487 = vadd.f32 %v5221, %v5457
        %v5488 = vadd.f32 %v5222, %v5462
        %v5489 = vadd.f32 %v5223, %v5465
        %v5490 = vadd.f32 %v5224, %v5470
        %v5491 = vadd.f32 %v5225, %v5473
        %s5492 = scalar_lea.vmem [#allocation5], 448
        %v5493 = vld [vmem:[%s5492] sm:$0xf]
        %v5494 = vld [vmem:[%s5492 + $0x4] sm:$0xf]
        %v5495 = vld [vmem:[%s5492 + $0x8] sm:$0xf]
        %v5496 = vld [vmem:[%s5492 + $0xc] sm:$0xf]
        %v5497 = vld [vmem:[%s5492 + $0x10] sm:$0xf]
        %v5498 = vld [vmem:[%s5492 + $0x14] sm:$0xf]
        %v5499 = vld [vmem:[%s5492 + $0x18] sm:$0xf]
        %v5500 = vld [vmem:[%s5492 + $0x1c] sm:$0xf]
        %v5501 = vld [vmem:[%s5492 + $0x20] sm:$0xf]
        %v5502 = vld [vmem:[%s5492 + $0x24] sm:$0xf]
        %v5503 = vld [vmem:[%s5492 + $0x28] sm:$0xf]
        %v5504 = vld [vmem:[%s5492 + $0x2c] sm:$0xf]
        %v5505 = vld [vmem:[%s5492 + $0x30] sm:$0xf]
        %v5506 = vld [vmem:[%s5492 + $0x34] sm:$0xf]
        %v5507 = vld [vmem:[%s5492 + $0x38] sm:$0xf]
        %v5508 = vld [vmem:[%s5492 + $0x3c] sm:$0xf]
        %v5509 = vrot.slane %v5255, 1
        %v5510 = vor.u32 %v5252, %v5509
        %v5511 = vrot.slane %v5264, 1
        %v5512 = vsel %vm2158, %v5510, %v5511
        %v5513 = vor.u32 %v5261, %v5511
        %v5514 = vrot.slane %v5273, 1
        %v5515 = vsel %vm2158, %v5513, %v5514
        %v5516 = vor.u32 %v5270, %v5514
        %v5517 = vrot.slane %v5282, 1
        %v5518 = vsel %vm2158, %v5516, %v5517
        %v5519 = vor.u32 %v5279, %v5517
        %v5520 = vrot.slane %v5291, 1
        %v5521 = vsel %vm2158, %v5519, %v5520
        %v5522 = vor.u32 %v5288, %v5520
        %v5523 = vrot.slane %v5300, 1
        %v5524 = vsel %vm2158, %v5522, %v5523
        %v5525 = vor.u32 %v5297, %v5523
        %v5526 = vrot.slane %v5309, 1
        %v5527 = vsel %vm2158, %v5525, %v5526
        %v5528 = vor.u32 %v5306, %v5526
        %v5529 = vrot.slane %v5318, 1
        %v5530 = vsel %vm2158, %v5528, %v5529
        %v5531 = vor.u32 %v5315, %v5529
        %v5532 = vsel %vm2158, %v5531, %v2182
        %v5557 = vunpack.c.l.b16 %v5493
        %v5558 = vunpack.c.l.b16 %v5494
        %v5559 = vunpack.c.l.b16 %v5495
        %v5560 = vunpack.c.l.b16 %v5496
        %v5561 = vunpack.c.l.b16 %v5497
        %v5562 = vunpack.c.l.b16 %v5498
        %v5563 = vunpack.c.l.b16 %v5499
        %v5564 = vunpack.c.l.b16 %v5500
        %v5565 = vunpack.c.l.b16 %v5501
        %v5566 = vunpack.c.l.b16 %v5502
        %v5567 = vunpack.c.l.b16 %v5503
        %v5568 = vunpack.c.l.b16 %v5504
        %v5569 = vunpack.c.l.b16 %v5505
        %v5570 = vunpack.c.l.b16 %v5506
        %v5571 = vunpack.c.l.b16 %v5507
        %v5572 = vunpack.c.l.b16 %v5508
        %v5573 = vpack.c.b16 %v5558, %v5557
        %v5574 = vpack.c.b16 %v5560, %v5559
        %v5575 = vpack.c.b16 %v5562, %v5561
        %v5576 = vpack.c.b16 %v5564, %v5563
        %v5577 = vpack.c.b16 %v5566, %v5565
        %v5578 = vpack.c.b16 %v5568, %v5567
        %v5579 = vpack.c.b16 %v5570, %v5569
        %v5580 = vpack.c.b16 %v5572, %v5571
        %5589 = vmatprep.subr.bf16.mxu0 0
        %5590 = vmatpush1.bf16.msra.mxu0 %v5573
        %5591 = vmatprep.subr.bf16.mxu0 0
        %5592 = vmatpush1.bf16.msra.mxu0 %v5574
        %5593 = vmatprep.subr.bf16.mxu0 0
        %5594 = vmatpush1.bf16.msra.mxu0 %v5575
        %5595 = vmatprep.subr.bf16.mxu0 0
        %5596 = vmatpush1.bf16.msra.mxu0 %v5576
        %5597 = vmatprep.subr.bf16.mxu0 0
        %5598 = vmatpush1.bf16.msra.mxu0 %v5577
        %5599 = vmatprep.subr.bf16.mxu0 0
        %5600 = vmatpush1.bf16.msra.mxu0 %v5578
        %5601 = vmatprep.subr.bf16.mxu0 0
        %5602 = vmatpush1.bf16.msra.mxu0 %v5579
        %5603 = vmatprep.subr.bf16.mxu0 0
        %5604 = vmatpush1.bf16.msra.mxu0 %v5580
        %5605 = vmatprep.subr.bf16.mxu0 0
        %5606 = vmatpush1.bf16.msra.mxu0 0
        %5607 = vmatprep.subr.bf16.mxu0 0
        %5608 = vmatpush1.bf16.msra.mxu0 0
        %5609 = vmatprep.subr.bf16.mxu0 0
        %5610 = vmatpush1.bf16.msra.mxu0 0
        %5611 = vmatprep.subr.bf16.mxu0 0
        %5612 = vmatpush1.bf16.msra.mxu0 0
        %5613 = vmatprep.subr.bf16.mxu0 0
        %5614 = vmatpush1.bf16.msra.mxu0 0
        %5615 = vmatprep.subr.bf16.mxu0 0
        %5616 = vmatpush1.bf16.msra.mxu0 0
        %5617 = vmatprep.subr.bf16.mxu0 0
        %5618 = vmatpush1.bf16.msra.mxu0 0
        %5619 = vmatprep.subr.bf16.mxu0 0
        %5620 = vmatpush1.bf16.msra.mxu0 0
        %5621 = vmatprep.mubr.bf16.mxu0 0
        %5622 = vmatmul.mubr.bf16.gmra.mrb[0].mxu0 %v5512
        %v5623 = vpop.f32.mrb[0].mxu0
        %v5624 = vadd.f32 0.0, %v5623
        %v5625 = vpop.f32.mrb[0].mxu0
        %v5626 = vpop.f32.mrb[0].mxu0
        %v5627 = vadd.f32 0.0, %v5626
        %v5628 = vpop.f32.mrb[0].mxu0
        %5629 = vmatprep.mubr.bf16.mxu0 0
        %5630 = vmatmul.mubr.bf16.gmra.mrb[0].mxu0 %v5515
        %v5631 = vpop.f32.mrb[0].mxu0
        %v5632 = vadd.f32 0.0, %v5631
        %v5633 = vpop.f32.mrb[0].mxu0
        %v5634 = vpop.f32.mrb[0].mxu0
        %v5635 = vadd.f32 0.0, %v5634
        %v5636 = vpop.f32.mrb[0].mxu0
        %5637 = vmatprep.mubr.bf16.mxu0 0
        %5638 = vmatmul.mubr.bf16.gmra.mrb[0].mxu0 %v5518
        %v5639 = vpop.f32.mrb[0].mxu0
        %v5640 = vadd.f32 0.0, %v5639
        %v5641 = vpop.f32.mrb[0].mxu0
        %v5642 = vpop.f32.mrb[0].mxu0
        %v5643 = vadd.f32 0.0, %v5642
        %v5644 = vpop.f32.mrb[0].mxu0
        %5645 = vmatprep.mubr.bf16.mxu0 0
        %5646 = vmatmul.mubr.bf16.gmra.mrb[0].mxu0 %v5521
        %v5647 = vpop.f32.mrb[0].mxu0
        %v5648 = vadd.f32 0.0, %v5647
        %v5649 = vpop.f32.mrb[0].mxu0
        %v5650 = vpop.f32.mrb[0].mxu0
        %v5651 = vadd.f32 0.0, %v5650
        %v5652 = vpop.f32.mrb[0].mxu0
        %5653 = vmatprep.mubr.bf16.mxu0 0
        %5654 = vmatmul.mubr.bf16.gmra.mrb[0].mxu0 %v5524
        %v5655 = vpop.f32.mrb[0].mxu0
        %v5656 = vadd.f32 0.0, %v5655
        %v5657 = vpop.f32.mrb[0].mxu0
        %v5658 = vpop.f32.mrb[0].mxu0
        %v5659 = vadd.f32 0.0, %v5658
        %v5660 = vpop.f32.mrb[0].mxu0
        %5661 = vmatprep.mubr.bf16.mxu0 0
        %5662 = vmatmul.mubr.bf16.gmra.mrb[0].mxu0 %v5527
        %v5663 = vpop.f32.mrb[0].mxu0
        %v5664 = vadd.f32 0.0, %v5663
        %v5665 = vpop.f32.mrb[0].mxu0
        %v5666 = vpop.f32.mrb[0].mxu0
        %v5667 = vadd.f32 0.0, %v5666
        %v5668 = vpop.f32.mrb[0].mxu0
        %5669 = vmatprep.mubr.bf16.mxu0 0
        %5670 = vmatmul.mubr.bf16.gmra.mrb[0].mxu0 %v5530
        %v5671 = vpop.f32.mrb[0].mxu0
        %v5672 = vadd.f32 0.0, %v5671
        %v5673 = vpop.f32.mrb[0].mxu0
        %v5674 = vpop.f32.mrb[0].mxu0
        %v5675 = vadd.f32 0.0, %v5674
        %v5676 = vpop.f32.mrb[0].mxu0
        %5677 = vmatprep.mubr.bf16.mxu0 0
        %5678 = vmatmul.mubr.bf16.gmra.mrb[0].mxu0 %v5532
        %v5679 = vpop.f32.mrb[0].mxu0
        %v5680 = vadd.f32 0.0, %v5679
        %v5681 = vpop.f32.mrb[0].mxu0
        %v5682 = vpop.f32.mrb[0].mxu0
        %v5683 = vadd.f32 0.0, %v5682
        %v5684 = vpop.f32.mrb[0].mxu0
        %5685 = vdwg.mxu0
        %v5686 = vadd.f32 %v5476, %v5624
        %v5687 = vadd.f32 %v5477, %v5627
        %v5688 = vadd.f32 %v5478, %v5632
        %v5689 = vadd.f32 %v5479, %v5635
        %v5690 = vadd.f32 %v5480, %v5640
        %v5691 = vadd.f32 %v5481, %v5643
        %v5692 = vadd.f32 %v5482, %v5648
        %v5693 = vadd.f32 %v5483, %v5651
        %v5694 = vadd.f32 %v5484, %v5656
        %v5695 = vadd.f32 %v5485, %v5659
        %v5696 = vadd.f32 %v5486, %v5664
        %v5697 = vadd.f32 %v5487, %v5667
        %v5698 = vadd.f32 %v5488, %v5672
        %v5699 = vadd.f32 %v5489, %v5675
        %v5700 = vadd.f32 %v5490, %v5680
        %v5701 = vadd.f32 %v5491, %v5683
        %s5702 = scalar_lea.vmem [#allocation5], 512
        %v5703 = vld [vmem:[%s5702] sm:$0xf]
        %v5704 = vld [vmem:[%s5702 + $0x4] sm:$0xf]
        %v5705 = vld [vmem:[%s5702 + $0x8] sm:$0xf]
        %v5706 = vld [vmem:[%s5702 + $0xc] sm:$0xf]
        %v5707 = vld [vmem:[%s5702 + $0x10] sm:$0xf]
        %v5708 = vld [vmem:[%s5702 + $0x14] sm:$0xf]
        %v5709 = vld [vmem:[%s5702 + $0x18] sm:$0xf]
        %v5710 = vld [vmem:[%s5702 + $0x1c] sm:$0xf]
        %v5711 = vld [vmem:[%s5702 + $0x20] sm:$0xf]
        %v5712 = vld [vmem:[%s5702 + $0x24] sm:$0xf]
        %v5713 = vld [vmem:[%s5702 + $0x28] sm:$0xf]
        %v5714 = vld [vmem:[%s5702 + $0x2c] sm:$0xf]
        %v5715 = vld [vmem:[%s5702 + $0x30] sm:$0xf]
        %v5716 = vld [vmem:[%s5702 + $0x34] sm:$0xf]
        %v5717 = vld [vmem:[%s5702 + $0x38] sm:$0xf]
        %v5718 = vld [vmem:[%s5702 + $0x3c] sm:$0xf]
        %v5719 = vsel %vm722, %v5321, %v1943
        %v5737 = vunpack.c.l.b16 %v5703
        %v5738 = vunpack.c.l.b16 %v5704
        %v5739 = vunpack.c.l.b16 %v5705
        %v5740 = vunpack.c.l.b16 %v5706
        %v5741 = vunpack.c.l.b16 %v5707
        %v5742 = vunpack.c.l.b16 %v5708
        %v5743 = vunpack.c.l.b16 %v5709
        %v5744 = vunpack.c.l.b16 %v5710
        %v5745 = vunpack.c.l.b16 %v5711
        %v5746 = vunpack.c.l.b16 %v5712
        %v5747 = vunpack.c.l.b16 %v5713
        %v5748 = vunpack.c.l.b16 %v5714
        %v5749 = vunpack.c.l.b16 %v5715
        %v5750 = vunpack.c.l.b16 %v5716
        %v5751 = vunpack.c.l.b16 %v5717
        %v5752 = vunpack.c.l.b16 %v5718
        %v5753 = vpack.c.b16 %v5738, %v5737
        %v5754 = vpack.c.b16 %v5740, %v5739
        %v5755 = vpack.c.b16 %v5742, %v5741
        %v5756 = vpack.c.b16 %v5744, %v5743
        %v5757 = vpack.c.b16 %v5746, %v5745
        %v5758 = vpack.c.b16 %v5748, %v5747
        %v5759 = vpack.c.b16 %v5750, %v5749
        %v5760 = vpack.c.b16 %v5752, %v5751
        %5769 = vmatprep.subr.bf16.mxu0 0
        %5770 = vmatpush1.bf16.msra.mxu0 %v5753
        %5771 = vmatprep.subr.bf16.mxu0 0
        %5772 = vmatpush1.bf16.msra.mxu0 %v5754
        %5773 = vmatprep.subr.bf16.mxu0 0
        %5774 = vmatpush1.bf16.msra.mxu0 %v5755
        %5775 = vmatprep.subr.bf16.mxu0 0
        %5776 = vmatpush1.bf16.msra.mxu0 %v5756
        %5777 = vmatprep.subr.bf16.mxu0 0
        %5778 = vmatpush1.bf16.msra.mxu0 %v5757
        %5779 = vmatprep.subr.bf16.mxu0 0
        %5780 = vmatpush1.bf16.msra.mxu0 %v5758
        %5781 = vmatprep.subr.bf16.mxu0 0
        %5782 = vmatpush1.bf16.msra.mxu0 %v5759
        %5783 = vmatprep.subr.bf16.mxu0 0
        %5784 = vmatpush1.bf16.msra.mxu0 %v5760
        %5785 = vmatprep.subr.bf16.mxu0 0
        %5786 = vmatpush1.bf16.msra.mxu0 0
        %5787 = vmatprep.subr.bf16.mxu0 0
        %5788 = vmatpush1.bf16.msra.mxu0 0
        %5789 = vmatprep.subr.bf16.mxu0 0
        %5790 = vmatpush1.bf16.msra.mxu0 0
        %5791 = vmatprep.subr.bf16.mxu0 0
        %5792 = vmatpush1.bf16.msra.mxu0 0
        %5793 = vmatprep.subr.bf16.mxu0 0
        %5794 = vmatpush1.bf16.msra.mxu0 0
        %5795 = vmatprep.subr.bf16.mxu0 0
        %5796 = vmatpush1.bf16.msra.mxu0 0
        %5797 = vmatprep.subr.bf16.mxu0 0
        %5798 = vmatpush1.bf16.msra.mxu0 0
        %5799 = vmatprep.subr.bf16.mxu0 0
        %5800 = vmatpush1.bf16.msra.mxu0 0
        %5801 = vmatprep.mubr.bf16.mxu0 0
        %5802 = vmatmul.mubr.bf16.gmra.mrb[0].mxu0 %v5268
        %v5803 = vpop.f32.mrb[0].mxu0
        %v5804 = vadd.f32 0.0, %v5803
        %v5805 = vpop.f32.mrb[0].mxu0
        %v5806 = vpop.f32.mrb[0].mxu0
        %v5807 = vadd.f32 0.0, %v5806
        %v5808 = vpop.f32.mrb[0].mxu0
        %5809 = vmatprep.mubr.bf16.mxu0 0
        %5810 = vmatmul.mubr.bf16.gmra.mrb[0].mxu0 %v5277
        %v5811 = vpop.f32.mrb[0].mxu0
        %v5812 = vadd.f32 0.0, %v5811
        %v5813 = vpop.f32.mrb[0].mxu0
        %v5814 = vpop.f32.mrb[0].mxu0
        %v5815 = vadd.f32 0.0, %v5814
        %v5816 = vpop.f32.mrb[0].mxu0
        %5817 = vmatprep.mubr.bf16.mxu0 0
        %5818 = vmatmul.mubr.bf16.gmra.mrb[0].mxu0 %v5286
        %v5819 = vpop.f32.mrb[0].mxu0
        %v5820 = vadd.f32 0.0, %v5819
        %v5821 = vpop.f32.mrb[0].mxu0
        %v5822 = vpop.f32.mrb[0].mxu0
        %v5823 = vadd.f32 0.0, %v5822
        %v5824 = vpop.f32.mrb[0].mxu0
        %5825 = vmatprep.mubr.bf16.mxu0 0
        %5826 = vmatmul.mubr.bf16.gmra.mrb[0].mxu0 %v5295
        %v5827 = vpop.f32.mrb[0].mxu0
        %v5828 = vadd.f32 0.0, %v5827
        %v5829 = vpop.f32.mrb[0].mxu0
        %v5830 = vpop.f32.mrb[0].mxu0
        %v5831 = vadd.f32 0.0, %v5830
        %v5832 = vpop.f32.mrb[0].mxu0
        %5833 = vmatprep.mubr.bf16.mxu0 0
        %5834 = vmatmul.mubr.bf16.gmra.mrb[0].mxu0 %v5304
        %v5835 = vpop.f32.mrb[0].mxu0
        %v5836 = vadd.f32 0.0, %v5835
        %v5837 = vpop.f32.mrb[0].mxu0
        %v5838 = vpop.f32.mrb[0].mxu0
        %v5839 = vadd.f32 0.0, %v5838
        %v5840 = vpop.f32.mrb[0].mxu0
        %5841 = vmatprep.mubr.bf16.mxu0 0
        %5842 = vmatmul.mubr.bf16.gmra.mrb[0].mxu0 %v5313
        %v5843 = vpop.f32.mrb[0].mxu0
        %v5844 = vadd.f32 0.0, %v5843
        %v5845 = vpop.f32.mrb[0].mxu0
        %v5846 = vpop.f32.mrb[0].mxu0
        %v5847 = vadd.f32 0.0, %v5846
        %v5848 = vpop.f32.mrb[0].mxu0
        %5849 = vmatprep.mubr.bf16.mxu0 0
        %5850 = vmatmul.mubr.bf16.gmra.mrb[0].mxu0 %v5322
        %v5851 = vpop.f32.mrb[0].mxu0
        %v5852 = vadd.f32 0.0, %v5851
        %v5853 = vpop.f32.mrb[0].mxu0
        %v5854 = vpop.f32.mrb[0].mxu0
        %v5855 = vadd.f32 0.0, %v5854
        %v5856 = vpop.f32.mrb[0].mxu0
        %5857 = vmatprep.mubr.bf16.mxu0 0
        %5858 = vmatmul.mubr.bf16.gmra.mrb[0].mxu0 %v5719
        %v5859 = vpop.f32.mrb[0].mxu0
        %v5860 = vadd.f32 0.0, %v5859
        %v5861 = vpop.f32.mrb[0].mxu0
        %v5862 = vpop.f32.mrb[0].mxu0
        %v5863 = vadd.f32 0.0, %v5862
        %v5864 = vpop.f32.mrb[0].mxu0
        %5865 = vdwg.mxu0
        %v5866 = vadd.f32 %v5686, %v5804
        %v5867 = vadd.f32 %v5687, %v5807
        %v5868 = vadd.f32 %v5688, %v5812
        %v5869 = vadd.f32 %v5689, %v5815
        %v5870 = vadd.f32 %v5690, %v5820
        %v5871 = vadd.f32 %v5691, %v5823
        %v5872 = vadd.f32 %v5692, %v5828
        %v5873 = vadd.f32 %v5693, %v5831
        %v5874 = vadd.f32 %v5694, %v5836
        %v5875 = vadd.f32 %v5695, %v5839
        %v5876 = vadd.f32 %v5696, %v5844
        %v5877 = vadd.f32 %v5697, %v5847
        %v5878 = vadd.f32 %v5698, %v5852
        %v5879 = vadd.f32 %v5699, %v5855
        %v5880 = vadd.f32 %v5700, %v5860
        %v5881 = vadd.f32 %v5701, %v5863
        %v5882 = vld [vmem:[%s6] sm:$0x1]
        %v5884 = vlaneseq
        %v5885 = vshrl.u32 %v5884, 7
        %v5886 = vsub.s32 0, %v5885
        %v5887 = vrot.slane %v5882, %v5886
        %v5889 = vadd.f32 %v5866, %v5887
        %v5890 = vadd.f32 %v5867, %v5887
        %v5891 = vadd.f32 %v5868, %v5887
        %v5892 = vadd.f32 %v5869, %v5887
        %v5893 = vadd.f32 %v5870, %v5887
        %v5894 = vadd.f32 %v5871, %v5887
        %v5895 = vadd.f32 %v5872, %v5887
        %v5896 = vadd.f32 %v5873, %v5887
        %v5897 = vadd.f32 %v5874, %v5887
        %v5898 = vadd.f32 %v5875, %v5887
        %v5899 = vadd.f32 %v5876, %v5887
        %v5900 = vadd.f32 %v5877, %v5887
        %v5901 = vadd.f32 %v5878, %v5887
        %v5902 = vadd.f32 %v5879, %v5887
        %v5903 = vadd.f32 %v5880, %v5887
        %v5904 = vadd.f32 %v5881, %v5887
        %v5905 = vmax.f32 %v5889, 0.0
        %v5906 = vmax.f32 %v5890, 0.0
        %v5907 = vmax.f32 %v5891, 0.0
        %v5908 = vmax.f32 %v5892, 0.0
        %v5909 = vmax.f32 %v5893, 0.0
        %v5910 = vmax.f32 %v5894, 0.0
        %v5911 = vmax.f32 %v5895, 0.0
        %v5912 = vmax.f32 %v5896, 0.0
        %v5913 = vmax.f32 %v5897, 0.0
        %v5914 = vmax.f32 %v5898, 0.0
        %v5915 = vmax.f32 %v5899, 0.0
        %v5916 = vmax.f32 %v5900, 0.0
        %v5917 = vmax.f32 %v5901, 0.0
        %v5918 = vmax.f32 %v5902, 0.0
        %v5919 = vmax.f32 %v5903, 0.0
        %v5920 = vmax.f32 %v5904, 0.0
        %v5921 = vpack.c.bf16 %v5906, %v5905
        %v5922 = vpack.c.bf16 %v5908, %v5907
        %v5923 = vpack.c.bf16 %v5910, %v5909
        %v5924 = vpack.c.bf16 %v5912, %v5911
        %v5925 = vpack.c.bf16 %v5914, %v5913
        %v5926 = vpack.c.bf16 %v5916, %v5915
        %v5927 = vpack.c.bf16 %v5918, %v5917
        %v5928 = vpack.c.bf16 %v5920, %v5919
        %v5937 = vunpack.c.l.b16 %v5921
        %v5938 = vunpack.c.h.b16 %v5921
        %v5939 = vunpack.c.l.b16 %v5922
        %v5940 = vunpack.c.h.b16 %v5922
        %v5941 = vunpack.c.l.b16 %v5923
        %v5942 = vunpack.c.h.b16 %v5923
        %v5943 = vunpack.c.l.b16 %v5924
        %v5944 = vunpack.c.h.b16 %v5924
        %v5945 = vunpack.c.l.b16 %v5925
        %v5946 = vunpack.c.h.b16 %v5925
        %v5947 = vunpack.c.l.b16 %v5926
        %v5948 = vunpack.c.h.b16 %v5926
        %v5949 = vunpack.c.l.b16 %v5927
        %v5950 = vunpack.c.h.b16 %v5927
        %v5951 = vunpack.c.l.b16 %v5928
        %v5952 = vunpack.c.h.b16 %v5928
        %v5953 = vpack.c.b16 %v5937, %v5937
        %v5954 = vpack.c.b16 %v5938, %v5938
        %v5955 = vpack.c.b16 %v5939, %v5939
        %v5956 = vpack.c.b16 %v5940, %v5940
        %v5957 = vpack.c.b16 %v5941, %v5941
        %v5958 = vpack.c.b16 %v5942, %v5942
        %v5959 = vpack.c.b16 %v5943, %v5943
        %v5960 = vpack.c.b16 %v5944, %v5944
        %v5961 = vpack.c.b16 %v5945, %v5945
        %v5962 = vpack.c.b16 %v5946, %v5946
        %v5963 = vpack.c.b16 %v5947, %v5947
        %v5964 = vpack.c.b16 %v5948, %v5948
        %v5965 = vpack.c.b16 %v5949, %v5949
        %v5966 = vpack.c.b16 %v5950, %v5950
        %v5967 = vpack.c.b16 %v5951, %v5951
        %v5968 = vpack.c.b16 %v5952, %v5952
        %5985 = vst [vmem:[%s316] sm:$0xf] %v5953
        %5986 = vst [vmem:[%s316 + $0x4] sm:$0xf] %v5954
        %5987 = vst [vmem:[%s316 + $0x8] sm:$0xf] %v5955
        %5988 = vst [vmem:[%s316 + $0xc] sm:$0xf] %v5956
        %5989 = vst [vmem:[%s316 + $0x10] sm:$0xf] %v5957
        %5990 = vst [vmem:[%s316 + $0x14] sm:$0xf] %v5958
        %5991 = vst [vmem:[%s316 + $0x18] sm:$0xf] %v5959
        %5992 = vst [vmem:[%s316 + $0x1c] sm:$0xf] %v5960
        %5993 = vst [vmem:[%s316 + $0x20] sm:$0xf] %v5961
        %5994 = vst [vmem:[%s316 + $0x24] sm:$0xf] %v5962
        %5995 = vst [vmem:[%s316 + $0x28] sm:$0xf] %v5963
        %5996 = vst [vmem:[%s316 + $0x2c] sm:$0xf] %v5964
        %5997 = vst [vmem:[%s316 + $0x30] sm:$0xf] %v5965
        %5998 = vst [vmem:[%s316 + $0x34] sm:$0xf] %v5966
        %5999 = vst [vmem:[%s316 + $0x38] sm:$0xf] %v5967
        %6000 = vst [vmem:[%s316 + $0x3c] sm:$0xf] %v5968
        %s6001 = sand.u32 %s188, 1
        %s6002 = scalar_lea.sflag [#allocation4], %s6001
        %s6003 = sand.u32 %s188, 1
        %s6004 = smul.addr %s6003, 64
        %s6005 = scalar_lea.vmem [#allocation7], %s6004
        // Predicated region
        $region57: #{tpu_custom_call.1} parent=47 // pred_check
          %p6006 = pneg %p198
        $region58: #{tpu_custom_call.1} parent=47 // pred_check_branch
          %6008 = sbr.rel (%p6006) target = $region60
        $region59: #{tpu_custom_call.1} parent=47 // pred_region
          %s6010 = ssub.s32 1024, 1024
          %6011 = vsyncadd %s6002, %s6010
          %s6012 = smul.addr %s23, 16
          %s6013 = smul.addr %s6012, 64
          %s6014 = scalar_lea.hbm %s7, %s6013
          %s6015 = sshll.u32 %s6005, 4
          %s6016 = int_to_ptr.vmem [resolvable:$true] %s6015
          %6021 = dma.vmem_to_hbm [thread:$0]  %s6016, 1024, %s6014, %s6002, 64, 64, 4
        $region60: #{tpu_custom_call.1} parent=47 // pred_fallthru
          _
      $region48: #{tpu_custom_call.1} parent=5 // pred_fallthru
        _
      %p6022 = scmp.le.s32.totalorder 2, %s18
      // Predicated region
      $region61: #{tpu_custom_call.1} parent=5 // pred_check
        %p6023 = pneg %p6022
      $region62: #{tpu_custom_call.1} parent=5 // pred_check_branch
        %6025 = sbr.rel (%p6023) target = $region64
      $region63: #{tpu_custom_call.1} parent=5 // pred_region
        %s6026 = ssub.s32 %s18, 2
        // Predicated region
        $region65: #{tpu_custom_call.1} parent=63 // pred_check
          %p6027 = pneg %p204
        $region66: #{tpu_custom_call.1} parent=63 // pred_check_branch
          %6029 = sbr.rel (%p6027) target = $region68
        $region67: #{tpu_custom_call.1} parent=63 // pred_region
          %s6030 = sand.u32 %s189, 1
          %s6031 = scalar_lea.sflag [#allocation4], %s6030
          %s6032 = sand.u32 %s189, 1
          %s6033 = smul.addr %s6032, 64
          %s6034 = scalar_lea.vmem [#allocation7], %s6033
          %6035 = dma.done %s6031, 1024
        $region68: #{tpu_custom_call.1} parent=63 // pred_fallthru
          _
      $region64: #{tpu_custom_call.1} parent=5 // pred_fallthru
        _
    $region6: #{tpu_custom_call.1} parent=1 // loop_footer
      %s22 = sadd.s32 1, %s18
    $region7: #{tpu_custom_call.1} parent=1 // loop_footer_branch
      %17 = sbr.rel target = $region3
    $region8: #{tpu_custom_call.1} parent=1 // loop_exit
      _
    %6036 = vsyncpa [#allocation3], 1
    %s6037 = scalar_lea.sflag [#allocation3], 1
    %6038 = vsyncpa %s6037, 1
    %6039 = vsyncpa [#allocation6], 1
    %6040 = vsyncpa [#allocation4], 1
    %s6041 = scalar_lea.sflag [#allocation4], 1
    %6042 = vsyncpa %s6041, 1

</llo_original>
